<compile_context>
chip_gen: v5e
topology: v5e:2x2
jax: 0.10.0
libtpu: 0.0.40
codegen_flags: <defaults>
</compile_context>

<pallas_src>
import jax
import jax.numpy as jnp
from jax.experimental import pallas as pl
from jax.experimental.pallas import tpu as pltpu

NUM_CLASSES = 200 * 200 + 1          # 40001, as in the PyTorch module
NEG_BIG = -1e30                      # bias value for padded class columns
TILE_N = 10240                       # class-axis tile (multiple of 128), 40960/4
MAX_TILE_B = 64                      # batch tile cap (multiple of 8)
VMEM_LIMIT_BYTES = 40 * 1024 * 1024  # > v5e 16 MiB default, < v7x 64 MiB physical


def _round_up(x, m):
    return ((x + m - 1) // m) * m


def _head_kernel(x_ref, w1_ref, b1_ref, w2_ref, b2_ref, w3_ref, b3_ref,
                 out_ref, h2_sc, m_sc, l_sc, logits_sc):
    """One (batch-tile, class-tile) grid step.

    n == 0    : h2 = (x@W1+b1)@W2+b2 once per batch tile (bf16 MXU, f32 acc);
                reset online-LSE state (m, l).
    every n   : logits_tile = h2_bf16 @ W3_tile_bf16 + b3_tile (f32 acc),
                stash the raw f32 tile in VMEM scratch, update running max /
                sum-exp.
    n == last : normalize ALL stashed logits with lse = m + log(l) and write
                the bf16 log-probs into the resident output block (single HBM
                writeback per batch tile).
    """
    n = pl.program_id(1)

    @pl.when(n == 0)
    def _init():
        x = x_ref[...].astype(jnp.bfloat16)                               # (TB, H)
        h1 = jnp.dot(x, w1_ref[...],
                     preferred_element_type=jnp.float32) + b1_ref[...]    # (TB, 128)
        h2 = jnp.dot(h1.astype(jnp.bfloat16), w2_ref[...],
                     preferred_element_type=jnp.float32) + b2_ref[...]    # (TB, 64)
        h2_sc[...] = h2.astype(jnp.bfloat16)
        m_sc[...] = jnp.full(m_sc.shape, -jnp.inf, jnp.float32)
        l_sc[...] = jnp.zeros(l_sc.shape, jnp.float32)

    logits = jnp.dot(h2_sc[...], w3_ref[...],
                     preferred_element_type=jnp.float32) + b3_ref[...]    # (TB, TILE_N)
    logits_sc[n, :, :] = logits        # raw f32 tile, kept on-chip (no HBM trip)

    # Online log-sum-exp across class tiles (f32 throughout).
    m_prev = m_sc[...]
    m_new = jnp.maximum(m_prev, jnp.max(logits, axis=-1, keepdims=True))
    l_sc[...] = (l_sc[...] * jnp.exp(m_prev - m_new)
                 + jnp.sum(jnp.exp(logits - m_new), axis=-1, keepdims=True))
    m_sc[...] = m_new

    @pl.when(n == pl.num_programs(1) - 1)
    def _finalize():
        lse = m_sc[...] + jnp.log(l_sc[...])                              # (TB, 1)
        for k in range(logits_sc.shape[0]):                               # static
            out_ref[:, k * TILE_N:(k + 1) * TILE_N] = (
                logits_sc[k, :, :] - lse).astype(out_ref.dtype)


def prepare_params(params):
    """One-time conversion of raw f32 params into kernel-ready form.

    Done once at init (NOT per forward call): w1/w2/w3 are cast to bf16 (halves
    the dominant HBM traffic for w3 and keeps the MXU on its native bf16 path);
    w3 is padded along the class axis to a multiple of TILE_N; padded bias
    columns get NEG_BIG (f32) so they vanish from the softmax.
    """
    w1, b1, w2, b2, w3, b3 = params
    n = w3.shape[1]
    n_pad = _round_up(n, TILE_N)
    w3p = jnp.zeros((w3.shape[0], n_pad), jnp.bfloat16).at[:, :n].set(
        w3.astype(jnp.bfloat16))
    b3p = jnp.full((1, n_pad), NEG_BIG, jnp.float32).at[0, :n].set(
        b3.astype(jnp.float32))
    return (w1.astype(jnp.bfloat16), b1.reshape(1, -1).astype(jnp.float32),
            w2.astype(jnp.bfloat16), b2.reshape(1, -1).astype(jnp.float32),
            w3p, b3p)


@jax.jit
def learner_forward(next_value, kparams):
    """Pallas equivalent of Learner.forward given pre_model output `next_value`.

    Returns (log_softmax logits (B, 40001) in bf16, next_value), like the
    PyTorch module returns (next_out1, next_value).  The bf16 output is an
    intentional precision/bandwidth tradeoff (accumulation and LSE are f32).
    """
    w1, b1, w2, b2, w3p, b3p = kparams
    B, H = next_value.shape
    n_pad = w3p.shape[1]

    # Batch tiling: sublane multiple of 8, capped at MAX_TILE_B.  For B >= 16
    # ensure at least 2 batch tiles so both v7x TensorCores get work.
    b8 = _round_up(B, 8)
    tile_b = min(MAX_TILE_B, b8)
    if b8 >= 16 and b8 // tile_b < 2:
        tile_b = _round_up((b8 + 1) // 2, 8)
    b_pad = _round_up(B, tile_b)

    x = next_value.astype(jnp.float32)
    if b_pad != B:
        x = jnp.zeros((b_pad, H), jnp.float32).at[:B].set(x)

    grid = (b_pad // tile_b, n_pad // TILE_N)
    n_tiles = n_pad // TILE_N

    out_pad = pl.pallas_call(
        _head_kernel,
        out_shape=jax.ShapeDtypeStruct((b_pad, n_pad), jnp.bfloat16),
        grid=grid,
        in_specs=[
            pl.BlockSpec((tile_b, H), lambda b, n: (b, 0)),      # x
            pl.BlockSpec((H, 128), lambda b, n: (0, 0)),         # w1 bf16 (resident)
            pl.BlockSpec((1, 128), lambda b, n: (0, 0)),         # b1
            pl.BlockSpec((128, 64), lambda b, n: (0, 0)),        # w2 bf16 (resident)
            pl.BlockSpec((1, 64), lambda b, n: (0, 0)),          # b2
            pl.BlockSpec((64, TILE_N), lambda b, n: (0, n)),     # w3 tile (bf16)
            pl.BlockSpec((1, TILE_N), lambda b, n: (0, n)),      # b3 tile
        ],
        # Resident per batch tile: written once, in-kernel normalized, bf16.
        out_specs=pl.BlockSpec((tile_b, n_pad), lambda b, n: (b, 0)),
        scratch_shapes=[
            pltpu.VMEM((tile_b, 64), jnp.bfloat16),              # h2 (bf16 MXU input)
            pltpu.VMEM((tile_b, 1), jnp.float32),                # running max
            pltpu.VMEM((tile_b, 1), jnp.float32),                # running sum-exp
            pltpu.VMEM((n_tiles, tile_b, TILE_N), jnp.float32),  # raw f32 logits
        ],
        compiler_params=pltpu.CompilerParams(
            dimension_semantics=("parallel", "arbitrary"),
            vmem_limit_bytes=VMEM_LIMIT_BYTES),
    )(x, w1, b1, w2, b2, w3p, b3p)

    # Only padding removal remains in XLA (no lse subtraction pass anymore).
    next_out1 = out_pad[:B, :NUM_CLASSES]
    return next_out1, next_value


def kaiming_normal(key, out_f, in_f):
    # torch.nn.init.kaiming_normal_ default: fan_in mode, gain = sqrt(2)
    std = jnp.sqrt(2.0 / in_f)
    w = jax.random.normal(key, (out_f, in_f), jnp.float32) * std
    return w.T                            # store as (in_features, out_features)


def linear_bias(key, out_f, in_f):
    # torch.nn.Linear default bias init: U(-1/sqrt(fan_in), 1/sqrt(fan_in))
    bound = 1.0 / jnp.sqrt(jnp.float32(in_f))
    return jax.random.uniform(key, (out_f,), jnp.float32, -bound, bound)


def init_params(key, hidden_neurons):
    k = jax.random.split(key, 6)
    w1 = kaiming_normal(k[0], 128, hidden_neurons)
    b1 = linear_bias(k[1], 128, hidden_neurons)
    w2 = kaiming_normal(k[2], 64, 128)
    b2 = linear_bias(k[3], 64, 128)
    w3 = kaiming_normal(k[4], NUM_CLASSES, 64)
    b3 = linear_bias(k[5], NUM_CLASSES, 64)
    return (w1, b1, w2, b2, w3, b3)


if __name__ == "__main__":
    key = jax.random.PRNGKey(0)
    B, hidden_neurons = 2, 32             # small synthetic config

    k_param, k_x = jax.random.split(key)
    raw_params = init_params(k_param, hidden_neurons)
    kparams = prepare_params(raw_params)  # one-time padding / bf16 cast
    # Stand-in for pre_model output (next_value).
    next_value = jax.random.normal(k_x, (B, hidden_neurons), jnp.float32)

    next_out1, nv = learner_forward(next_value, kparams)
    next_out1 = jax.block_until_ready(next_out1)
    nv = jax.block_until_ready(nv)

    # Shape / dtype checks.
    assert next_out1.shape == (B, NUM_CLASSES)
    assert next_out1.dtype == jnp.bfloat16
    assert nv.shape == (B, hidden_neurons)

    out_f32 = next_out1.astype(jnp.float32)

    # log_softmax rows must exponentiate to ~1 (loose: final store is bf16).
    row_sums = jnp.sum(jnp.exp(out_f32), axis=-1)
    assert bool(jnp.all(jnp.abs(row_sums - 1.0) < 5e-2)), row_sums

    # Value check against a pure-JAX reference with matching mixed precision
    # (bf16 matmul inputs, f32 accumulation; reference log_softmax in f32).
    w1, b1, w2, b2, w3, b3 = raw_params
    bf = jnp.bfloat16
    h1_ref = jnp.dot(next_value.astype(bf), w1.astype(bf),
                     preferred_element_type=jnp.float32) + b1
    h2_ref = jnp.dot(h1_ref.astype(bf), w2.astype(bf),
                     preferred_element_type=jnp.float32) + b2
    logits_ref = jnp.dot(h2_ref.astype(bf), w3.astype(bf),
                         preferred_element_type=jnp.float32) + b3
    ref = jax.nn.log_softmax(logits_ref, axis=-1)
    rel_err = jnp.max(jnp.abs(out_f32 - ref) / (1.0 + jnp.abs(ref)))
    assert bool(rel_err < 2e-2), rel_err

    print("KERNEL_OK")
</pallas_src>

<mosaic_0001>
module attributes {stable_mosaic.version = 11 : i64} {
  func.func @_head_kernel(%arg0: i32, %arg1: i32, %arg2: memref<8x32xf32, #tpu.memory_space<vmem>>, %arg3: memref<32x128xbf16, #tpu.memory_space<vmem>>, %arg4: memref<1x128xf32, #tpu.memory_space<vmem>>, %arg5: memref<128x64xbf16, #tpu.memory_space<vmem>>, %arg6: memref<1x64xf32, #tpu.memory_space<vmem>>, %arg7: memref<64x10240xbf16, #tpu.memory_space<vmem>>, %arg8: memref<1x10240xf32, #tpu.memory_space<vmem>>, %arg9: memref<8x40960xbf16, #tpu.memory_space<vmem>>, %arg10: memref<8x64xbf16, #tpu.memory_space<vmem>>, %arg11: memref<8x1xf32, #tpu.memory_space<vmem>>, %arg12: memref<8x1xf32, #tpu.memory_space<vmem>>, %arg13: memref<4x8x10240xf32, #tpu.memory_space<vmem>>) attributes {dimension_semantics = [#tpu.dimension_semantics<parallel>, #tpu.dimension_semantics<arbitrary>], iteration_bounds = array<i64: 1, 4>, scalar_prefetch = 0 : i64, scratch_operands = 4 : i64, tpu.core_type = #tpu.core_type<tc>, window_params = [{transform_indices = @transform_0, window_bounds = array<i64: 8, 32>}, {pipeline_mode = #tpu.pipeline_mode<synchronous>, transform_indices = @transform_1, window_bounds = array<i64: 32, 128>}, {pipeline_mode = #tpu.pipeline_mode<synchronous>, transform_indices = @transform_2, window_bounds = array<i64: 1, 128>}, {pipeline_mode = #tpu.pipeline_mode<synchronous>, transform_indices = @transform_3, window_bounds = array<i64: 128, 64>}, {pipeline_mode = #tpu.pipeline_mode<synchronous>, transform_indices = @transform_4, window_bounds = array<i64: 1, 64>}, {transform_indices = @transform_5, window_bounds = array<i64: 64, 10240>}, {transform_indices = @transform_6, window_bounds = array<i64: 1, 10240>}, {transform_indices = @transform_7, window_bounds = array<i64: 8, 40960>}]} {
    %c0_i32 = arith.constant 0 : i32
    %0 = arith.cmpi eq, %arg1, %c0_i32 : i32
    %1 = arith.extui %0 : i1 to i32
    %c0_i32_0 = arith.constant 0 : i32
    %2 = arith.cmpi ne, %1, %c0_i32_0 : i32
    scf.if %2 {
      %c0_19 = arith.constant 0 : index
      %c0_20 = arith.constant 0 : index
      %32 = vector.load %arg2[%c0_19, %c0_20] : memref<8x32xf32, #tpu.memory_space<vmem>>, vector<8x32xf32>
      %33 = arith.truncf %32 : vector<8x32xf32> to vector<8x32xbf16>
      %c0_21 = arith.constant 0 : index
      %c0_22 = arith.constant 0 : index
      %34 = vector.load %arg3[%c0_21, %c0_22] : memref<32x128xbf16, #tpu.memory_space<vmem>>, vector<32x128xbf16>
      %cst_23 = arith.constant dense<0.000000e+00> : vector<8x128xf32>
      %35 = tpu.matmul %33, %34, %cst_23 {dimension_numbers = #tpu.dot_dimension_numbers<[1], [0], [0], [1], [0, 0, 1, 1], [], []>} : vector<8x32xbf16>, vector<32x128xbf16>, vector<8x128xf32> -> vector<8x128xf32>
      %c0_24 = arith.constant 0 : index
      %c0_25 = arith.constant 0 : index
      %36 = vector.load %arg4[%c0_24, %c0_25] : memref<1x128xf32, #tpu.memory_space<vmem>>, vector<1x128xf32>
      %37 = vector.broadcast %36 : vector<1x128xf32> to vector<8x128xf32>
      %38 = arith.addf %35, %37 : vector<8x128xf32>
      %39 = arith.truncf %38 : vector<8x128xf32> to vector<8x128xbf16>
      %c0_26 = arith.constant 0 : index
      %c0_27 = arith.constant 0 : index
      %40 = vector.load %arg5[%c0_26, %c0_27] : memref<128x64xbf16, #tpu.memory_space<vmem>>, vector<128x64xbf16>
      %cst_28 = arith.constant dense<0.000000e+00> : vector<8x64xf32>
      %41 = tpu.matmul %39, %40, %cst_28 {dimension_numbers = #tpu.dot_dimension_numbers<[1], [0], [0], [1], [0, 0, 1, 1], [], []>} : vector<8x128xbf16>, vector<128x64xbf16>, vector<8x64xf32> -> vector<8x64xf32>
      %c0_29 = arith.constant 0 : index
      %c0_30 = arith.constant 0 : index
      %42 = vector.load %arg6[%c0_29, %c0_30] : memref<1x64xf32, #tpu.memory_space<vmem>>, vector<1x64xf32>
      %43 = vector.broadcast %42 : vector<1x64xf32> to vector<8x64xf32>
      %44 = arith.addf %41, %43 : vector<8x64xf32>
      %45 = arith.truncf %44 : vector<8x64xf32> to vector<8x64xbf16>
      %c0_31 = arith.constant 0 : index
      %c0_32 = arith.constant 0 : index
      %46 = vector.load %arg10[%c0_31, %c0_32] : memref<8x64xbf16, #tpu.memory_space<vmem>>, vector<8x64xbf16>
      tpu.vector_store %arg10[%c0_31, %c0_32], %45 {strides = array<i32>} : memref<8x64xbf16, #tpu.memory_space<vmem>>, vector<8x64xbf16>,
      %cst_33 = arith.constant 0xFF800000 : f32
      %47 = vector.broadcast %cst_33 : f32 to vector<8x1xf32>
      %c0_34 = arith.constant 0 : index
      %c0_35 = arith.constant 0 : index
      %48 = vector.load %arg11[%c0_34, %c0_35] : memref<8x1xf32, #tpu.memory_space<vmem>>, vector<8x1xf32>
      tpu.vector_store %arg11[%c0_34, %c0_35], %47 {strides = array<i32>} : memref<8x1xf32, #tpu.memory_space<vmem>>, vector<8x1xf32>,
      %cst_36 = arith.constant 0.000000e+00 : f32
      %49 = vector.broadcast %cst_36 : f32 to vector<8x1xf32>
      %c0_37 = arith.constant 0 : index
      %c0_38 = arith.constant 0 : index
      %50 = vector.load %arg12[%c0_37, %c0_38] : memref<8x1xf32, #tpu.memory_space<vmem>>, vector<8x1xf32>
      tpu.vector_store %arg12[%c0_37, %c0_38], %49 {strides = array<i32>} : memref<8x1xf32, #tpu.memory_space<vmem>>, vector<8x1xf32>,
    } else {
    }
    %c0 = arith.constant 0 : index
    %c0_1 = arith.constant 0 : index
    %3 = vector.load %arg10[%c0, %c0_1] : memref<8x64xbf16, #tpu.memory_space<vmem>>, vector<8x64xbf16>
    %c0_2 = arith.constant 0 : index
    %c0_3 = arith.constant 0 : index
    %4 = vector.load %arg7[%c0_2, %c0_3] : memref<64x10240xbf16, #tpu.memory_space<vmem>>, vector<64x10240xbf16>
    %cst = arith.constant dense<0.000000e+00> : vector<8x10240xf32>
    %5 = tpu.matmul %3, %4, %cst {dimension_numbers = #tpu.dot_dimension_numbers<[1], [0], [0], [1], [0, 0, 1, 1], [], []>} : vector<8x64xbf16>, vector<64x10240xbf16>, vector<8x10240xf32> -> vector<8x10240xf32>
    %c0_4 = arith.constant 0 : index
    %c0_5 = arith.constant 0 : index
    %6 = vector.load %arg8[%c0_4, %c0_5] : memref<1x10240xf32, #tpu.memory_space<vmem>>, vector<1x10240xf32>
    %7 = vector.broadcast %6 : vector<1x10240xf32> to vector<8x10240xf32>
    %8 = arith.addf %5, %7 : vector<8x10240xf32>
    %9 = arith.index_cast %arg1 : i32 to index
    %c0_6 = arith.constant 0 : index
    %c0_7 = arith.constant 0 : index
    %10 = vector.load %arg13[%9, %c0_6, %c0_7] : memref<4x8x10240xf32, #tpu.memory_space<vmem>>, vector<1x8x10240xf32>
    %11 = vector.shape_cast %10 : vector<1x8x10240xf32> to vector<8x10240xf32>
    %12 = vector.shape_cast %8 : vector<8x10240xf32> to vector<1x8x10240xf32>
    tpu.vector_store %arg13[%9, %c0_6, %c0_7], %12 {strides = array<i32>} : memref<4x8x10240xf32, #tpu.memory_space<vmem>>, vector<1x8x10240xf32>,
    %c0_8 = arith.constant 0 : index
    %c0_9 = arith.constant 0 : index
    %13 = vector.load %arg11[%c0_8, %c0_9] : memref<8x1xf32, #tpu.memory_space<vmem>>, vector<8x1xf32>
    %cst_10 = arith.constant dense<0xFF800000> : vector<8xf32>
    %14 = vector.multi_reduction <maximumf>, %8, %cst_10 [1] : vector<8x10240xf32> to vector<8xf32>
    %15 = vector.shape_cast %14 : vector<8xf32> to vector<8x1xf32>
    %16 = arith.maximumf %13, %15 : vector<8x1xf32>
    %c0_11 = arith.constant 0 : index
    %c0_12 = arith.constant 0 : index
    %17 = vector.load %arg12[%c0_11, %c0_12] : memref<8x1xf32, #tpu.memory_space<vmem>>, vector<8x1xf32>
    %18 = arith.subf %13, %16 : vector<8x1xf32>
    %19 = math.exp %18 : vector<8x1xf32>
    %20 = arith.mulf %17, %19 : vector<8x1xf32>
    %21 = vector.broadcast %16 : vector<8x1xf32> to vector<8x10240xf32>
    %22 = arith.subf %8, %21 : vector<8x10240xf32>
    %23 = math.exp %22 : vector<8x10240xf32>
    %cst_13 = arith.constant dense<0.000000e+00> : vector<8xf32>
    %24 = vector.multi_reduction <add>, %23, %cst_13 [1] : vector<8x10240xf32> to vector<8xf32>
    %25 = vector.shape_cast %24 : vector<8xf32> to vector<8x1xf32>
    %26 = arith.addf %20, %25 : vector<8x1xf32>
    %c0_14 = arith.constant 0 : index
    %c0_15 = arith.constant 0 : index
    %27 = vector.load %arg12[%c0_14, %c0_15] : memref<8x1xf32, #tpu.memory_space<vmem>>, vector<8x1xf32>
    tpu.vector_store %arg12[%c0_14, %c0_15], %26 {strides = array<i32>} : memref<8x1xf32, #tpu.memory_space<vmem>>, vector<8x1xf32>,
    %c0_16 = arith.constant 0 : index
    %c0_17 = arith.constant 0 : index
    %28 = vector.load %arg11[%c0_16, %c0_17] : memref<8x1xf32, #tpu.memory_space<vmem>>, vector<8x1xf32>
    tpu.vector_store %arg11[%c0_16, %c0_17], %16 {strides = array<i32>} : memref<8x1xf32, #tpu.memory_space<vmem>>, vector<8x1xf32>,
    %c3_i32 = arith.constant 3 : i32
    %29 = arith.cmpi eq, %arg1, %c3_i32 : i32
    %30 = arith.extui %29 : i1 to i32
    %c0_i32_18 = arith.constant 0 : i32
    %31 = arith.cmpi ne, %30, %c0_i32_18 : i32
    scf.if %31 {
      %c0_19 = arith.constant 0 : index
      %c0_20 = arith.constant 0 : index
      %32 = vector.load %arg11[%c0_19, %c0_20] : memref<8x1xf32, #tpu.memory_space<vmem>>, vector<8x1xf32>
      %c0_21 = arith.constant 0 : index
      %c0_22 = arith.constant 0 : index
      %33 = vector.load %arg12[%c0_21, %c0_22] : memref<8x1xf32, #tpu.memory_space<vmem>>, vector<8x1xf32>
      %34 = math.log %33 : vector<8x1xf32>
      %35 = arith.addf %32, %34 : vector<8x1xf32>
      %c0_23 = arith.constant 0 : index
      %c0_24 = arith.constant 0 : index
      %c0_25 = arith.constant 0 : index
      %36 = vector.load %arg13[%c0_23, %c0_24, %c0_25] : memref<4x8x10240xf32, #tpu.memory_space<vmem>>, vector<1x8x10240xf32>
      %37 = vector.shape_cast %36 : vector<1x8x10240xf32> to vector<8x10240xf32>
      %38 = vector.broadcast %35 : vector<8x1xf32> to vector<8x10240xf32>
      %39 = arith.subf %37, %38 : vector<8x10240xf32>
      %40 = arith.truncf %39 : vector<8x10240xf32> to vector<8x10240xbf16>
      %c0_26 = arith.constant 0 : index
      %c0_27 = arith.constant 0 : index
      %41 = vector.load %arg9[%c0_26, %c0_27] : memref<8x40960xbf16, #tpu.memory_space<vmem>>, vector<8x10240xbf16>
      tpu.vector_store %arg9[%c0_26, %c0_27], %40 {strides = array<i32>} : memref<8x40960xbf16, #tpu.memory_space<vmem>>, vector<8x10240xbf16>,
      %c1 = arith.constant 1 : index
      %c0_28 = arith.constant 0 : index
      %c0_29 = arith.constant 0 : index
      %42 = vector.load %arg13[%c1, %c0_28, %c0_29] : memref<4x8x10240xf32, #tpu.memory_space<vmem>>, vector<1x8x10240xf32>
      %43 = vector.shape_cast %42 : vector<1x8x10240xf32> to vector<8x10240xf32>
      %44 = vector.broadcast %35 : vector<8x1xf32> to vector<8x10240xf32>
      %45 = arith.subf %43, %44 : vector<8x10240xf32>
      %46 = arith.truncf %45 : vector<8x10240xf32> to vector<8x10240xbf16>
      %c0_30 = arith.constant 0 : index
      %c10240 = arith.constant 10240 : index
      %47 = vector.load %arg9[%c0_30, %c10240] : memref<8x40960xbf16, #tpu.memory_space<vmem>>, vector<8x10240xbf16>
      tpu.vector_store %arg9[%c0_30, %c10240], %46 {strides = array<i32>} : memref<8x40960xbf16, #tpu.memory_space<vmem>>, vector<8x10240xbf16>,
      %c2 = arith.constant 2 : index
      %c0_31 = arith.constant 0 : index
      %c0_32 = arith.constant 0 : index
      %48 = vector.load %arg13[%c2, %c0_31, %c0_32] : memref<4x8x10240xf32, #tpu.memory_space<vmem>>, vector<1x8x10240xf32>
      %49 = vector.shape_cast %48 : vector<1x8x10240xf32> to vector<8x10240xf32>
      %50 = vector.broadcast %35 : vector<8x1xf32> to vector<8x10240xf32>
      %51 = arith.subf %49, %50 : vector<8x10240xf32>
      %52 = arith.truncf %51 : vector<8x10240xf32> to vector<8x10240xbf16>
      %c0_33 = arith.constant 0 : index
      %c20480 = arith.constant 20480 : index
      %53 = vector.load %arg9[%c0_33, %c20480] : memref<8x40960xbf16, #tpu.memory_space<vmem>>, vector<8x10240xbf16>
      tpu.vector_store %arg9[%c0_33, %c20480], %52 {strides = array<i32>} : memref<8x40960xbf16, #tpu.memory_space<vmem>>, vector<8x10240xbf16>,
      %c3 = arith.constant 3 : index
      %c0_34 = arith.constant 0 : index
      %c0_35 = arith.constant 0 : index
      %54 = vector.load %arg13[%c3, %c0_34, %c0_35] : memref<4x8x10240xf32, #tpu.memory_space<vmem>>, vector<1x8x10240xf32>
      %55 = vector.shape_cast %54 : vector<1x8x10240xf32> to vector<8x10240xf32>
      %56 = vector.broadcast %35 : vector<8x1xf32> to vector<8x10240xf32>
      %57 = arith.subf %55, %56 : vector<8x10240xf32>
      %58 = arith.truncf %57 : vector<8x10240xf32> to vector<8x10240xbf16>
      %c0_36 = arith.constant 0 : index
      %c30720 = arith.constant 30720 : index
      %59 = vector.load %arg9[%c0_36, %c30720] : memref<8x40960xbf16, #tpu.memory_space<vmem>>, vector<8x10240xbf16>
      tpu.vector_store %arg9[%c0_36, %c30720], %58 {strides = array<i32>} : memref<8x40960xbf16, #tpu.memory_space<vmem>>, vector<8x10240xbf16>,
    } else {
    }
    return
  }
  func.func @transform_0(%arg0: i32, %arg1: i32) -> (i32, i32) {
    %c0_i32 = arith.constant 0 : i32
    %c0_i32_0 = arith.constant 0 : i32
    return %arg0, %c0_i32 : i32, i32
  }
  func.func @transform_1(%arg0: i32, %arg1: i32) -> (i32, i32) {
    %c0_i32 = arith.constant 0 : i32
    %c0_i32_0 = arith.constant 0 : i32
    %c0_i32_1 = arith.constant 0 : i32
    return %c0_i32, %c0_i32_0 : i32, i32
  }
  func.func @transform_2(%arg0: i32, %arg1: i32) -> (i32, i32) {
    %c0_i32 = arith.constant 0 : i32
    %c0_i32_0 = arith.constant 0 : i32
    %c0_i32_1 = arith.constant 0 : i32
    return %c0_i32, %c0_i32_0 : i32, i32
  }
  func.func @transform_3(%arg0: i32, %arg1: i32) -> (i32, i32) {
    %c0_i32 = arith.constant 0 : i32
    %c0_i32_0 = arith.constant 0 : i32
    %c0_i32_1 = arith.constant 0 : i32
    return %c0_i32, %c0_i32_0 : i32, i32
  }
  func.func @transform_4(%arg0: i32, %arg1: i32) -> (i32, i32) {
    %c0_i32 = arith.constant 0 : i32
    %c0_i32_0 = arith.constant 0 : i32
    %c0_i32_1 = arith.constant 0 : i32
    return %c0_i32, %c0_i32_0 : i32, i32
  }
  func.func @transform_5(%arg0: i32, %arg1: i32) -> (i32, i32) {
    %c0_i32 = arith.constant 0 : i32
    %c0_i32_0 = arith.constant 0 : i32
    return %c0_i32, %arg1 : i32, i32
  }
  func.func @transform_6(%arg0: i32, %arg1: i32) -> (i32, i32) {
    %c0_i32 = arith.constant 0 : i32
    %c0_i32_0 = arith.constant 0 : i32
    return %c0_i32, %arg1 : i32, i32
  }
  func.func @transform_7(%arg0: i32, %arg1: i32) -> (i32, i32) {
    %c0_i32 = arith.constant 0 : i32
    %c0_i32_0 = arith.constant 0 : i32
    return %arg0, %c0_i32 : i32, i32
  }
}

</mosaic_0001>

<llo_original>
// kernel: learner_forward.1
$region0: #{learner_forward.1}
  #allocation0 [shape = 'u32[]', space=smem, size = 0x4, offset = 0x4, fixed_abs, tag = 'smem constant byte address 0x4 - core index']
  #allocation1 [shape = 'u32[72,128]{1,0:T(1,128)}', space=vmem, size = 0x9000, scoped, tag = 'internal scratch']
  #allocation2 [shape = 'bf16[8,64]{1,0:T(8,128)(2,1)}', space=vmem, size = 0x800, scoped, tag = 'scratch operand']
  #allocation3 [shape = 'f32[8,1]{1,0:T(8,128)}', space=vmem, size = 0x1000, scoped, tag = 'scratch operand']
  #allocation4 [shape = 'f32[8,1]{1,0:T(8,128)}', space=vmem, size = 0x1000, scoped, tag = 'scratch operand']
  #allocation5 [shape = 'f32[4,8,10240]{2,1,0:T(8,128)}', space=vmem, size = 0x140000, scoped, tag = 'scratch operand']
  %s0 = inlined_call_operand.vmem [shape: f32[8,32], index: 0, kind: input, shape index: {}]
  %s1 = inlined_call_operand.hbm [shape: bf16[32,128], index: 1, kind: input, shape index: {}]
  %s2 = inlined_call_operand.hbm [shape: f32[1,128], index: 2, kind: input, shape index: {}]
  %s3 = inlined_call_operand.vmem [shape: bf16[128,64], index: 3, kind: input, shape index: {}]
  %s4 = inlined_call_operand.hbm [shape: f32[1,64], index: 4, kind: input, shape index: {}]
  %s5 = inlined_call_operand.hbm [shape: bf16[64,40960], index: 5, kind: input, shape index: {}]
  %s6 = inlined_call_operand.hbm [shape: f32[1,40960], index: 6, kind: input, shape index: {}]
  %s7 = inlined_call_operand.vmem [shape: bf16[8,40960], index: 7, kind: output, shape index: {}]
  %s8 = sld [smem:[#allocation0]]
  $region89: #{learner_forward.1} parent=0
    _
  %s10 = ssub.s32 1, %s8
  %s11 = scalar_select 0, %s10, %s8
  $region1: #{learner_forward.1} parent=0
    #allocation6 [shape = 'u8[8192]{0}', space=vmem, size = 0x2000, scoped, tag = 'input window, operand 1, single buffered']
    #allocation7 [shape = 's32[2]{0}', space=sflag, size = 0x8, scoped, tag = 'scoped memory for learner_forward.1']
    #allocation8 [shape = 'u8[512]{0}', space=vmem, size = 0x400, scoped, tag = 'input window, operand 2, single buffered']
    #allocation9 [shape = 's32[1]{0}', space=sflag, size = 0x4, scoped, tag = 'scoped memory for learner_forward.1']
    #allocation10 [shape = 'u8[512]{0}', space=vmem, size = 0x400, scoped, tag = 'input window, operand 4, single buffered']
    #allocation11 [shape = 'u8[2621440]{0}', space=vmem, size = 0x280000, scoped, tag = 'input window, operand 5']
    #allocation12 [shape = 's32[2]{0}', space=sflag, size = 0x8, scoped, tag = 'scoped memory for learner_forward.1']
    #allocation13 [shape = 'u8[81920]{0}', space=vmem, size = 0x14000, scoped, tag = 'input window, operand 6']
    %12 = vsyncpa [#allocation7], 0
    %13 = vsyncpa [#allocation9], 0
    %14 = vsyncpa [#allocation12], 0
    %s15 = scalar_lea.sflag [#allocation12], 1
    %16 = vsyncpa %s15, 0
    loop: start=0, step=1, limit=6
    $region2: #{learner_forward.1} parent=1 // loop_pre_header
      _
    $region3: #{learner_forward.1} parent=1 // loop_header
      %s18 = sphi 0, %s22
      %p19 = scmp.ge.s32.totalorder %s18, 6
      %s25 = sphi 0, %s37
      %s26 = sphi 0, %s33
      %s27 = sphi 0, %s25
      %s28 = sphi 0, %s26
      %s29 = sphi 0, %s27
      %s30 = sphi 0, %s28
      %s40 = sphi 0, %s42
      %s43 = sphi 0, %s40
      %s44 = sphi 0, %s43
      %s60 = sphi 0, %s44
      %s64 = sphi 0, %s64
      %s66 = sphi 0, %s64
      %s67 = sphi 0, %s66
      %s81 = sphi 0, %s67
      %s85 = sphi 0, %s85
      %s87 = sphi 0, %s85
      %s88 = sphi 0, %s87
      %s102 = sphi 0, %s88
      %s106 = sphi 0, %s106
      %s108 = sphi 0, %s106
      %s109 = sphi 0, %s108
      %s123 = sphi 0, %s109
      %s127 = sphi 0, %s127
      %s129 = sphi 0, %s127
      %s130 = sphi 0, %s129
      %s144 = sphi 0, %s130
      %s150 = sphi 0, %s152
      %s153 = sphi 0, %s150
      %s154 = sphi 0, %s153
      %s170 = sphi 0, %s154
      %s176 = sphi 0, %s178
      %s179 = sphi 0, %s176
      %s180 = sphi 0, %s179
      %s196 = sphi 0, %s180
      %s202 = sphi 0, %s204
      %s205 = sphi 0, %s202
      %s206 = sphi 0, %s205
      %s222 = sphi 0, %s206
    $region4: #{learner_forward.1} parent=1 // loop_header_branch
      %21 = sbr.rel (%p19) target = $region8
    $region5: #{learner_forward.1} parent=1 // loop_body
      %s23 = ssub.s32 %s18, 1
      %s24 = ssub.s32 %s18, 2
      %s31 = sadd.s32 1, %s26
      %p32 = scmp.ge.s32.totalorder %s31, 4
      %s33 = scalar_select %p32, 0, %s31
      %s34 = sadd.s32 1, %s25
      %s35 = scalar_select %p32, %s34, %s25
      %p36 = scmp.ge.s32.totalorder %s35, 1
      %s37 = scalar_select %p36, 0, %s35
      %s38 = ssub.s32 %s25, %s37
      %p39 = scmp.eq.s32.totalorder %s38, 0
      %s41 = sadd.s32 %s40, 1
      %s42 = scalar_select %p39, %s40, %s41
      %p45 = pneg %p39
      %p46 = scmp.eq.s32.totalorder %s18, 3
      %p47 = por %p45, %p46
      %p48 = scmp.ne.s32.totalorder %s40, %s43
      %p49 = scmp.eq.s32.totalorder %s18, 0
      %p50 = por %p48, %p49
      %p51 = scmp.ne.s32.totalorder %s40, %s43
      %p52 = scmp.eq.s32.totalorder %s23, 3
      %p53 = por %p51, %p52
      %p54 = scmp.ne.s32.totalorder %s43, %s44
      %p55 = scmp.eq.s32.totalorder %s23, 0
      %p56 = por %p54, %p55
      %p57 = scmp.ne.s32.totalorder %s43, %s44
      %p58 = scmp.eq.s32.totalorder %s24, 3
      %p59 = por %p57, %p58
      %p61 = scmp.ne.s32.totalorder %s44, %s60
      %p62 = scmp.eq.s32.totalorder %s24, 0
      %p63 = por %p61, %p62
      %s65 = sadd.s32 %s64, 1
      %p68 = scmp.eq.s32.totalorder %s18, 3
      %p69 = scmp.ne.s32.totalorder %s64, %s66
      %p70 = scmp.eq.s32.totalorder %s18, 0
      %p71 = por %p69, %p70
      %p72 = scmp.ne.s32.totalorder %s64, %s66
      %p73 = scmp.eq.s32.totalorder %s23, 3
      %p74 = por %p72, %p73
      %p75 = scmp.ne.s32.totalorder %s66, %s67
      %p76 = scmp.eq.s32.totalorder %s23, 0
      %p77 = por %p75, %p76
      %p78 = scmp.ne.s32.totalorder %s66, %s67
      %p79 = scmp.eq.s32.totalorder %s24, 3
      %p80 = por %p78, %p79
      %p82 = scmp.ne.s32.totalorder %s67, %s81
      %p83 = scmp.eq.s32.totalorder %s24, 0
      %p84 = por %p82, %p83
      %s86 = sadd.s32 %s85, 1
      %p89 = scmp.eq.s32.totalorder %s18, 3
      %p90 = scmp.ne.s32.totalorder %s85, %s87
      %p91 = scmp.eq.s32.totalorder %s18, 0
      %p92 = por %p90, %p91
      %p93 = scmp.ne.s32.totalorder %s85, %s87
      %p94 = scmp.eq.s32.totalorder %s23, 3
      %p95 = por %p93, %p94
      %p96 = scmp.ne.s32.totalorder %s87, %s88
      %p97 = scmp.eq.s32.totalorder %s23, 0
      %p98 = por %p96, %p97
      %p99 = scmp.ne.s32.totalorder %s87, %s88
      %p100 = scmp.eq.s32.totalorder %s24, 3
      %p101 = por %p99, %p100
      %p103 = scmp.ne.s32.totalorder %s88, %s102
      %p104 = scmp.eq.s32.totalorder %s24, 0
      %p105 = por %p103, %p104
      %s107 = sadd.s32 %s106, 1
      %p110 = scmp.eq.s32.totalorder %s18, 3
      %p111 = scmp.ne.s32.totalorder %s106, %s108
      %p112 = scmp.eq.s32.totalorder %s18, 0
      %p113 = por %p111, %p112
      %p114 = scmp.ne.s32.totalorder %s106, %s108
      %p115 = scmp.eq.s32.totalorder %s23, 3
      %p116 = por %p114, %p115
      %p117 = scmp.ne.s32.totalorder %s108, %s109
      %p118 = scmp.eq.s32.totalorder %s23, 0
      %p119 = por %p117, %p118
      %p120 = scmp.ne.s32.totalorder %s108, %s109
      %p121 = scmp.eq.s32.totalorder %s24, 3
      %p122 = por %p120, %p121
      %p124 = scmp.ne.s32.totalorder %s109, %s123
      %p125 = scmp.eq.s32.totalorder %s24, 0
      %p126 = por %p124, %p125
      %s128 = sadd.s32 %s127, 1
      %p131 = scmp.eq.s32.totalorder %s18, 3
      %p132 = scmp.ne.s32.totalorder %s127, %s129
      %p133 = scmp.eq.s32.totalorder %s18, 0
      %p134 = por %p132, %p133
      %p135 = scmp.ne.s32.totalorder %s127, %s129
      %p136 = scmp.eq.s32.totalorder %s23, 3
      %p137 = por %p135, %p136
      %p138 = scmp.ne.s32.totalorder %s129, %s130
      %p139 = scmp.eq.s32.totalorder %s23, 0
      %p140 = por %p138, %p139
      %p141 = scmp.ne.s32.totalorder %s129, %s130
      %p142 = scmp.eq.s32.totalorder %s24, 3
      %p143 = por %p141, %p142
      %p145 = scmp.ne.s32.totalorder %s130, %s144
      %p146 = scmp.eq.s32.totalorder %s24, 0
      %p147 = por %p145, %p146
      %s148 = ssub.s32 %s26, %s33
      %p149 = scmp.eq.s32.totalorder %s148, 0
      %s151 = sadd.s32 %s150, 1
      %s152 = scalar_select %p149, %s150, %s151
      %p155 = pneg %p149
      %p156 = scmp.eq.s32.totalorder %s18, 3
      %p157 = por %p155, %p156
      %p158 = scmp.ne.s32.totalorder %s150, %s153
      %p159 = scmp.eq.s32.totalorder %s18, 0
      %p160 = por %p158, %p159
      %p161 = scmp.ne.s32.totalorder %s150, %s153
      %p162 = scmp.eq.s32.totalorder %s23, 3
      %p163 = por %p161, %p162
      %p164 = scmp.ne.s32.totalorder %s153, %s154
      %p165 = scmp.eq.s32.totalorder %s23, 0
      %p166 = por %p164, %p165
      %p167 = scmp.ne.s32.totalorder %s153, %s154
      %p168 = scmp.eq.s32.totalorder %s24, 3
      %p169 = por %p167, %p168
      %p171 = scmp.ne.s32.totalorder %s154, %s170
      %p172 = scmp.eq.s32.totalorder %s24, 0
      %p173 = por %p171, %p172
      %s174 = ssub.s32 %s26, %s33
      %p175 = scmp.eq.s32.totalorder %s174, 0
      %s177 = sadd.s32 %s176, 1
      %s178 = scalar_select %p175, %s176, %s177
      %p181 = pneg %p175
      %p182 = scmp.eq.s32.totalorder %s18, 3
      %p183 = por %p181, %p182
      %p184 = scmp.ne.s32.totalorder %s176, %s179
      %p185 = scmp.eq.s32.totalorder %s18, 0
      %p186 = por %p184, %p185
      %p187 = scmp.ne.s32.totalorder %s176, %s179
      %p188 = scmp.eq.s32.totalorder %s23, 3
      %p189 = por %p187, %p188
      %p190 = scmp.ne.s32.totalorder %s179, %s180
      %p191 = scmp.eq.s32.totalorder %s23, 0
      %p192 = por %p190, %p191
      %p193 = scmp.ne.s32.totalorder %s179, %s180
      %p194 = scmp.eq.s32.totalorder %s24, 3
      %p195 = por %p193, %p194
      %p197 = scmp.ne.s32.totalorder %s180, %s196
      %p198 = scmp.eq.s32.totalorder %s24, 0
      %p199 = por %p197, %p198
      %s200 = ssub.s32 %s25, %s37
      %p201 = scmp.eq.s32.totalorder %s200, 0
      %s203 = sadd.s32 %s202, 1
      %s204 = scalar_select %p201, %s202, %s203
      %p207 = pneg %p201
      %p208 = scmp.eq.s32.totalorder %s18, 3
      %p209 = por %p207, %p208
      %p210 = scmp.ne.s32.totalorder %s202, %s205
      %p211 = scmp.eq.s32.totalorder %s18, 0
      %p212 = por %p210, %p211
      %p213 = scmp.ne.s32.totalorder %s202, %s205
      %p214 = scmp.eq.s32.totalorder %s23, 3
      %p215 = por %p213, %p214
      %p216 = scmp.ne.s32.totalorder %s205, %s206
      %p217 = scmp.eq.s32.totalorder %s23, 0
      %p218 = por %p216, %p217
      %p219 = scmp.ne.s32.totalorder %s205, %s206
      %p220 = scmp.eq.s32.totalorder %s24, 3
      %p221 = por %p219, %p220
      %p223 = scmp.ne.s32.totalorder %s206, %s222
      %p224 = scmp.eq.s32.totalorder %s24, 0
      %p225 = por %p223, %p224
      %p226 = scmp.le.s32.totalorder 1, %s18
      %p227 = scmp.lt.s32.totalorder %s18, 5
      %p228 = pnand %p226, %p227
      %p229 = pneg %p228
      // Predicated region
      $region9: #{learner_forward.1} parent=5 // pred_check
        _
      $region10: #{learner_forward.1} parent=5 // pred_check_branch
        %231 = sbr.rel (%p228) target = $region12
      $region11: #{learner_forward.1} parent=5 // pred_region
        %s232 = ssub.s32 %s18, 1
        // Predicated region
        $region13: #{learner_forward.1} parent=11 // pred_check
          %p233 = pneg %p56
        $region14: #{learner_forward.1} parent=11 // pred_check_branch
          %235 = sbr.rel (%p233) target = $region16
        $region15: #{learner_forward.1} parent=11 // pred_region
          %p236 = scmp.lt.s32.totalorder %s27, 0
          %s237 = scalar_select %p236, %s27, 0
          %s238 = smul.addr %s237, 8
          %s239 = scalar_lea.vmem %s0, %s238
        $region16: #{learner_forward.1} parent=11 // pred_fallthru
          _
        // Predicated region
        $region17: #{learner_forward.1} parent=11 // pred_check
          %p240 = pneg %p77
        $region18: #{learner_forward.1} parent=11 // pred_check_branch
          %242 = sbr.rel (%p240) target = $region20
        $region19: #{learner_forward.1} parent=11 // pred_region
          %244 = vsyncadd [#allocation7], 0
          %s245 = sshll.u32 %s1, 4
          %s246 = int_to_ptr.hbm [resolvable:$true] %s245
          %s247 = sshll.u32 [#allocation6], 4
          %s248 = int_to_ptr.vmem [resolvable:$true] %s247
          %253 = dma.hbm_to_vmem [thread:$0]  %s246, 256, %s248, [#allocation7], 64, 64, 4
        $region20: #{learner_forward.1} parent=11 // pred_fallthru
          _
        // Predicated region
        $region21: #{learner_forward.1} parent=11 // pred_check
          %p254 = pneg %p98
        $region22: #{learner_forward.1} parent=11 // pred_check_branch
          %256 = sbr.rel (%p254) target = $region24
        $region23: #{learner_forward.1} parent=11 // pred_region
          %258 = vsyncadd [#allocation9], 0
          %s260 = sshll.u32 %s2, 4
          %s261 = int_to_ptr.hbm [resolvable:$true] %s260
          %s262 = sshll.u32 [#allocation8], 4
          %s263 = int_to_ptr.vmem [resolvable:$true] %s262
          %265 = dma.hbm_to_vmem [thread:$0]  %s261, 16, %s263, [#allocation9]
        $region24: #{learner_forward.1} parent=11 // pred_fallthru
          _
        // Predicated region
        $region25: #{learner_forward.1} parent=11 // pred_check
          %p266 = pneg %p119
        $region26: #{learner_forward.1} parent=11 // pred_check_branch
          %268 = sbr.rel (%p266) target = $region28
        $region27: #{learner_forward.1} parent=11 // pred_region
          _
        $region28: #{learner_forward.1} parent=11 // pred_fallthru
          _
        // Predicated region
        $region29: #{learner_forward.1} parent=11 // pred_check
          %p269 = pneg %p140
        $region30: #{learner_forward.1} parent=11 // pred_check_branch
          %271 = sbr.rel (%p269) target = $region32
        $region31: #{learner_forward.1} parent=11 // pred_region
          %273 = vsyncadd [#allocation9], 0
          %s275 = sshll.u32 %s4, 4
          %s276 = int_to_ptr.hbm [resolvable:$true] %s275
          %s277 = sshll.u32 [#allocation10], 4
          %s278 = int_to_ptr.vmem [resolvable:$true] %s277
          %280 = dma.hbm_to_vmem [thread:$0]  %s276, 16, %s278, [#allocation9]
        $region32: #{learner_forward.1} parent=11 // pred_fallthru
          _
      $region12: #{learner_forward.1} parent=5 // pred_fallthru
        _
      %p281 = scmp.lt.s32.totalorder %s18, 4
      // Predicated region
      $region33: #{learner_forward.1} parent=5 // pred_check
        %p282 = pneg %p281
      $region34: #{learner_forward.1} parent=5 // pred_check_branch
        %284 = sbr.rel (%p282) target = $region36
      $region35: #{learner_forward.1} parent=5 // pred_region
        // Predicated region
        $region37: #{learner_forward.1} parent=35 // pred_check
          %p285 = pneg %p160
        $region38: #{learner_forward.1} parent=35 // pred_check_branch
          %287 = sbr.rel (%p285) target = $region40
        $region39: #{learner_forward.1} parent=35 // pred_region
          %s288 = sand.u32 %s18, 1
          %s289 = scalar_lea.sflag [#allocation12], %s288
          %s290 = sand.u32 %s150, 1
          %s291 = smul.addr %s290, 2560
          %s292 = scalar_lea.vmem [#allocation11], %s291
          %s293 = smul.u32 80, %s26
          %295 = vsyncadd %s289, 0
          %s296 = smul.addr %s293, 4
          %s297 = scalar_lea.hbm %s5, %s296
          %s298 = sshll.u32 %s297, 4
          %s299 = int_to_ptr.hbm [resolvable:$true] %s298
          %s300 = sshll.u32 %s292, 4
          %s301 = int_to_ptr.vmem [resolvable:$true] %s300
          %306 = dma.hbm_to_vmem [thread:$0]  %s299, 40960, %s301, %s289, 20480, 5120, 320
        $region40: #{learner_forward.1} parent=35 // pred_fallthru
          _
        // Predicated region
        $region41: #{learner_forward.1} parent=35 // pred_check
          %p307 = pneg %p186
        $region42: #{learner_forward.1} parent=35 // pred_check_branch
          %309 = sbr.rel (%p307) target = $region44
        $region43: #{learner_forward.1} parent=35 // pred_region
          %s310 = sand.u32 %s18, 1
          %s311 = scalar_lea.sflag [#allocation12], %s310
          %s312 = sand.u32 %s176, 1
          %s313 = smul.addr %s312, 80
          %s314 = scalar_lea.vmem [#allocation13], %s313
          %s315 = smul.u32 80, %s26
          %317 = vsyncadd %s311, 0
          %s318 = scalar_lea.hbm %s6, %s315
          %s320 = sshll.u32 %s318, 4
          %s321 = int_to_ptr.hbm [resolvable:$true] %s320
          %s322 = sshll.u32 %s314, 4
          %s323 = int_to_ptr.vmem [resolvable:$true] %s322
          %325 = dma.hbm_to_vmem [thread:$0]  %s321, 1280, %s323, %s311
        $region44: #{learner_forward.1} parent=35 // pred_fallthru
          _
      $region36: #{learner_forward.1} parent=5 // pred_fallthru
        _
      %p326 = scmp.le.s32.totalorder 1, %s18
      %p327 = scmp.lt.s32.totalorder %s18, 5
      %p328 = pnand %p326, %p327
      %p329 = pneg %p328
      // Predicated region
      $region45: #{learner_forward.1} parent=5 // pred_check
        _
      $region46: #{learner_forward.1} parent=5 // pred_check_branch
        %331 = sbr.rel (%p328) target = $region48
      $region47: #{learner_forward.1} parent=5 // pred_region
        %s332 = ssub.s32 %s18, 1
        // Predicated region
        $region49: #{learner_forward.1} parent=47 // pred_check
          %p333 = pneg %p77
        $region50: #{learner_forward.1} parent=47 // pred_check_branch
          %335 = sbr.rel (%p333) target = $region52
        $region51: #{learner_forward.1} parent=47 // pred_region
          %337 = dma.done [#allocation7], 256
        $region52: #{learner_forward.1} parent=47 // pred_fallthru
          _
        // Predicated region
        $region53: #{learner_forward.1} parent=47 // pred_check
          %p338 = pneg %p98
        $region54: #{learner_forward.1} parent=47 // pred_check_branch
          %340 = sbr.rel (%p338) target = $region56
        $region55: #{learner_forward.1} parent=47 // pred_region
          %342 = dma.done [#allocation9], 16
        $region56: #{learner_forward.1} parent=47 // pred_fallthru
          _
        // Predicated region
        $region57: #{learner_forward.1} parent=47 // pred_check
          %p343 = pneg %p140
        $region58: #{learner_forward.1} parent=47 // pred_check_branch
          %345 = sbr.rel (%p343) target = $region60
        $region59: #{learner_forward.1} parent=47 // pred_region
          %347 = dma.done [#allocation9], 16
        $region60: #{learner_forward.1} parent=47 // pred_fallthru
          _
        %s348 = sand.u32 %s23, 1
        %s349 = scalar_lea.sflag [#allocation12], %s348
        %s350 = sand.u32 %s153, 1
        %s351 = smul.addr %s350, 2560
        %s352 = scalar_lea.vmem [#allocation11], %s351
        // Predicated region
        $region61: #{learner_forward.1} parent=47 // pred_check
          %p353 = pneg %p166
        $region62: #{learner_forward.1} parent=47 // pred_check_branch
          %355 = sbr.rel (%p353) target = $region64
        $region63: #{learner_forward.1} parent=47 // pred_region
          %357 = dma.done %s349, 40960
        $region64: #{learner_forward.1} parent=47 // pred_fallthru
          _
        %s358 = sand.u32 %s23, 1
        %s359 = scalar_lea.sflag [#allocation12], %s358
        %s360 = sand.u32 %s179, 1
        %s361 = smul.addr %s360, 80
        %s362 = scalar_lea.vmem [#allocation13], %s361
        // Predicated region
        $region65: #{learner_forward.1} parent=47 // pred_check
          %p363 = pneg %p192
        $region66: #{learner_forward.1} parent=47 // pred_check_branch
          %365 = sbr.rel (%p363) target = $region68
        $region67: #{learner_forward.1} parent=47 // pred_region
          %367 = dma.done %s359, 1280
        $region68: #{learner_forward.1} parent=47 // pred_fallthru
          _
        %p368 = scmp.lt.s32.totalorder %s27, 0
        %s369 = scalar_select %p368, %s27, 0
        %s370 = smul.addr %s369, 8
        %s371 = scalar_lea.vmem %s0, %s370
        %p372 = pneg %p56
        %p373 = pneg %p53
        %p374 = pneg %p77
        %p375 = pneg %p74
        %p376 = pneg %p98
        %p377 = pneg %p95
        %p378 = pneg %p119
        %p379 = pneg %p116
        %p380 = pneg %p140
        %p381 = pneg %p137
        %s382 = sand.u32 %s23, 1
        %s383 = scalar_lea.sflag [#allocation12], %s382
        %s384 = sand.u32 %s153, 1
        %s385 = smul.addr %s384, 2560
        %s386 = scalar_lea.vmem [#allocation11], %s385
        %p387 = pneg %p166
        %p388 = pneg %p163
        %s389 = sand.u32 %s23, 1
        %s390 = scalar_lea.sflag [#allocation12], %s389
        %s391 = sand.u32 %s179, 1
        %s392 = smul.addr %s391, 80
        %s393 = scalar_lea.vmem [#allocation13], %s392
        %p394 = pneg %p192
        %p395 = pneg %p189
        %p396 = pneg %p218
        %p397 = pneg %p215
        %p398 = scmp.lt.s32.totalorder %s27, 0
        %s399 = scalar_select %p398, %s27, 0
        %s400 = smul.addr %s399, 320
        %s401 = smul.addr %s400, 4
        %s402 = scalar_lea.vmem %s7, %s401
        %p403 = scmp.lt.s32.totalorder %s27, 0
        %s404 = scalar_select %p403, %s27, 0
        %s405 = smul.addr %s404, 8
        %s406 = scalar_lea.vmem %s0, %s405
        %s407 = smul.u32 80, %s28
        %s408 = smul.u32 80, %s28
        %p409 = scmp.lt.s32.totalorder %s27, 0
        %s410 = scalar_select %p409, %s27, 0
        %s411 = smul.addr %s410, 320
        %s412 = smul.addr %s411, 4
        %s413 = scalar_lea.vmem %s7, %s412
        %p415 = scmp.eq.s32.totalorder %s28, 0
        // Predicated region
        $region69: #{learner_forward.1} parent=47 // pred_check
          %p416 = pneg %p415
        $region70: #{learner_forward.1} parent=47 // pred_check_branch
          %418 = sbr.rel (%p416) target = $region72
        $region71: #{learner_forward.1} parent=47 // pred_region
          %v419 = vld [vmem:[%s406] sm:$0xff]
          %v420 = vpack.c.bf16 %v419, %v419
          %v421 = vld [vmem:[#allocation6] sm:$0xf]
          %v422 = vld [vmem:[#allocation6 + $0x4] sm:$0xf]
          %v423 = vld [vmem:[#allocation6 + $0x8] sm:$0xf]
          %v424 = vld [vmem:[#allocation6 + $0xc] sm:$0xf]
          %v425 = vld [vmem:[#allocation8] sm:$0x1]
          %v427 = vperm.slane %v425, 0
          %v433 = vunpack.c.l.b16 %v421
          %v434 = vunpack.c.l.b16 %v422
          %v435 = vunpack.c.l.b16 %v423
          %v436 = vunpack.c.l.b16 %v424
          %v437 = vpack.c.b16 %v434, %v433
          %v438 = vpack.c.b16 %v436, %v435
          %vm441 = vcmask 261120
          %v443 = vsel %vm441, %v420, 0
          %445 = vmatpush.bf16.msra.mxu0 0
          %446 = vmatpush.bf16.msra.mxu0 0
          %447 = vmatpush.bf16.msra.mxu0 0
          %448 = vmatpush.bf16.msra.mxu0 0
          %449 = vmatpush.bf16.msra.mxu0 0
          %450 = vmatpush.bf16.msra.mxu0 0
          %451 = vmatpush.bf16.msra.mxu0 %v438
          %452 = vmatpush.bf16.msra.mxu0 %v437
          %453 = vmatmul.bf16.gmra.mxu0 %v443
          %v454 = vpop.f32.mrf.mxu0
          %v455 = vadd.f32 %v427, %v454
          %v456 = vpop.f32.mrf.mxu0
          %457 = vdwg.mxu0
          %v458 = vpack.c.bf16 %v455, %v455
          %v459 = vld [vmem:[%s3] sm:$0xf]
          %v460 = vld [vmem:[%s3 + $0x4] sm:$0xf]
          %v461 = vld [vmem:[%s3 + $0x8] sm:$0xf]
          %v462 = vld [vmem:[%s3 + $0xc] sm:$0xf]
          %v463 = vld [vmem:[%s3 + $0x10] sm:$0xf]
          %v464 = vld [vmem:[%s3 + $0x14] sm:$0xf]
          %v465 = vld [vmem:[%s3 + $0x18] sm:$0xf]
          %v466 = vld [vmem:[%s3 + $0x1c] sm:$0xf]
          %v467 = vld [vmem:[%s3 + $0x20] sm:$0xf]
          %v468 = vld [vmem:[%s3 + $0x24] sm:$0xf]
          %v469 = vld [vmem:[%s3 + $0x28] sm:$0xf]
          %v470 = vld [vmem:[%s3 + $0x2c] sm:$0xf]
          %v471 = vld [vmem:[%s3 + $0x30] sm:$0xf]
          %v472 = vld [vmem:[%s3 + $0x34] sm:$0xf]
          %v473 = vld [vmem:[%s3 + $0x38] sm:$0xf]
          %v474 = vld [vmem:[%s3 + $0x3c] sm:$0xf]
          %v475 = vld [vmem:[#allocation10] sm:$0x1]
          %v477 = vperm.slane %v475, 0
          %v495 = vunpack.c.l.b16 %v459
          %v496 = vunpack.c.l.b16 %v460
          %v497 = vunpack.c.l.b16 %v461
          %v498 = vunpack.c.l.b16 %v462
          %v499 = vunpack.c.l.b16 %v463
          %v500 = vunpack.c.l.b16 %v464
          %v501 = vunpack.c.l.b16 %v465
          %v502 = vunpack.c.l.b16 %v466
          %v503 = vunpack.c.l.b16 %v467
          %v504 = vunpack.c.l.b16 %v468
          %v505 = vunpack.c.l.b16 %v469
          %v506 = vunpack.c.l.b16 %v470
          %v507 = vunpack.c.l.b16 %v471
          %v508 = vunpack.c.l.b16 %v472
          %v509 = vunpack.c.l.b16 %v473
          %v510 = vunpack.c.l.b16 %v474
          %v511 = vpack.c.b16 %v496, %v495
          %v512 = vpack.c.b16 %v498, %v497
          %v513 = vpack.c.b16 %v500, %v499
          %v514 = vpack.c.b16 %v502, %v501
          %v515 = vpack.c.b16 %v504, %v503
          %v516 = vpack.c.b16 %v506, %v505
          %v517 = vpack.c.b16 %v508, %v507
          %v518 = vpack.c.b16 %v510, %v509
          %527 = vmatpush.bf16.msra.mxu0 %v518
          %528 = vmatpush.bf16.msra.mxu0 %v517
          %529 = vmatpush.bf16.msra.mxu0 %v516
          %530 = vmatpush.bf16.msra.mxu0 %v515
          %531 = vmatpush.bf16.msra.mxu0 %v514
          %532 = vmatpush.bf16.msra.mxu0 %v513
          %533 = vmatpush.bf16.msra.mxu0 %v512
          %534 = vmatpush.bf16.msra.mxu0 %v511
          %535 = vmatmul.bf16.gmra.mxu0 %v458
          %v536 = vpop.f32.mrf.mxu0
          %v537 = vadd.f32 %v477, %v536
          %v538 = vpop.f32.mrf.mxu0
          %539 = vdwg.mxu0
          %v540 = vpack.c.bf16 %v537, %v537
          %vm541 = vcmask 519168
          %542 = vst.msk [vmem:[#allocation2] sm:$0xf] %vm541, %v540
          %vm543 = vcmask 7168
          %544 = vst.msk [vmem:[#allocation3] sm:$0xff] %vm543, -inf
          %545 = vst.msk [vmem:[#allocation4] sm:$0xff] %vm543, 0.0
        $region72: #{learner_forward.1} parent=47 // pred_fallthru
          _
        %v546 = vld [vmem:[#allocation2] sm:$0xf]
        %v547 = vld [vmem:[%s352] sm:$0xff]
        %v548 = vld [vmem:[%s352 + $0x8] sm:$0xff]
        %v549 = vld [vmem:[%s352 + $0x10] sm:$0xff]
        %v550 = vld [vmem:[%s352 + $0x18] sm:$0xff]
        %v551 = vld [vmem:[%s352 + $0x20] sm:$0xff]
        %v552 = vld [vmem:[%s352 + $0x28] sm:$0xff]
        %v553 = vld [vmem:[%s352 + $0x30] sm:$0xff]
        %v554 = vld [vmem:[%s352 + $0x38] sm:$0xff]
        %v555 = vld [vmem:[%s352 + $0x40] sm:$0xff]
        %v556 = vld [vmem:[%s352 + $0x48] sm:$0xff]
        %v557 = vld [vmem:[%s352 + $0x50] sm:$0xff]
        %v558 = vld [vmem:[%s352 + $0x58] sm:$0xff]
        %v559 = vld [vmem:[%s352 + $0x60] sm:$0xff]
        %v560 = vld [vmem:[%s352 + $0x68] sm:$0xff]
        %v561 = vld [vmem:[%s352 + $0x70] sm:$0xff]
        %v562 = vld [vmem:[%s352 + $0x78] sm:$0xff]
        %v563 = vld [vmem:[%s352 + $0x80] sm:$0xff]
        %v564 = vld [vmem:[%s352 + $0x88] sm:$0xff]
        %v565 = vld [vmem:[%s352 + $0x90] sm:$0xff]
        %v566 = vld [vmem:[%s352 + $0x98] sm:$0xff]
        %v567 = vld [vmem:[%s352 + $0xa0] sm:$0xff]
        %v568 = vld [vmem:[%s352 + $0xa8] sm:$0xff]
        %v569 = vld [vmem:[%s352 + $0xb0] sm:$0xff]
        %v570 = vld [vmem:[%s352 + $0xb8] sm:$0xff]
        %v571 = vld [vmem:[%s352 + $0xc0] sm:$0xff]
        %v572 = vld [vmem:[%s352 + $0xc8] sm:$0xff]
        %v573 = vld [vmem:[%s352 + $0xd0] sm:$0xff]
        %v574 = vld [vmem:[%s352 + $0xd8] sm:$0xff]
        %v575 = vld [vmem:[%s352 + $0xe0] sm:$0xff]
        %v576 = vld [vmem:[%s352 + $0xe8] sm:$0xff]
        %v577 = vld [vmem:[%s352 + $0xf0] sm:$0xff]
        %v578 = vld [vmem:[%s352 + $0xf8] sm:$0xff]
        %v579 = vld [vmem:[%s352 + $0x100] sm:$0xff]
        %v580 = vld [vmem:[%s352 + $0x108] sm:$0xff]
        %v581 = vld [vmem:[%s352 + $0x110] sm:$0xff]
        %v582 = vld [vmem:[%s352 + $0x118] sm:$0xff]
        %v583 = vld [vmem:[%s352 + $0x120] sm:$0xff]
        %v584 = vld [vmem:[%s352 + $0x128] sm:$0xff]
        %v585 = vld [vmem:[%s352 + $0x130] sm:$0xff]
        %v586 = vld [vmem:[%s352 + $0x138] sm:$0xff]
        %v587 = vld [vmem:[%s352 + $0x140] sm:$0xff]
        %v588 = vld [vmem:[%s352 + $0x148] sm:$0xff]
        %v589 = vld [vmem:[%s352 + $0x150] sm:$0xff]
        %v590 = vld [vmem:[%s352 + $0x158] sm:$0xff]
        %v591 = vld [vmem:[%s352 + $0x160] sm:$0xff]
        %v592 = vld [vmem:[%s352 + $0x168] sm:$0xff]
        %v593 = vld [vmem:[%s352 + $0x170] sm:$0xff]
        %v594 = vld [vmem:[%s352 + $0x178] sm:$0xff]
        %v595 = vld [vmem:[%s352 + $0x180] sm:$0xff]
        %v596 = vld [vmem:[%s352 + $0x188] sm:$0xff]
        %v597 = vld [vmem:[%s352 + $0x190] sm:$0xff]
        %v598 = vld [vmem:[%s352 + $0x198] sm:$0xff]
        %v599 = vld [vmem:[%s352 + $0x1a0] sm:$0xff]
        %v600 = vld [vmem:[%s352 + $0x1a8] sm:$0xff]
        %v601 = vld [vmem:[%s352 + $0x1b0] sm:$0xff]
        %v602 = vld [vmem:[%s352 + $0x1b8] sm:$0xff]
        %v603 = vld [vmem:[%s352 + $0x1c0] sm:$0xff]
        %v604 = vld [vmem:[%s352 + $0x1c8] sm:$0xff]
        %v605 = vld [vmem:[%s352 + $0x1d0] sm:$0xff]
        %v606 = vld [vmem:[%s352 + $0x1d8] sm:$0xff]
        %v607 = vld [vmem:[%s352 + $0x1e0] sm:$0xff]
        %v608 = vld [vmem:[%s352 + $0x1e8] sm:$0xff]
        %v609 = vld [vmem:[%s352 + $0x1f0] sm:$0xff]
        %v610 = vld [vmem:[%s352 + $0x1f8] sm:$0xff]
        %v611 = vld [vmem:[%s352 + $0x200] sm:$0xff]
        %v612 = vld [vmem:[%s352 + $0x208] sm:$0xff]
        %v613 = vld [vmem:[%s352 + $0x210] sm:$0xff]
        %v614 = vld [vmem:[%s352 + $0x218] sm:$0xff]
        %v615 = vld [vmem:[%s352 + $0x220] sm:$0xff]
        %v616 = vld [vmem:[%s352 + $0x228] sm:$0xff]
        %v617 = vld [vmem:[%s352 + $0x230] sm:$0xff]
        %v618 = vld [vmem:[%s352 + $0x238] sm:$0xff]
        %v619 = vld [vmem:[%s352 + $0x240] sm:$0xff]
        %v620 = vld [vmem:[%s352 + $0x248] sm:$0xff]
        %v621 = vld [vmem:[%s352 + $0x250] sm:$0xff]
        %v622 = vld [vmem:[%s352 + $0x258] sm:$0xff]
        %v623 = vld [vmem:[%s352 + $0x260] sm:$0xff]
        %v624 = vld [vmem:[%s352 + $0x268] sm:$0xff]
        %v625 = vld [vmem:[%s352 + $0x270] sm:$0xff]
        %v626 = vld [vmem:[%s352 + $0x278] sm:$0xff]
        %v627 = vld [vmem:[%s352 + $0x280] sm:$0xff]
        %v628 = vld [vmem:[%s352 + $0x288] sm:$0xff]
        %v629 = vld [vmem:[%s352 + $0x290] sm:$0xff]
        %v630 = vld [vmem:[%s352 + $0x298] sm:$0xff]
        %v631 = vld [vmem:[%s352 + $0x2a0] sm:$0xff]
        %v632 = vld [vmem:[%s352 + $0x2a8] sm:$0xff]
        %v633 = vld [vmem:[%s352 + $0x2b0] sm:$0xff]
        %v634 = vld [vmem:[%s352 + $0x2b8] sm:$0xff]
        %v635 = vld [vmem:[%s352 + $0x2c0] sm:$0xff]
        %v636 = vld [vmem:[%s352 + $0x2c8] sm:$0xff]
        %v637 = vld [vmem:[%s352 + $0x2d0] sm:$0xff]
        %v638 = vld [vmem:[%s352 + $0x2d8] sm:$0xff]
        %v639 = vld [vmem:[%s352 + $0x2e0] sm:$0xff]
        %v640 = vld [vmem:[%s352 + $0x2e8] sm:$0xff]
        %v641 = vld [vmem:[%s352 + $0x2f0] sm:$0xff]
        %v642 = vld [vmem:[%s352 + $0x2f8] sm:$0xff]
        %v643 = vld [vmem:[%s352 + $0x300] sm:$0xff]
        %v644 = vld [vmem:[%s352 + $0x308] sm:$0xff]
        %v645 = vld [vmem:[%s352 + $0x310] sm:$0xff]
        %v646 = vld [vmem:[%s352 + $0x318] sm:$0xff]
        %v647 = vld [vmem:[%s352 + $0x320] sm:$0xff]
        %v648 = vld [vmem:[%s352 + $0x328] sm:$0xff]
        %v649 = vld [vmem:[%s352 + $0x330] sm:$0xff]
        %v650 = vld [vmem:[%s352 + $0x338] sm:$0xff]
        %v651 = vld [vmem:[%s352 + $0x340] sm:$0xff]
        %v652 = vld [vmem:[%s352 + $0x348] sm:$0xff]
        %v653 = vld [vmem:[%s352 + $0x350] sm:$0xff]
        %v654 = vld [vmem:[%s352 + $0x358] sm:$0xff]
        %v655 = vld [vmem:[%s352 + $0x360] sm:$0xff]
        %v656 = vld [vmem:[%s352 + $0x368] sm:$0xff]
        %v657 = vld [vmem:[%s352 + $0x370] sm:$0xff]
        %v658 = vld [vmem:[%s352 + $0x378] sm:$0xff]
        %v659 = vld [vmem:[%s352 + $0x380] sm:$0xff]
        %v660 = vld [vmem:[%s352 + $0x388] sm:$0xff]
        %v661 = vld [vmem:[%s352 + $0x390] sm:$0xff]
        %v662 = vld [vmem:[%s352 + $0x398] sm:$0xff]
        %v663 = vld [vmem:[%s352 + $0x3a0] sm:$0xff]
        %v664 = vld [vmem:[%s352 + $0x3a8] sm:$0xff]
        %v665 = vld [vmem:[%s352 + $0x3b0] sm:$0xff]
        %v666 = vld [vmem:[%s352 + $0x3b8] sm:$0xff]
        %v667 = vld [vmem:[%s352 + $0x3c0] sm:$0xff]
        %v668 = vld [vmem:[%s352 + $0x3c8] sm:$0xff]
        %v669 = vld [vmem:[%s352 + $0x3d0] sm:$0xff]
        %v670 = vld [vmem:[%s352 + $0x3d8] sm:$0xff]
        %v671 = vld [vmem:[%s352 + $0x3e0] sm:$0xff]
        %v672 = vld [vmem:[%s352 + $0x3e8] sm:$0xff]
        %v673 = vld [vmem:[%s352 + $0x3f0] sm:$0xff]
        %v674 = vld [vmem:[%s352 + $0x3f8] sm:$0xff]
        %v675 = vld [vmem:[%s352 + $0x400] sm:$0xff]
        %v676 = vld [vmem:[%s352 + $0x408] sm:$0xff]
        %v677 = vld [vmem:[%s352 + $0x410] sm:$0xff]
        %v678 = vld [vmem:[%s352 + $0x418] sm:$0xff]
        %v679 = vld [vmem:[%s352 + $0x420] sm:$0xff]
        %v680 = vld [vmem:[%s352 + $0x428] sm:$0xff]
        %v681 = vld [vmem:[%s352 + $0x430] sm:$0xff]
        %v682 = vld [vmem:[%s352 + $0x438] sm:$0xff]
        %v683 = vld [vmem:[%s352 + $0x440] sm:$0xff]
        %v684 = vld [vmem:[%s352 + $0x448] sm:$0xff]
        %v685 = vld [vmem:[%s352 + $0x450] sm:$0xff]
        %v686 = vld [vmem:[%s352 + $0x458] sm:$0xff]
        %v687 = vld [vmem:[%s352 + $0x460] sm:$0xff]
        %v688 = vld [vmem:[%s352 + $0x468] sm:$0xff]
        %v689 = vld [vmem:[%s352 + $0x470] sm:$0xff]
        %v690 = vld [vmem:[%s352 + $0x478] sm:$0xff]
        %v691 = vld [vmem:[%s352 + $0x480] sm:$0xff]
        %v692 = vld [vmem:[%s352 + $0x488] sm:$0xff]
        %v693 = vld [vmem:[%s352 + $0x490] sm:$0xff]
        %v694 = vld [vmem:[%s352 + $0x498] sm:$0xff]
        %v695 = vld [vmem:[%s352 + $0x4a0] sm:$0xff]
        %v696 = vld [vmem:[%s352 + $0x4a8] sm:$0xff]
        %v697 = vld [vmem:[%s352 + $0x4b0] sm:$0xff]
        %v698 = vld [vmem:[%s352 + $0x4b8] sm:$0xff]
        %v699 = vld [vmem:[%s352 + $0x4c0] sm:$0xff]
        %v700 = vld [vmem:[%s352 + $0x4c8] sm:$0xff]
        %v701 = vld [vmem:[%s352 + $0x4d0] sm:$0xff]
        %v702 = vld [vmem:[%s352 + $0x4d8] sm:$0xff]
        %v703 = vld [vmem:[%s352 + $0x4e0] sm:$0xff]
        %v704 = vld [vmem:[%s352 + $0x4e8] sm:$0xff]
        %v705 = vld [vmem:[%s352 + $0x4f0] sm:$0xff]
        %v706 = vld [vmem:[%s352 + $0x4f8] sm:$0xff]
        %v707 = vld [vmem:[%s352 + $0x500] sm:$0xff]
        %v708 = vld [vmem:[%s352 + $0x508] sm:$0xff]
        %v709 = vld [vmem:[%s352 + $0x510] sm:$0xff]
        %v710 = vld [vmem:[%s352 + $0x518] sm:$0xff]
        %v711 = vld [vmem:[%s352 + $0x520] sm:$0xff]
        %v712 = vld [vmem:[%s352 + $0x528] sm:$0xff]
        %v713 = vld [vmem:[%s352 + $0x530] sm:$0xff]
        %v714 = vld [vmem:[%s352 + $0x538] sm:$0xff]
        %v715 = vld [vmem:[%s352 + $0x540] sm:$0xff]
        %v716 = vld [vmem:[%s352 + $0x548] sm:$0xff]
        %v717 = vld [vmem:[%s352 + $0x550] sm:$0xff]
        %v718 = vld [vmem:[%s352 + $0x558] sm:$0xff]
        %v719 = vld [vmem:[%s352 + $0x560] sm:$0xff]
        %v720 = vld [vmem:[%s352 + $0x568] sm:$0xff]
        %v721 = vld [vmem:[%s352 + $0x570] sm:$0xff]
        %v722 = vld [vmem:[%s352 + $0x578] sm:$0xff]
        %v723 = vld [vmem:[%s352 + $0x580] sm:$0xff]
        %v724 = vld [vmem:[%s352 + $0x588] sm:$0xff]
        %v725 = vld [vmem:[%s352 + $0x590] sm:$0xff]
        %v726 = vld [vmem:[%s352 + $0x598] sm:$0xff]
        %v727 = vld [vmem:[%s352 + $0x5a0] sm:$0xff]
        %v728 = vld [vmem:[%s352 + $0x5a8] sm:$0xff]
        %v729 = vld [vmem:[%s352 + $0x5b0] sm:$0xff]
        %v730 = vld [vmem:[%s352 + $0x5b8] sm:$0xff]
        %v731 = vld [vmem:[%s352 + $0x5c0] sm:$0xff]
        %v732 = vld [vmem:[%s352 + $0x5c8] sm:$0xff]
        %v733 = vld [vmem:[%s352 + $0x5d0] sm:$0xff]
        %v734 = vld [vmem:[%s352 + $0x5d8] sm:$0xff]
        %v735 = vld [vmem:[%s352 + $0x5e0] sm:$0xff]
        %v736 = vld [vmem:[%s352 + $0x5e8] sm:$0xff]
        %v737 = vld [vmem:[%s352 + $0x5f0] sm:$0xff]
        %v738 = vld [vmem:[%s352 + $0x5f8] sm:$0xff]
        %v739 = vld [vmem:[%s352 + $0x600] sm:$0xff]
        %v740 = vld [vmem:[%s352 + $0x608] sm:$0xff]
        %v741 = vld [vmem:[%s352 + $0x610] sm:$0xff]
        %v742 = vld [vmem:[%s352 + $0x618] sm:$0xff]
        %v743 = vld [vmem:[%s352 + $0x620] sm:$0xff]
        %v744 = vld [vmem:[%s352 + $0x628] sm:$0xff]
        %v745 = vld [vmem:[%s352 + $0x630] sm:$0xff]
        %v746 = vld [vmem:[%s352 + $0x638] sm:$0xff]
        %v747 = vld [vmem:[%s352 + $0x640] sm:$0xff]
        %v748 = vld [vmem:[%s352 + $0x648] sm:$0xff]
        %v749 = vld [vmem:[%s352 + $0x650] sm:$0xff]
        %v750 = vld [vmem:[%s352 + $0x658] sm:$0xff]
        %v751 = vld [vmem:[%s352 + $0x660] sm:$0xff]
        %v752 = vld [vmem:[%s352 + $0x668] sm:$0xff]
        %v753 = vld [vmem:[%s352 + $0x670] sm:$0xff]
        %v754 = vld [vmem:[%s352 + $0x678] sm:$0xff]
        %v755 = vld [vmem:[%s352 + $0x680] sm:$0xff]
        %v756 = vld [vmem:[%s352 + $0x688] sm:$0xff]
        %v757 = vld [vmem:[%s352 + $0x690] sm:$0xff]
        %v758 = vld [vmem:[%s352 + $0x698] sm:$0xff]
        %v759 = vld [vmem:[%s352 + $0x6a0] sm:$0xff]
        %v760 = vld [vmem:[%s352 + $0x6a8] sm:$0xff]
        %v761 = vld [vmem:[%s352 + $0x6b0] sm:$0xff]
        %v762 = vld [vmem:[%s352 + $0x6b8] sm:$0xff]
        %v763 = vld [vmem:[%s352 + $0x6c0] sm:$0xff]
        %v764 = vld [vmem:[%s352 + $0x6c8] sm:$0xff]
        %v765 = vld [vmem:[%s352 + $0x6d0] sm:$0xff]
        %v766 = vld [vmem:[%s352 + $0x6d8] sm:$0xff]
        %v767 = vld [vmem:[%s352 + $0x6e0] sm:$0xff]
        %v768 = vld [vmem:[%s352 + $0x6e8] sm:$0xff]
        %v769 = vld [vmem:[%s352 + $0x6f0] sm:$0xff]
        %v770 = vld [vmem:[%s352 + $0x6f8] sm:$0xff]
        %v771 = vld [vmem:[%s352 + $0x700] sm:$0xff]
        %v772 = vld [vmem:[%s352 + $0x708] sm:$0xff]
        %v773 = vld [vmem:[%s352 + $0x710] sm:$0xff]
        %v774 = vld [vmem:[%s352 + $0x718] sm:$0xff]
        %v775 = vld [vmem:[%s352 + $0x720] sm:$0xff]
        %v776 = vld [vmem:[%s352 + $0x728] sm:$0xff]
        %v777 = vld [vmem:[%s352 + $0x730] sm:$0xff]
        %v778 = vld [vmem:[%s352 + $0x738] sm:$0xff]
        %v779 = vld [vmem:[%s352 + $0x740] sm:$0xff]
        %v780 = vld [vmem:[%s352 + $0x748] sm:$0xff]
        %v781 = vld [vmem:[%s352 + $0x750] sm:$0xff]
        %v782 = vld [vmem:[%s352 + $0x758] sm:$0xff]
        %v783 = vld [vmem:[%s352 + $0x760] sm:$0xff]
        %v784 = vld [vmem:[%s352 + $0x768] sm:$0xff]
        %v785 = vld [vmem:[%s352 + $0x770] sm:$0xff]
        %v786 = vld [vmem:[%s352 + $0x778] sm:$0xff]
        %v787 = vld [vmem:[%s352 + $0x780] sm:$0xff]
        %v788 = vld [vmem:[%s352 + $0x788] sm:$0xff]
        %v789 = vld [vmem:[%s352 + $0x790] sm:$0xff]
        %v790 = vld [vmem:[%s352 + $0x798] sm:$0xff]
        %v791 = vld [vmem:[%s352 + $0x7a0] sm:$0xff]
        %v792 = vld [vmem:[%s352 + $0x7a8] sm:$0xff]
        %v793 = vld [vmem:[%s352 + $0x7b0] sm:$0xff]
        %v794 = vld [vmem:[%s352 + $0x7b8] sm:$0xff]
        %v795 = vld [vmem:[%s352 + $0x7c0] sm:$0xff]
        %v796 = vld [vmem:[%s352 + $0x7c8] sm:$0xff]
        %v797 = vld [vmem:[%s352 + $0x7d0] sm:$0xff]
        %v798 = vld [vmem:[%s352 + $0x7d8] sm:$0xff]
        %v799 = vld [vmem:[%s352 + $0x7e0] sm:$0xff]
        %v800 = vld [vmem:[%s352 + $0x7e8] sm:$0xff]
        %v801 = vld [vmem:[%s352 + $0x7f0] sm:$0xff]
        %v802 = vld [vmem:[%s352 + $0x7f8] sm:$0xff]
        %v803 = vld [vmem:[%s352 + $0x800] sm:$0xff]
        %v804 = vld [vmem:[%s352 + $0x808] sm:$0xff]
        %v805 = vld [vmem:[%s352 + $0x810] sm:$0xff]
        %v806 = vld [vmem:[%s352 + $0x818] sm:$0xff]
        %v807 = vld [vmem:[%s352 + $0x820] sm:$0xff]
        %v808 = vld [vmem:[%s352 + $0x828] sm:$0xff]
        %v809 = vld [vmem:[%s352 + $0x830] sm:$0xff]
        %v810 = vld [vmem:[%s352 + $0x838] sm:$0xff]
        %v811 = vld [vmem:[%s352 + $0x840] sm:$0xff]
        %v812 = vld [vmem:[%s352 + $0x848] sm:$0xff]
        %v813 = vld [vmem:[%s352 + $0x850] sm:$0xff]
        %v814 = vld [vmem:[%s352 + $0x858] sm:$0xff]
        %v815 = vld [vmem:[%s352 + $0x860] sm:$0xff]
        %v816 = vld [vmem:[%s352 + $0x868] sm:$0xff]
        %v817 = vld [vmem:[%s352 + $0x870] sm:$0xff]
        %v818 = vld [vmem:[%s352 + $0x878] sm:$0xff]
        %v819 = vld [vmem:[%s352 + $0x880] sm:$0xff]
        %v820 = vld [vmem:[%s352 + $0x888] sm:$0xff]
        %v821 = vld [vmem:[%s352 + $0x890] sm:$0xff]
        %v822 = vld [vmem:[%s352 + $0x898] sm:$0xff]
        %v823 = vld [vmem:[%s352 + $0x8a0] sm:$0xff]
        %v824 = vld [vmem:[%s352 + $0x8a8] sm:$0xff]
        %v825 = vld [vmem:[%s352 + $0x8b0] sm:$0xff]
        %v826 = vld [vmem:[%s352 + $0x8b8] sm:$0xff]
        %v827 = vld [vmem:[%s352 + $0x8c0] sm:$0xff]
        %v828 = vld [vmem:[%s352 + $0x8c8] sm:$0xff]
        %v829 = vld [vmem:[%s352 + $0x8d0] sm:$0xff]
        %v830 = vld [vmem:[%s352 + $0x8d8] sm:$0xff]
        %v831 = vld [vmem:[%s352 + $0x8e0] sm:$0xff]
        %v832 = vld [vmem:[%s352 + $0x8e8] sm:$0xff]
        %v833 = vld [vmem:[%s352 + $0x8f0] sm:$0xff]
        %v834 = vld [vmem:[%s352 + $0x8f8] sm:$0xff]
        %v835 = vld [vmem:[%s352 + $0x900] sm:$0xff]
        %v836 = vld [vmem:[%s352 + $0x908] sm:$0xff]
        %v837 = vld [vmem:[%s352 + $0x910] sm:$0xff]
        %v838 = vld [vmem:[%s352 + $0x918] sm:$0xff]
        %v839 = vld [vmem:[%s352 + $0x920] sm:$0xff]
        %v840 = vld [vmem:[%s352 + $0x928] sm:$0xff]
        %v841 = vld [vmem:[%s352 + $0x930] sm:$0xff]
        %v842 = vld [vmem:[%s352 + $0x938] sm:$0xff]
        %v843 = vld [vmem:[%s352 + $0x940] sm:$0xff]
        %v844 = vld [vmem:[%s352 + $0x948] sm:$0xff]
        %v845 = vld [vmem:[%s352 + $0x950] sm:$0xff]
        %v846 = vld [vmem:[%s352 + $0x958] sm:$0xff]
        %v847 = vld [vmem:[%s352 + $0x960] sm:$0xff]
        %v848 = vld [vmem:[%s352 + $0x968] sm:$0xff]
        %v849 = vld [vmem:[%s352 + $0x970] sm:$0xff]
        %v850 = vld [vmem:[%s352 + $0x978] sm:$0xff]
        %v851 = vld [vmem:[%s352 + $0x980] sm:$0xff]
        %v852 = vld [vmem:[%s352 + $0x988] sm:$0xff]
        %v853 = vld [vmem:[%s352 + $0x990] sm:$0xff]
        %v854 = vld [vmem:[%s352 + $0x998] sm:$0xff]
        %v855 = vld [vmem:[%s352 + $0x9a0] sm:$0xff]
        %v856 = vld [vmem:[%s352 + $0x9a8] sm:$0xff]
        %v857 = vld [vmem:[%s352 + $0x9b0] sm:$0xff]
        %v858 = vld [vmem:[%s352 + $0x9b8] sm:$0xff]
        %v859 = vld [vmem:[%s352 + $0x9c0] sm:$0xff]
        %v860 = vld [vmem:[%s352 + $0x9c8] sm:$0xff]
        %v861 = vld [vmem:[%s352 + $0x9d0] sm:$0xff]
        %v862 = vld [vmem:[%s352 + $0x9d8] sm:$0xff]
        %v863 = vld [vmem:[%s352 + $0x9e0] sm:$0xff]
        %v864 = vld [vmem:[%s352 + $0x9e8] sm:$0xff]
        %v865 = vld [vmem:[%s352 + $0x9f0] sm:$0xff]
        %v866 = vld [vmem:[%s352 + $0x9f8] sm:$0xff]
        %v867 = vld [vmem:[%s362] sm:$0xff]
        %v868 = vld [vmem:[%s362 + $0x8] sm:$0xff]
        %v869 = vld [vmem:[%s362 + $0x10] sm:$0xff]
        %v870 = vld [vmem:[%s362 + $0x18] sm:$0xff]
        %v871 = vld [vmem:[%s362 + $0x20] sm:$0xff]
        %v872 = vld [vmem:[%s362 + $0x28] sm:$0xff]
        %v873 = vld [vmem:[%s362 + $0x30] sm:$0xff]
        %v874 = vld [vmem:[%s362 + $0x38] sm:$0xff]
        %v875 = vld [vmem:[%s362 + $0x40] sm:$0xff]
        %v876 = vld [vmem:[%s362 + $0x48] sm:$0xff]
        %v887 = vperm.slane %v867, 0
        %v888 = vperm.slane %v867, 1
        %v889 = vperm.slane %v867, 2
        %v890 = vperm.slane %v867, 3
        %v891 = vperm.slane %v867, 4
        %v892 = vperm.slane %v867, 5
        %v893 = vperm.slane %v867, 6
        %v894 = vperm.slane %v867, 7
        %v895 = vperm.slane %v868, 0
        %v896 = vperm.slane %v868, 1
        %v897 = vperm.slane %v868, 2
        %v898 = vperm.slane %v868, 3
        %v899 = vperm.slane %v868, 4
        %v900 = vperm.slane %v868, 5
        %v901 = vperm.slane %v868, 6
        %v902 = vperm.slane %v868, 7
        %v903 = vperm.slane %v869, 0
        %v904 = vperm.slane %v869, 1
        %v905 = vperm.slane %v869, 2
        %v906 = vperm.slane %v869, 3
        %v907 = vperm.slane %v869, 4
        %v908 = vperm.slane %v869, 5
        %v909 = vperm.slane %v869, 6
        %v910 = vperm.slane %v869, 7
        %v911 = vperm.slane %v870, 0
        %v912 = vperm.slane %v870, 1
        %v913 = vperm.slane %v870, 2
        %v914 = vperm.slane %v870, 3
        %v915 = vperm.slane %v870, 4
        %v916 = vperm.slane %v870, 5
        %v917 = vperm.slane %v870, 6
        %v918 = vperm.slane %v870, 7
        %v919 = vperm.slane %v871, 0
        %v920 = vperm.slane %v871, 1
        %v921 = vperm.slane %v871, 2
        %v922 = vperm.slane %v871, 3
        %v923 = vperm.slane %v871, 4
        %v924 = vperm.slane %v871, 5
        %v925 = vperm.slane %v871, 6
        %v926 = vperm.slane %v871, 7
        %v927 = vperm.slane %v872, 0
        %v928 = vperm.slane %v872, 1
        %v929 = vperm.slane %v872, 2
        %v930 = vperm.slane %v872, 3
        %v931 = vperm.slane %v872, 4
        %v932 = vperm.slane %v872, 5
        %v933 = vperm.slane %v872, 6
        %v934 = vperm.slane %v872, 7
        %v935 = vperm.slane %v873, 0
        %v936 = vperm.slane %v873, 1
        %v937 = vperm.slane %v873, 2
        %v938 = vperm.slane %v873, 3
        %v939 = vperm.slane %v873, 4
        %v940 = vperm.slane %v873, 5
        %v941 = vperm.slane %v873, 6
        %v942 = vperm.slane %v873, 7
        %v943 = vperm.slane %v874, 0
        %v944 = vperm.slane %v874, 1
        %v945 = vperm.slane %v874, 2
        %v946 = vperm.slane %v874, 3
        %v947 = vperm.slane %v874, 4
        %v948 = vperm.slane %v874, 5
        %v949 = vperm.slane %v874, 6
        %v950 = vperm.slane %v874, 7
        %v951 = vperm.slane %v875, 0
        %v952 = vperm.slane %v875, 1
        %v953 = vperm.slane %v875, 2
        %v954 = vperm.slane %v875, 3
        %v955 = vperm.slane %v875, 4
        %v956 = vperm.slane %v875, 5
        %v957 = vperm.slane %v875, 6
        %v958 = vperm.slane %v875, 7
        %v959 = vperm.slane %v876, 0
        %v960 = vperm.slane %v876, 1
        %v961 = vperm.slane %v876, 2
        %v962 = vperm.slane %v876, 3
        %v963 = vperm.slane %v876, 4
        %v964 = vperm.slane %v876, 5
        %v965 = vperm.slane %v876, 6
        %v966 = vperm.slane %v876, 7
        %v1367 = vunpack.c.l.b16 %v547
        %v1368 = vunpack.c.h.b16 %v547
        %v1369 = vunpack.c.l.b16 %v548
        %v1370 = vunpack.c.h.b16 %v548
        %v1371 = vunpack.c.l.b16 %v549
        %v1372 = vunpack.c.h.b16 %v549
        %v1373 = vunpack.c.l.b16 %v550
        %v1374 = vunpack.c.h.b16 %v550
        %v1375 = vunpack.c.l.b16 %v551
        %v1376 = vunpack.c.h.b16 %v551
        %v1377 = vunpack.c.l.b16 %v552
        %v1378 = vunpack.c.h.b16 %v552
        %v1379 = vunpack.c.l.b16 %v553
        %v1380 = vunpack.c.h.b16 %v553
        %v1381 = vunpack.c.l.b16 %v554
        %v1382 = vunpack.c.h.b16 %v554
        %v1383 = vunpack.c.l.b16 %v555
        %v1384 = vunpack.c.h.b16 %v555
        %v1385 = vunpack.c.l.b16 %v556
        %v1386 = vunpack.c.h.b16 %v556
        %v1387 = vunpack.c.l.b16 %v557
        %v1388 = vunpack.c.h.b16 %v557
        %v1389 = vunpack.c.l.b16 %v558
        %v1390 = vunpack.c.h.b16 %v558
        %v1391 = vunpack.c.l.b16 %v559
        %v1392 = vunpack.c.h.b16 %v559
        %v1393 = vunpack.c.l.b16 %v560
        %v1394 = vunpack.c.h.b16 %v560
        %v1395 = vunpack.c.l.b16 %v561
        %v1396 = vunpack.c.h.b16 %v561
        %v1397 = vunpack.c.l.b16 %v562
        %v1398 = vunpack.c.h.b16 %v562
        %v1399 = vunpack.c.l.b16 %v563
        %v1400 = vunpack.c.h.b16 %v563
        %v1401 = vunpack.c.l.b16 %v564
        %v1402 = vunpack.c.h.b16 %v564
        %v1403 = vunpack.c.l.b16 %v565
        %v1404 = vunpack.c.h.b16 %v565
        %v1405 = vunpack.c.l.b16 %v566
        %v1406 = vunpack.c.h.b16 %v566
        %v1407 = vunpack.c.l.b16 %v567
        %v1408 = vunpack.c.h.b16 %v567
        %v1409 = vunpack.c.l.b16 %v568
        %v1410 = vunpack.c.h.b16 %v568
        %v1411 = vunpack.c.l.b16 %v569
        %v1412 = vunpack.c.h.b16 %v569
        %v1413 = vunpack.c.l.b16 %v570
        %v1414 = vunpack.c.h.b16 %v570
        %v1415 = vunpack.c.l.b16 %v571
        %v1416 = vunpack.c.h.b16 %v571
        %v1417 = vunpack.c.l.b16 %v572
        %v1418 = vunpack.c.h.b16 %v572
        %v1419 = vunpack.c.l.b16 %v573
        %v1420 = vunpack.c.h.b16 %v573
        %v1421 = vunpack.c.l.b16 %v574
        %v1422 = vunpack.c.h.b16 %v574
        %v1423 = vunpack.c.l.b16 %v575
        %v1424 = vunpack.c.h.b16 %v575
        %v1425 = vunpack.c.l.b16 %v576
        %v1426 = vunpack.c.h.b16 %v576
        %v1427 = vunpack.c.l.b16 %v577
        %v1428 = vunpack.c.h.b16 %v577
        %v1429 = vunpack.c.l.b16 %v578
        %v1430 = vunpack.c.h.b16 %v578
        %v1431 = vunpack.c.l.b16 %v579
        %v1432 = vunpack.c.h.b16 %v579
        %v1433 = vunpack.c.l.b16 %v580
        %v1434 = vunpack.c.h.b16 %v580
        %v1435 = vunpack.c.l.b16 %v581
        %v1436 = vunpack.c.h.b16 %v581
        %v1437 = vunpack.c.l.b16 %v582
        %v1438 = vunpack.c.h.b16 %v582
        %v1439 = vunpack.c.l.b16 %v583
        %v1440 = vunpack.c.h.b16 %v583
        %v1441 = vunpack.c.l.b16 %v584
        %v1442 = vunpack.c.h.b16 %v584
        %v1443 = vunpack.c.l.b16 %v585
        %v1444 = vunpack.c.h.b16 %v585
        %v1445 = vunpack.c.l.b16 %v586
        %v1446 = vunpack.c.h.b16 %v586
        %v1447 = vunpack.c.l.b16 %v587
        %v1448 = vunpack.c.h.b16 %v587
        %v1449 = vunpack.c.l.b16 %v588
        %v1450 = vunpack.c.h.b16 %v588
        %v1451 = vunpack.c.l.b16 %v589
        %v1452 = vunpack.c.h.b16 %v589
        %v1453 = vunpack.c.l.b16 %v590
        %v1454 = vunpack.c.h.b16 %v590
        %v1455 = vunpack.c.l.b16 %v591
        %v1456 = vunpack.c.h.b16 %v591
        %v1457 = vunpack.c.l.b16 %v592
        %v1458 = vunpack.c.h.b16 %v592
        %v1459 = vunpack.c.l.b16 %v593
        %v1460 = vunpack.c.h.b16 %v593
        %v1461 = vunpack.c.l.b16 %v594
        %v1462 = vunpack.c.h.b16 %v594
        %v1463 = vunpack.c.l.b16 %v595
        %v1464 = vunpack.c.h.b16 %v595
        %v1465 = vunpack.c.l.b16 %v596
        %v1466 = vunpack.c.h.b16 %v596
        %v1467 = vunpack.c.l.b16 %v597
        %v1468 = vunpack.c.h.b16 %v597
        %v1469 = vunpack.c.l.b16 %v598
        %v1470 = vunpack.c.h.b16 %v598
        %v1471 = vunpack.c.l.b16 %v599
        %v1472 = vunpack.c.h.b16 %v599
        %v1473 = vunpack.c.l.b16 %v600
        %v1474 = vunpack.c.h.b16 %v600
        %v1475 = vunpack.c.l.b16 %v601
        %v1476 = vunpack.c.h.b16 %v601
        %v1477 = vunpack.c.l.b16 %v602
        %v1478 = vunpack.c.h.b16 %v602
        %v1479 = vunpack.c.l.b16 %v603
        %v1480 = vunpack.c.h.b16 %v603
        %v1481 = vunpack.c.l.b16 %v604
        %v1482 = vunpack.c.h.b16 %v604
        %v1483 = vunpack.c.l.b16 %v605
        %v1484 = vunpack.c.h.b16 %v605
        %v1485 = vunpack.c.l.b16 %v606
        %v1486 = vunpack.c.h.b16 %v606
        %v1487 = vunpack.c.l.b16 %v607
        %v1488 = vunpack.c.h.b16 %v607
        %v1489 = vunpack.c.l.b16 %v608
        %v1490 = vunpack.c.h.b16 %v608
        %v1491 = vunpack.c.l.b16 %v609
        %v1492 = vunpack.c.h.b16 %v609
        %v1493 = vunpack.c.l.b16 %v610
        %v1494 = vunpack.c.h.b16 %v610
        %v1495 = vunpack.c.l.b16 %v611
        %v1496 = vunpack.c.h.b16 %v611
        %v1497 = vunpack.c.l.b16 %v612
        %v1498 = vunpack.c.h.b16 %v612
        %v1499 = vunpack.c.l.b16 %v613
        %v1500 = vunpack.c.h.b16 %v613
        %v1501 = vunpack.c.l.b16 %v614
        %v1502 = vunpack.c.h.b16 %v614
        %v1503 = vunpack.c.l.b16 %v615
        %v1504 = vunpack.c.h.b16 %v615
        %v1505 = vunpack.c.l.b16 %v616
        %v1506 = vunpack.c.h.b16 %v616
        %v1507 = vunpack.c.l.b16 %v617
        %v1508 = vunpack.c.h.b16 %v617
        %v1509 = vunpack.c.l.b16 %v618
        %v1510 = vunpack.c.h.b16 %v618
        %v1511 = vunpack.c.l.b16 %v619
        %v1512 = vunpack.c.h.b16 %v619
        %v1513 = vunpack.c.l.b16 %v620
        %v1514 = vunpack.c.h.b16 %v620
        %v1515 = vunpack.c.l.b16 %v621
        %v1516 = vunpack.c.h.b16 %v621
        %v1517 = vunpack.c.l.b16 %v622
        %v1518 = vunpack.c.h.b16 %v622
        %v1519 = vunpack.c.l.b16 %v623
        %v1520 = vunpack.c.h.b16 %v623
        %v1521 = vunpack.c.l.b16 %v624
        %v1522 = vunpack.c.h.b16 %v624
        %v1523 = vunpack.c.l.b16 %v625
        %v1524 = vunpack.c.h.b16 %v625
        %v1525 = vunpack.c.l.b16 %v626
        %v1526 = vunpack.c.h.b16 %v626
        %v1527 = vunpack.c.l.b16 %v627
        %v1528 = vunpack.c.h.b16 %v627
        %v1529 = vunpack.c.l.b16 %v628
        %v1530 = vunpack.c.h.b16 %v628
        %v1531 = vunpack.c.l.b16 %v629
        %v1532 = vunpack.c.h.b16 %v629
        %v1533 = vunpack.c.l.b16 %v630
        %v1534 = vunpack.c.h.b16 %v630
        %v1535 = vunpack.c.l.b16 %v631
        %v1536 = vunpack.c.h.b16 %v631
        %v1537 = vunpack.c.l.b16 %v632
        %v1538 = vunpack.c.h.b16 %v632
        %v1539 = vunpack.c.l.b16 %v633
        %v1540 = vunpack.c.h.b16 %v633
        %v1541 = vunpack.c.l.b16 %v634
        %v1542 = vunpack.c.h.b16 %v634
        %v1543 = vunpack.c.l.b16 %v635
        %v1544 = vunpack.c.h.b16 %v635
        %v1545 = vunpack.c.l.b16 %v636
        %v1546 = vunpack.c.h.b16 %v636
        %v1547 = vunpack.c.l.b16 %v637
        %v1548 = vunpack.c.h.b16 %v637
        %v1549 = vunpack.c.l.b16 %v638
        %v1550 = vunpack.c.h.b16 %v638
        %v1551 = vunpack.c.l.b16 %v639
        %v1552 = vunpack.c.h.b16 %v639
        %v1553 = vunpack.c.l.b16 %v640
        %v1554 = vunpack.c.h.b16 %v640
        %v1555 = vunpack.c.l.b16 %v641
        %v1556 = vunpack.c.h.b16 %v641
        %v1557 = vunpack.c.l.b16 %v642
        %v1558 = vunpack.c.h.b16 %v642
        %v1559 = vunpack.c.l.b16 %v643
        %v1560 = vunpack.c.h.b16 %v643
        %v1561 = vunpack.c.l.b16 %v644
        %v1562 = vunpack.c.h.b16 %v644
        %v1563 = vunpack.c.l.b16 %v645
        %v1564 = vunpack.c.h.b16 %v645
        %v1565 = vunpack.c.l.b16 %v646
        %v1566 = vunpack.c.h.b16 %v646
        %v1567 = vunpack.c.l.b16 %v647
        %v1568 = vunpack.c.h.b16 %v647
        %v1569 = vunpack.c.l.b16 %v648
        %v1570 = vunpack.c.h.b16 %v648
        %v1571 = vunpack.c.l.b16 %v649
        %v1572 = vunpack.c.h.b16 %v649
        %v1573 = vunpack.c.l.b16 %v650
        %v1574 = vunpack.c.h.b16 %v650
        %v1575 = vunpack.c.l.b16 %v651
        %v1576 = vunpack.c.h.b16 %v651
        %v1577 = vunpack.c.l.b16 %v652
        %v1578 = vunpack.c.h.b16 %v652
        %v1579 = vunpack.c.l.b16 %v653
        %v1580 = vunpack.c.h.b16 %v653
        %v1581 = vunpack.c.l.b16 %v654
        %v1582 = vunpack.c.h.b16 %v654
        %v1583 = vunpack.c.l.b16 %v655
        %v1584 = vunpack.c.h.b16 %v655
        %v1585 = vunpack.c.l.b16 %v656
        %v1586 = vunpack.c.h.b16 %v656
        %v1587 = vunpack.c.l.b16 %v657
        %v1588 = vunpack.c.h.b16 %v657
        %v1589 = vunpack.c.l.b16 %v658
        %v1590 = vunpack.c.h.b16 %v658
        %v1591 = vunpack.c.l.b16 %v659
        %v1592 = vunpack.c.h.b16 %v659
        %v1593 = vunpack.c.l.b16 %v660
        %v1594 = vunpack.c.h.b16 %v660
        %v1595 = vunpack.c.l.b16 %v661
        %v1596 = vunpack.c.h.b16 %v661
        %v1597 = vunpack.c.l.b16 %v662
        %v1598 = vunpack.c.h.b16 %v662
        %v1599 = vunpack.c.l.b16 %v663
        %v1600 = vunpack.c.h.b16 %v663
        %v1601 = vunpack.c.l.b16 %v664
        %v1602 = vunpack.c.h.b16 %v664
        %v1603 = vunpack.c.l.b16 %v665
        %v1604 = vunpack.c.h.b16 %v665
        %v1605 = vunpack.c.l.b16 %v666
        %v1606 = vunpack.c.h.b16 %v666
        %v1607 = vunpack.c.l.b16 %v667
        %v1608 = vunpack.c.h.b16 %v667
        %v1609 = vunpack.c.l.b16 %v668
        %v1610 = vunpack.c.h.b16 %v668
        %v1611 = vunpack.c.l.b16 %v669
        %v1612 = vunpack.c.h.b16 %v669
        %v1613 = vunpack.c.l.b16 %v670
        %v1614 = vunpack.c.h.b16 %v670
        %v1615 = vunpack.c.l.b16 %v671
        %v1616 = vunpack.c.h.b16 %v671
        %v1617 = vunpack.c.l.b16 %v672
        %v1618 = vunpack.c.h.b16 %v672
        %v1619 = vunpack.c.l.b16 %v673
        %v1620 = vunpack.c.h.b16 %v673
        %v1621 = vunpack.c.l.b16 %v674
        %v1622 = vunpack.c.h.b16 %v674
        %v1623 = vunpack.c.l.b16 %v675
        %v1624 = vunpack.c.h.b16 %v675
        %v1625 = vunpack.c.l.b16 %v676
        %v1626 = vunpack.c.h.b16 %v676
        %v1627 = vunpack.c.l.b16 %v677
        %v1628 = vunpack.c.h.b16 %v677
        %v1629 = vunpack.c.l.b16 %v678
        %v1630 = vunpack.c.h.b16 %v678
        %v1631 = vunpack.c.l.b16 %v679
        %v1632 = vunpack.c.h.b16 %v679
        %v1633 = vunpack.c.l.b16 %v680
        %v1634 = vunpack.c.h.b16 %v680
        %v1635 = vunpack.c.l.b16 %v681
        %v1636 = vunpack.c.h.b16 %v681
        %v1637 = vunpack.c.l.b16 %v682
        %v1638 = vunpack.c.h.b16 %v682
        %v1639 = vunpack.c.l.b16 %v683
        %v1640 = vunpack.c.h.b16 %v683
        %v1641 = vunpack.c.l.b16 %v684
        %v1642 = vunpack.c.h.b16 %v684
        %v1643 = vunpack.c.l.b16 %v685
        %v1644 = vunpack.c.h.b16 %v685
        %v1645 = vunpack.c.l.b16 %v686
        %v1646 = vunpack.c.h.b16 %v686
        %v1647 = vunpack.c.l.b16 %v687
        %v1648 = vunpack.c.h.b16 %v687
        %v1649 = vunpack.c.l.b16 %v688
        %v1650 = vunpack.c.h.b16 %v688
        %v1651 = vunpack.c.l.b16 %v689
        %v1652 = vunpack.c.h.b16 %v689
        %v1653 = vunpack.c.l.b16 %v690
        %v1654 = vunpack.c.h.b16 %v690
        %v1655 = vunpack.c.l.b16 %v691
        %v1656 = vunpack.c.h.b16 %v691
        %v1657 = vunpack.c.l.b16 %v692
        %v1658 = vunpack.c.h.b16 %v692
        %v1659 = vunpack.c.l.b16 %v693
        %v1660 = vunpack.c.h.b16 %v693
        %v1661 = vunpack.c.l.b16 %v694
        %v1662 = vunpack.c.h.b16 %v694
        %v1663 = vunpack.c.l.b16 %v695
        %v1664 = vunpack.c.h.b16 %v695
        %v1665 = vunpack.c.l.b16 %v696
        %v1666 = vunpack.c.h.b16 %v696
        %v1667 = vunpack.c.l.b16 %v697
        %v1668 = vunpack.c.h.b16 %v697
        %v1669 = vunpack.c.l.b16 %v698
        %v1670 = vunpack.c.h.b16 %v698
        %v1671 = vunpack.c.l.b16 %v699
        %v1672 = vunpack.c.h.b16 %v699
        %v1673 = vunpack.c.l.b16 %v700
        %v1674 = vunpack.c.h.b16 %v700
        %v1675 = vunpack.c.l.b16 %v701
        %v1676 = vunpack.c.h.b16 %v701
        %v1677 = vunpack.c.l.b16 %v702
        %v1678 = vunpack.c.h.b16 %v702
        %v1679 = vunpack.c.l.b16 %v703
        %v1680 = vunpack.c.h.b16 %v703
        %v1681 = vunpack.c.l.b16 %v704
        %v1682 = vunpack.c.h.b16 %v704
        %v1683 = vunpack.c.l.b16 %v705
        %v1684 = vunpack.c.h.b16 %v705
        %v1685 = vunpack.c.l.b16 %v706
        %v1686 = vunpack.c.h.b16 %v706
        %v1687 = vunpack.c.l.b16 %v707
        %v1688 = vunpack.c.h.b16 %v707
        %v1689 = vunpack.c.l.b16 %v708
        %v1690 = vunpack.c.h.b16 %v708
        %v1691 = vunpack.c.l.b16 %v709
        %v1692 = vunpack.c.h.b16 %v709
        %v1693 = vunpack.c.l.b16 %v710
        %v1694 = vunpack.c.h.b16 %v710
        %v1695 = vunpack.c.l.b16 %v711
        %v1696 = vunpack.c.h.b16 %v711
        %v1697 = vunpack.c.l.b16 %v712
        %v1698 = vunpack.c.h.b16 %v712
        %v1699 = vunpack.c.l.b16 %v713
        %v1700 = vunpack.c.h.b16 %v713
        %v1701 = vunpack.c.l.b16 %v714
        %v1702 = vunpack.c.h.b16 %v714
        %v1703 = vunpack.c.l.b16 %v715
        %v1704 = vunpack.c.h.b16 %v715
        %v1705 = vunpack.c.l.b16 %v716
        %v1706 = vunpack.c.h.b16 %v716
        %v1707 = vunpack.c.l.b16 %v717
        %v1708 = vunpack.c.h.b16 %v717
        %v1709 = vunpack.c.l.b16 %v718
        %v1710 = vunpack.c.h.b16 %v718
        %v1711 = vunpack.c.l.b16 %v719
        %v1712 = vunpack.c.h.b16 %v719
        %v1713 = vunpack.c.l.b16 %v720
        %v1714 = vunpack.c.h.b16 %v720
        %v1715 = vunpack.c.l.b16 %v721
        %v1716 = vunpack.c.h.b16 %v721
        %v1717 = vunpack.c.l.b16 %v722
        %v1718 = vunpack.c.h.b16 %v722
        %v1719 = vunpack.c.l.b16 %v723
        %v1720 = vunpack.c.h.b16 %v723
        %v1721 = vunpack.c.l.b16 %v724
        %v1722 = vunpack.c.h.b16 %v724
        %v1723 = vunpack.c.l.b16 %v725
        %v1724 = vunpack.c.h.b16 %v725
        %v1725 = vunpack.c.l.b16 %v726
        %v1726 = vunpack.c.h.b16 %v726
        %v1727 = vunpack.c.l.b16 %v727
        %v1728 = vunpack.c.h.b16 %v727
        %v1729 = vunpack.c.l.b16 %v728
        %v1730 = vunpack.c.h.b16 %v728
        %v1731 = vunpack.c.l.b16 %v729
        %v1732 = vunpack.c.h.b16 %v729
        %v1733 = vunpack.c.l.b16 %v730
        %v1734 = vunpack.c.h.b16 %v730
        %v1735 = vunpack.c.l.b16 %v731
        %v1736 = vunpack.c.h.b16 %v731
        %v1737 = vunpack.c.l.b16 %v732
        %v1738 = vunpack.c.h.b16 %v732
        %v1739 = vunpack.c.l.b16 %v733
        %v1740 = vunpack.c.h.b16 %v733
        %v1741 = vunpack.c.l.b16 %v734
        %v1742 = vunpack.c.h.b16 %v734
        %v1743 = vunpack.c.l.b16 %v735
        %v1744 = vunpack.c.h.b16 %v735
        %v1745 = vunpack.c.l.b16 %v736
        %v1746 = vunpack.c.h.b16 %v736
        %v1747 = vunpack.c.l.b16 %v737
        %v1748 = vunpack.c.h.b16 %v737
        %v1749 = vunpack.c.l.b16 %v738
        %v1750 = vunpack.c.h.b16 %v738
        %v1751 = vunpack.c.l.b16 %v739
        %v1752 = vunpack.c.h.b16 %v739
        %v1753 = vunpack.c.l.b16 %v740
        %v1754 = vunpack.c.h.b16 %v740
        %v1755 = vunpack.c.l.b16 %v741
        %v1756 = vunpack.c.h.b16 %v741
        %v1757 = vunpack.c.l.b16 %v742
        %v1758 = vunpack.c.h.b16 %v742
        %v1759 = vunpack.c.l.b16 %v743
        %v1760 = vunpack.c.h.b16 %v743
        %v1761 = vunpack.c.l.b16 %v744
        %v1762 = vunpack.c.h.b16 %v744
        %v1763 = vunpack.c.l.b16 %v745
        %v1764 = vunpack.c.h.b16 %v745
        %v1765 = vunpack.c.l.b16 %v746
        %v1766 = vunpack.c.h.b16 %v746
        %v1767 = vunpack.c.l.b16 %v747
        %v1768 = vunpack.c.h.b16 %v747
        %v1769 = vunpack.c.l.b16 %v748
        %v1770 = vunpack.c.h.b16 %v748
        %v1771 = vunpack.c.l.b16 %v749
        %v1772 = vunpack.c.h.b16 %v749
        %v1773 = vunpack.c.l.b16 %v750
        %v1774 = vunpack.c.h.b16 %v750
        %v1775 = vunpack.c.l.b16 %v751
        %v1776 = vunpack.c.h.b16 %v751
        %v1777 = vunpack.c.l.b16 %v752
        %v1778 = vunpack.c.h.b16 %v752
        %v1779 = vunpack.c.l.b16 %v753
        %v1780 = vunpack.c.h.b16 %v753
        %v1781 = vunpack.c.l.b16 %v754
        %v1782 = vunpack.c.h.b16 %v754
        %v1783 = vunpack.c.l.b16 %v755
        %v1784 = vunpack.c.h.b16 %v755
        %v1785 = vunpack.c.l.b16 %v756
        %v1786 = vunpack.c.h.b16 %v756
        %v1787 = vunpack.c.l.b16 %v757
        %v1788 = vunpack.c.h.b16 %v757
        %v1789 = vunpack.c.l.b16 %v758
        %v1790 = vunpack.c.h.b16 %v758
        %v1791 = vunpack.c.l.b16 %v759
        %v1792 = vunpack.c.h.b16 %v759
        %v1793 = vunpack.c.l.b16 %v760
        %v1794 = vunpack.c.h.b16 %v760
        %v1795 = vunpack.c.l.b16 %v761
        %v1796 = vunpack.c.h.b16 %v761
        %v1797 = vunpack.c.l.b16 %v762
        %v1798 = vunpack.c.h.b16 %v762
        %v1799 = vunpack.c.l.b16 %v763
        %v1800 = vunpack.c.h.b16 %v763
        %v1801 = vunpack.c.l.b16 %v764
        %v1802 = vunpack.c.h.b16 %v764
        %v1803 = vunpack.c.l.b16 %v765
        %v1804 = vunpack.c.h.b16 %v765
        %v1805 = vunpack.c.l.b16 %v766
        %v1806 = vunpack.c.h.b16 %v766
        %v1807 = vunpack.c.l.b16 %v767
        %v1808 = vunpack.c.h.b16 %v767
        %v1809 = vunpack.c.l.b16 %v768
        %v1810 = vunpack.c.h.b16 %v768
        %v1811 = vunpack.c.l.b16 %v769
        %v1812 = vunpack.c.h.b16 %v769
        %v1813 = vunpack.c.l.b16 %v770
        %v1814 = vunpack.c.h.b16 %v770
        %v1815 = vunpack.c.l.b16 %v771
        %v1816 = vunpack.c.h.b16 %v771
        %v1817 = vunpack.c.l.b16 %v772
        %v1818 = vunpack.c.h.b16 %v772
        %v1819 = vunpack.c.l.b16 %v773
        %v1820 = vunpack.c.h.b16 %v773
        %v1821 = vunpack.c.l.b16 %v774
        %v1822 = vunpack.c.h.b16 %v774
        %v1823 = vunpack.c.l.b16 %v775
        %v1824 = vunpack.c.h.b16 %v775
        %v1825 = vunpack.c.l.b16 %v776
        %v1826 = vunpack.c.h.b16 %v776
        %v1827 = vunpack.c.l.b16 %v777
        %v1828 = vunpack.c.h.b16 %v777
        %v1829 = vunpack.c.l.b16 %v778
        %v1830 = vunpack.c.h.b16 %v778
        %v1831 = vunpack.c.l.b16 %v779
        %v1832 = vunpack.c.h.b16 %v779
        %v1833 = vunpack.c.l.b16 %v780
        %v1834 = vunpack.c.h.b16 %v780
        %v1835 = vunpack.c.l.b16 %v781
        %v1836 = vunpack.c.h.b16 %v781
        %v1837 = vunpack.c.l.b16 %v782
        %v1838 = vunpack.c.h.b16 %v782
        %v1839 = vunpack.c.l.b16 %v783
        %v1840 = vunpack.c.h.b16 %v783
        %v1841 = vunpack.c.l.b16 %v784
        %v1842 = vunpack.c.h.b16 %v784
        %v1843 = vunpack.c.l.b16 %v785
        %v1844 = vunpack.c.h.b16 %v785
        %v1845 = vunpack.c.l.b16 %v786
        %v1846 = vunpack.c.h.b16 %v786
        %v1847 = vunpack.c.l.b16 %v787
        %v1848 = vunpack.c.h.b16 %v787
        %v1849 = vunpack.c.l.b16 %v788
        %v1850 = vunpack.c.h.b16 %v788
        %v1851 = vunpack.c.l.b16 %v789
        %v1852 = vunpack.c.h.b16 %v789
        %v1853 = vunpack.c.l.b16 %v790
        %v1854 = vunpack.c.h.b16 %v790
        %v1855 = vunpack.c.l.b16 %v791
        %v1856 = vunpack.c.h.b16 %v791
        %v1857 = vunpack.c.l.b16 %v792
        %v1858 = vunpack.c.h.b16 %v792
        %v1859 = vunpack.c.l.b16 %v793
        %v1860 = vunpack.c.h.b16 %v793
        %v1861 = vunpack.c.l.b16 %v794
        %v1862 = vunpack.c.h.b16 %v794
        %v1863 = vunpack.c.l.b16 %v795
        %v1864 = vunpack.c.h.b16 %v795
        %v1865 = vunpack.c.l.b16 %v796
        %v1866 = vunpack.c.h.b16 %v796
        %v1867 = vunpack.c.l.b16 %v797
        %v1868 = vunpack.c.h.b16 %v797
        %v1869 = vunpack.c.l.b16 %v798
        %v1870 = vunpack.c.h.b16 %v798
        %v1871 = vunpack.c.l.b16 %v799
        %v1872 = vunpack.c.h.b16 %v799
        %v1873 = vunpack.c.l.b16 %v800
        %v1874 = vunpack.c.h.b16 %v800
        %v1875 = vunpack.c.l.b16 %v801
        %v1876 = vunpack.c.h.b16 %v801
        %v1877 = vunpack.c.l.b16 %v802
        %v1878 = vunpack.c.h.b16 %v802
        %v1879 = vunpack.c.l.b16 %v803
        %v1880 = vunpack.c.h.b16 %v803
        %v1881 = vunpack.c.l.b16 %v804
        %v1882 = vunpack.c.h.b16 %v804
        %v1883 = vunpack.c.l.b16 %v805
        %v1884 = vunpack.c.h.b16 %v805
        %v1885 = vunpack.c.l.b16 %v806
        %v1886 = vunpack.c.h.b16 %v806
        %v1887 = vunpack.c.l.b16 %v807
        %v1888 = vunpack.c.h.b16 %v807
        %v1889 = vunpack.c.l.b16 %v808
        %v1890 = vunpack.c.h.b16 %v808
        %v1891 = vunpack.c.l.b16 %v809
        %v1892 = vunpack.c.h.b16 %v809
        %v1893 = vunpack.c.l.b16 %v810
        %v1894 = vunpack.c.h.b16 %v810
        %v1895 = vunpack.c.l.b16 %v811
        %v1896 = vunpack.c.h.b16 %v811
        %v1897 = vunpack.c.l.b16 %v812
        %v1898 = vunpack.c.h.b16 %v812
        %v1899 = vunpack.c.l.b16 %v813
        %v1900 = vunpack.c.h.b16 %v813
        %v1901 = vunpack.c.l.b16 %v814
        %v1902 = vunpack.c.h.b16 %v814
        %v1903 = vunpack.c.l.b16 %v815
        %v1904 = vunpack.c.h.b16 %v815
        %v1905 = vunpack.c.l.b16 %v816
        %v1906 = vunpack.c.h.b16 %v816
        %v1907 = vunpack.c.l.b16 %v817
        %v1908 = vunpack.c.h.b16 %v817
        %v1909 = vunpack.c.l.b16 %v818
        %v1910 = vunpack.c.h.b16 %v818
        %v1911 = vunpack.c.l.b16 %v819
        %v1912 = vunpack.c.h.b16 %v819
        %v1913 = vunpack.c.l.b16 %v820
        %v1914 = vunpack.c.h.b16 %v820
        %v1915 = vunpack.c.l.b16 %v821
        %v1916 = vunpack.c.h.b16 %v821
        %v1917 = vunpack.c.l.b16 %v822
        %v1918 = vunpack.c.h.b16 %v822
        %v1919 = vunpack.c.l.b16 %v823
        %v1920 = vunpack.c.h.b16 %v823
        %v1921 = vunpack.c.l.b16 %v824
        %v1922 = vunpack.c.h.b16 %v824
        %v1923 = vunpack.c.l.b16 %v825
        %v1924 = vunpack.c.h.b16 %v825
        %v1925 = vunpack.c.l.b16 %v826
        %v1926 = vunpack.c.h.b16 %v826
        %v1927 = vunpack.c.l.b16 %v827
        %v1928 = vunpack.c.h.b16 %v827
        %v1929 = vunpack.c.l.b16 %v828
        %v1930 = vunpack.c.h.b16 %v828
        %v1931 = vunpack.c.l.b16 %v829
        %v1932 = vunpack.c.h.b16 %v829
        %v1933 = vunpack.c.l.b16 %v830
        %v1934 = vunpack.c.h.b16 %v830
        %v1935 = vunpack.c.l.b16 %v831
        %v1936 = vunpack.c.h.b16 %v831
        %v1937 = vunpack.c.l.b16 %v832
        %v1938 = vunpack.c.h.b16 %v832
        %v1939 = vunpack.c.l.b16 %v833
        %v1940 = vunpack.c.h.b16 %v833
        %v1941 = vunpack.c.l.b16 %v834
        %v1942 = vunpack.c.h.b16 %v834
        %v1943 = vunpack.c.l.b16 %v835
        %v1944 = vunpack.c.h.b16 %v835
        %v1945 = vunpack.c.l.b16 %v836
        %v1946 = vunpack.c.h.b16 %v836
        %v1947 = vunpack.c.l.b16 %v837
        %v1948 = vunpack.c.h.b16 %v837
        %v1949 = vunpack.c.l.b16 %v838
        %v1950 = vunpack.c.h.b16 %v838
        %v1951 = vunpack.c.l.b16 %v839
        %v1952 = vunpack.c.h.b16 %v839
        %v1953 = vunpack.c.l.b16 %v840
        %v1954 = vunpack.c.h.b16 %v840
        %v1955 = vunpack.c.l.b16 %v841
        %v1956 = vunpack.c.h.b16 %v841
        %v1957 = vunpack.c.l.b16 %v842
        %v1958 = vunpack.c.h.b16 %v842
        %v1959 = vunpack.c.l.b16 %v843
        %v1960 = vunpack.c.h.b16 %v843
        %v1961 = vunpack.c.l.b16 %v844
        %v1962 = vunpack.c.h.b16 %v844
        %v1963 = vunpack.c.l.b16 %v845
        %v1964 = vunpack.c.h.b16 %v845
        %v1965 = vunpack.c.l.b16 %v846
        %v1966 = vunpack.c.h.b16 %v846
        %v1967 = vunpack.c.l.b16 %v847
        %v1968 = vunpack.c.h.b16 %v847
        %v1969 = vunpack.c.l.b16 %v848
        %v1970 = vunpack.c.h.b16 %v848
        %v1971 = vunpack.c.l.b16 %v849
        %v1972 = vunpack.c.h.b16 %v849
        %v1973 = vunpack.c.l.b16 %v850
        %v1974 = vunpack.c.h.b16 %v850
        %v1975 = vunpack.c.l.b16 %v851
        %v1976 = vunpack.c.h.b16 %v851
        %v1977 = vunpack.c.l.b16 %v852
        %v1978 = vunpack.c.h.b16 %v852
        %v1979 = vunpack.c.l.b16 %v853
        %v1980 = vunpack.c.h.b16 %v853
        %v1981 = vunpack.c.l.b16 %v854
        %v1982 = vunpack.c.h.b16 %v854
        %v1983 = vunpack.c.l.b16 %v855
        %v1984 = vunpack.c.h.b16 %v855
        %v1985 = vunpack.c.l.b16 %v856
        %v1986 = vunpack.c.h.b16 %v856
        %v1987 = vunpack.c.l.b16 %v857
        %v1988 = vunpack.c.h.b16 %v857
        %v1989 = vunpack.c.l.b16 %v858
        %v1990 = vunpack.c.h.b16 %v858
        %v1991 = vunpack.c.l.b16 %v859
        %v1992 = vunpack.c.h.b16 %v859
        %v1993 = vunpack.c.l.b16 %v860
        %v1994 = vunpack.c.h.b16 %v860
        %v1995 = vunpack.c.l.b16 %v861
        %v1996 = vunpack.c.h.b16 %v861
        %v1997 = vunpack.c.l.b16 %v862
        %v1998 = vunpack.c.h.b16 %v862
        %v1999 = vunpack.c.l.b16 %v863
        %v2000 = vunpack.c.h.b16 %v863
        %v2001 = vunpack.c.l.b16 %v864
        %v2002 = vunpack.c.h.b16 %v864
        %v2003 = vunpack.c.l.b16 %v865
        %v2004 = vunpack.c.h.b16 %v865
        %v2005 = vunpack.c.l.b16 %v866
        %v2006 = vunpack.c.h.b16 %v866
        %v2007 = vpack.c.b16 %v1447, %v1367
        %v2008 = vpack.c.b16 %v1448, %v1368
        %v2009 = vpack.c.b16 %v1449, %v1369
        %v2010 = vpack.c.b16 %v1450, %v1370
        %v2011 = vpack.c.b16 %v1451, %v1371
        %v2012 = vpack.c.b16 %v1452, %v1372
        %v2013 = vpack.c.b16 %v1453, %v1373
        %v2014 = vpack.c.b16 %v1454, %v1374
        %v2015 = vpack.c.b16 %v1455, %v1375
        %v2016 = vpack.c.b16 %v1456, %v1376
        %v2017 = vpack.c.b16 %v1457, %v1377
        %v2018 = vpack.c.b16 %v1458, %v1378
        %v2019 = vpack.c.b16 %v1459, %v1379
        %v2020 = vpack.c.b16 %v1460, %v1380
        %v2021 = vpack.c.b16 %v1461, %v1381
        %v2022 = vpack.c.b16 %v1462, %v1382
        %v2023 = vpack.c.b16 %v1463, %v1383
        %v2024 = vpack.c.b16 %v1464, %v1384
        %v2025 = vpack.c.b16 %v1465, %v1385
        %v2026 = vpack.c.b16 %v1466, %v1386
        %v2027 = vpack.c.b16 %v1467, %v1387
        %v2028 = vpack.c.b16 %v1468, %v1388
        %v2029 = vpack.c.b16 %v1469, %v1389
        %v2030 = vpack.c.b16 %v1470, %v1390
        %v2031 = vpack.c.b16 %v1471, %v1391
        %v2032 = vpack.c.b16 %v1472, %v1392
        %v2033 = vpack.c.b16 %v1473, %v1393
        %v2034 = vpack.c.b16 %v1474, %v1394
        %v2035 = vpack.c.b16 %v1475, %v1395
        %v2036 = vpack.c.b16 %v1476, %v1396
        %v2037 = vpack.c.b16 %v1477, %v1397
        %v2038 = vpack.c.b16 %v1478, %v1398
        %v2039 = vpack.c.b16 %v1479, %v1399
        %v2040 = vpack.c.b16 %v1480, %v1400
        %v2041 = vpack.c.b16 %v1481, %v1401
        %v2042 = vpack.c.b16 %v1482, %v1402
        %v2043 = vpack.c.b16 %v1483, %v1403
        %v2044 = vpack.c.b16 %v1484, %v1404
        %v2045 = vpack.c.b16 %v1485, %v1405
        %v2046 = vpack.c.b16 %v1486, %v1406
        %v2047 = vpack.c.b16 %v1487, %v1407
        %v2048 = vpack.c.b16 %v1488, %v1408
        %v2049 = vpack.c.b16 %v1489, %v1409
        %v2050 = vpack.c.b16 %v1490, %v1410
        %v2051 = vpack.c.b16 %v1491, %v1411
        %v2052 = vpack.c.b16 %v1492, %v1412
        %v2053 = vpack.c.b16 %v1493, %v1413
        %v2054 = vpack.c.b16 %v1494, %v1414
        %v2055 = vpack.c.b16 %v1495, %v1415
        %v2056 = vpack.c.b16 %v1496, %v1416
        %v2057 = vpack.c.b16 %v1497, %v1417
        %v2058 = vpack.c.b16 %v1498, %v1418
        %v2059 = vpack.c.b16 %v1499, %v1419
        %v2060 = vpack.c.b16 %v1500, %v1420
        %v2061 = vpack.c.b16 %v1501, %v1421
        %v2062 = vpack.c.b16 %v1502, %v1422
        %v2063 = vpack.c.b16 %v1503, %v1423
        %v2064 = vpack.c.b16 %v1504, %v1424
        %v2065 = vpack.c.b16 %v1505, %v1425
        %v2066 = vpack.c.b16 %v1506, %v1426
        %v2067 = vpack.c.b16 %v1507, %v1427
        %v2068 = vpack.c.b16 %v1508, %v1428
        %v2069 = vpack.c.b16 %v1509, %v1429
        %v2070 = vpack.c.b16 %v1510, %v1430
        %v2071 = vpack.c.b16 %v1511, %v1431
        %v2072 = vpack.c.b16 %v1512, %v1432
        %v2073 = vpack.c.b16 %v1513, %v1433
        %v2074 = vpack.c.b16 %v1514, %v1434
        %v2075 = vpack.c.b16 %v1515, %v1435
        %v2076 = vpack.c.b16 %v1516, %v1436
        %v2077 = vpack.c.b16 %v1517, %v1437
        %v2078 = vpack.c.b16 %v1518, %v1438
        %v2079 = vpack.c.b16 %v1519, %v1439
        %v2080 = vpack.c.b16 %v1520, %v1440
        %v2081 = vpack.c.b16 %v1521, %v1441
        %v2082 = vpack.c.b16 %v1522, %v1442
        %v2083 = vpack.c.b16 %v1523, %v1443
        %v2084 = vpack.c.b16 %v1524, %v1444
        %v2085 = vpack.c.b16 %v1525, %v1445
        %v2086 = vpack.c.b16 %v1526, %v1446
        %v2087 = vpack.c.b16 %v1607, %v1527
        %v2088 = vpack.c.b16 %v1608, %v1528
        %v2089 = vpack.c.b16 %v1609, %v1529
        %v2090 = vpack.c.b16 %v1610, %v1530
        %v2091 = vpack.c.b16 %v1611, %v1531
        %v2092 = vpack.c.b16 %v1612, %v1532
        %v2093 = vpack.c.b16 %v1613, %v1533
        %v2094 = vpack.c.b16 %v1614, %v1534
        %v2095 = vpack.c.b16 %v1615, %v1535
        %v2096 = vpack.c.b16 %v1616, %v1536
        %v2097 = vpack.c.b16 %v1617, %v1537
        %v2098 = vpack.c.b16 %v1618, %v1538
        %v2099 = vpack.c.b16 %v1619, %v1539
        %v2100 = vpack.c.b16 %v1620, %v1540
        %v2101 = vpack.c.b16 %v1621, %v1541
        %v2102 = vpack.c.b16 %v1622, %v1542
        %v2103 = vpack.c.b16 %v1623, %v1543
        %v2104 = vpack.c.b16 %v1624, %v1544
        %v2105 = vpack.c.b16 %v1625, %v1545
        %v2106 = vpack.c.b16 %v1626, %v1546
        %v2107 = vpack.c.b16 %v1627, %v1547
        %v2108 = vpack.c.b16 %v1628, %v1548
        %v2109 = vpack.c.b16 %v1629, %v1549
        %v2110 = vpack.c.b16 %v1630, %v1550
        %v2111 = vpack.c.b16 %v1631, %v1551
        %v2112 = vpack.c.b16 %v1632, %v1552
        %v2113 = vpack.c.b16 %v1633, %v1553
        %v2114 = vpack.c.b16 %v1634, %v1554
        %v2115 = vpack.c.b16 %v1635, %v1555
        %v2116 = vpack.c.b16 %v1636, %v1556
        %v2117 = vpack.c.b16 %v1637, %v1557
        %v2118 = vpack.c.b16 %v1638, %v1558
        %v2119 = vpack.c.b16 %v1639, %v1559
        %v2120 = vpack.c.b16 %v1640, %v1560
        %v2121 = vpack.c.b16 %v1641, %v1561
        %v2122 = vpack.c.b16 %v1642, %v1562
        %v2123 = vpack.c.b16 %v1643, %v1563
        %v2124 = vpack.c.b16 %v1644, %v1564
        %v2125 = vpack.c.b16 %v1645, %v1565
        %v2126 = vpack.c.b16 %v1646, %v1566
        %v2127 = vpack.c.b16 %v1647, %v1567
        %v2128 = vpack.c.b16 %v1648, %v1568
        %v2129 = vpack.c.b16 %v1649, %v1569
        %v2130 = vpack.c.b16 %v1650, %v1570
        %v2131 = vpack.c.b16 %v1651, %v1571
        %v2132 = vpack.c.b16 %v1652, %v1572
        %v2133 = vpack.c.b16 %v1653, %v1573
        %v2134 = vpack.c.b16 %v1654, %v1574
        %v2135 = vpack.c.b16 %v1655, %v1575
        %v2136 = vpack.c.b16 %v1656, %v1576
        %v2137 = vpack.c.b16 %v1657, %v1577
        %v2138 = vpack.c.b16 %v1658, %v1578
        %v2139 = vpack.c.b16 %v1659, %v1579
        %v2140 = vpack.c.b16 %v1660, %v1580
        %v2141 = vpack.c.b16 %v1661, %v1581
        %v2142 = vpack.c.b16 %v1662, %v1582
        %v2143 = vpack.c.b16 %v1663, %v1583
        %v2144 = vpack.c.b16 %v1664, %v1584
        %v2145 = vpack.c.b16 %v1665, %v1585
        %v2146 = vpack.c.b16 %v1666, %v1586
        %v2147 = vpack.c.b16 %v1667, %v1587
        %v2148 = vpack.c.b16 %v1668, %v1588
        %v2149 = vpack.c.b16 %v1669, %v1589
        %v2150 = vpack.c.b16 %v1670, %v1590
        %v2151 = vpack.c.b16 %v1671, %v1591
        %v2152 = vpack.c.b16 %v1672, %v1592
        %v2153 = vpack.c.b16 %v1673, %v1593
        %v2154 = vpack.c.b16 %v1674, %v1594
        %v2155 = vpack.c.b16 %v1675, %v1595
        %v2156 = vpack.c.b16 %v1676, %v1596
        %v2157 = vpack.c.b16 %v1677, %v1597
        %v2158 = vpack.c.b16 %v1678, %v1598
        %v2159 = vpack.c.b16 %v1679, %v1599
        %v2160 = vpack.c.b16 %v1680, %v1600
        %v2161 = vpack.c.b16 %v1681, %v1601
        %v2162 = vpack.c.b16 %v1682, %v1602
        %v2163 = vpack.c.b16 %v1683, %v1603
        %v2164 = vpack.c.b16 %v1684, %v1604
        %v2165 = vpack.c.b16 %v1685, %v1605
        %v2166 = vpack.c.b16 %v1686, %v1606
        %v2167 = vpack.c.b16 %v1767, %v1687
        %v2168 = vpack.c.b16 %v1768, %v1688
        %v2169 = vpack.c.b16 %v1769, %v1689
        %v2170 = vpack.c.b16 %v1770, %v1690
        %v2171 = vpack.c.b16 %v1771, %v1691
        %v2172 = vpack.c.b16 %v1772, %v1692
        %v2173 = vpack.c.b16 %v1773, %v1693
        %v2174 = vpack.c.b16 %v1774, %v1694
        %v2175 = vpack.c.b16 %v1775, %v1695
        %v2176 = vpack.c.b16 %v1776, %v1696
        %v2177 = vpack.c.b16 %v1777, %v1697
        %v2178 = vpack.c.b16 %v1778, %v1698
        %v2179 = vpack.c.b16 %v1779, %v1699
        %v2180 = vpack.c.b16 %v1780, %v1700
        %v2181 = vpack.c.b16 %v1781, %v1701
        %v2182 = vpack.c.b16 %v1782, %v1702
        %v2183 = vpack.c.b16 %v1783, %v1703
        %v2184 = vpack.c.b16 %v1784, %v1704
        %v2185 = vpack.c.b16 %v1785, %v1705
        %v2186 = vpack.c.b16 %v1786, %v1706
        %v2187 = vpack.c.b16 %v1787, %v1707
        %v2188 = vpack.c.b16 %v1788, %v1708
        %v2189 = vpack.c.b16 %v1789, %v1709
        %v2190 = vpack.c.b16 %v1790, %v1710
        %v2191 = vpack.c.b16 %v1791, %v1711
        %v2192 = vpack.c.b16 %v1792, %v1712
        %v2193 = vpack.c.b16 %v1793, %v1713
        %v2194 = vpack.c.b16 %v1794, %v1714
        %v2195 = vpack.c.b16 %v1795, %v1715
        %v2196 = vpack.c.b16 %v1796, %v1716
        %v2197 = vpack.c.b16 %v1797, %v1717
        %v2198 = vpack.c.b16 %v1798, %v1718
        %v2199 = vpack.c.b16 %v1799, %v1719
        %v2200 = vpack.c.b16 %v1800, %v1720
        %v2201 = vpack.c.b16 %v1801, %v1721
        %v2202 = vpack.c.b16 %v1802, %v1722
        %v2203 = vpack.c.b16 %v1803, %v1723
        %v2204 = vpack.c.b16 %v1804, %v1724
        %v2205 = vpack.c.b16 %v1805, %v1725
        %v2206 = vpack.c.b16 %v1806, %v1726
        %v2207 = vpack.c.b16 %v1807, %v1727
        %v2208 = vpack.c.b16 %v1808, %v1728
        %v2209 = vpack.c.b16 %v1809, %v1729
        %v2210 = vpack.c.b16 %v1810, %v1730
        %v2211 = vpack.c.b16 %v1811, %v1731
        %v2212 = vpack.c.b16 %v1812, %v1732
        %v2213 = vpack.c.b16 %v1813, %v1733
        %v2214 = vpack.c.b16 %v1814, %v1734
        %v2215 = vpack.c.b16 %v1815, %v1735
        %v2216 = vpack.c.b16 %v1816, %v1736
        %v2217 = vpack.c.b16 %v1817, %v1737
        %v2218 = vpack.c.b16 %v1818, %v1738
        %v2219 = vpack.c.b16 %v1819, %v1739
        %v2220 = vpack.c.b16 %v1820, %v1740
        %v2221 = vpack.c.b16 %v1821, %v1741
        %v2222 = vpack.c.b16 %v1822, %v1742
        %v2223 = vpack.c.b16 %v1823, %v1743
        %v2224 = vpack.c.b16 %v1824, %v1744
        %v2225 = vpack.c.b16 %v1825, %v1745
        %v2226 = vpack.c.b16 %v1826, %v1746
        %v2227 = vpack.c.b16 %v1827, %v1747
        %v2228 = vpack.c.b16 %v1828, %v1748
        %v2229 = vpack.c.b16 %v1829, %v1749
        %v2230 = vpack.c.b16 %v1830, %v1750
        %v2231 = vpack.c.b16 %v1831, %v1751
        %v2232 = vpack.c.b16 %v1832, %v1752
        %v2233 = vpack.c.b16 %v1833, %v1753
        %v2234 = vpack.c.b16 %v1834, %v1754
        %v2235 = vpack.c.b16 %v1835, %v1755
        %v2236 = vpack.c.b16 %v1836, %v1756
        %v2237 = vpack.c.b16 %v1837, %v1757
        %v2238 = vpack.c.b16 %v1838, %v1758
        %v2239 = vpack.c.b16 %v1839, %v1759
        %v2240 = vpack.c.b16 %v1840, %v1760
        %v2241 = vpack.c.b16 %v1841, %v1761
        %v2242 = vpack.c.b16 %v1842, %v1762
        %v2243 = vpack.c.b16 %v1843, %v1763
        %v2244 = vpack.c.b16 %v1844, %v1764
        %v2245 = vpack.c.b16 %v1845, %v1765
        %v2246 = vpack.c.b16 %v1846, %v1766
        %v2247 = vpack.c.b16 %v1927, %v1847
        %v2248 = vpack.c.b16 %v1928, %v1848
        %v2249 = vpack.c.b16 %v1929, %v1849
        %v2250 = vpack.c.b16 %v1930, %v1850
        %v2251 = vpack.c.b16 %v1931, %v1851
        %v2252 = vpack.c.b16 %v1932, %v1852
        %v2253 = vpack.c.b16 %v1933, %v1853
        %v2254 = vpack.c.b16 %v1934, %v1854
        %v2255 = vpack.c.b16 %v1935, %v1855
        %v2256 = vpack.c.b16 %v1936, %v1856
        %v2257 = vpack.c.b16 %v1937, %v1857
        %v2258 = vpack.c.b16 %v1938, %v1858
        %v2259 = vpack.c.b16 %v1939, %v1859
        %v2260 = vpack.c.b16 %v1940, %v1860
        %v2261 = vpack.c.b16 %v1941, %v1861
        %v2262 = vpack.c.b16 %v1942, %v1862
        %v2263 = vpack.c.b16 %v1943, %v1863
        %v2264 = vpack.c.b16 %v1944, %v1864
        %v2265 = vpack.c.b16 %v1945, %v1865
        %v2266 = vpack.c.b16 %v1946, %v1866
        %v2267 = vpack.c.b16 %v1947, %v1867
        %v2268 = vpack.c.b16 %v1948, %v1868
        %v2269 = vpack.c.b16 %v1949, %v1869
        %v2270 = vpack.c.b16 %v1950, %v1870
        %v2271 = vpack.c.b16 %v1951, %v1871
        %v2272 = vpack.c.b16 %v1952, %v1872
        %v2273 = vpack.c.b16 %v1953, %v1873
        %v2274 = vpack.c.b16 %v1954, %v1874
        %v2275 = vpack.c.b16 %v1955, %v1875
        %v2276 = vpack.c.b16 %v1956, %v1876
        %v2277 = vpack.c.b16 %v1957, %v1877
        %v2278 = vpack.c.b16 %v1958, %v1878
        %v2279 = vpack.c.b16 %v1959, %v1879
        %v2280 = vpack.c.b16 %v1960, %v1880
        %v2281 = vpack.c.b16 %v1961, %v1881
        %v2282 = vpack.c.b16 %v1962, %v1882
        %v2283 = vpack.c.b16 %v1963, %v1883
        %v2284 = vpack.c.b16 %v1964, %v1884
        %v2285 = vpack.c.b16 %v1965, %v1885
        %v2286 = vpack.c.b16 %v1966, %v1886
        %v2287 = vpack.c.b16 %v1967, %v1887
        %v2288 = vpack.c.b16 %v1968, %v1888
        %v2289 = vpack.c.b16 %v1969, %v1889
        %v2290 = vpack.c.b16 %v1970, %v1890
        %v2291 = vpack.c.b16 %v1971, %v1891
        %v2292 = vpack.c.b16 %v1972, %v1892
        %v2293 = vpack.c.b16 %v1973, %v1893
        %v2294 = vpack.c.b16 %v1974, %v1894
        %v2295 = vpack.c.b16 %v1975, %v1895
        %v2296 = vpack.c.b16 %v1976, %v1896
        %v2297 = vpack.c.b16 %v1977, %v1897
        %v2298 = vpack.c.b16 %v1978, %v1898
        %v2299 = vpack.c.b16 %v1979, %v1899
        %v2300 = vpack.c.b16 %v1980, %v1900
        %v2301 = vpack.c.b16 %v1981, %v1901
        %v2302 = vpack.c.b16 %v1982, %v1902
        %v2303 = vpack.c.b16 %v1983, %v1903
        %v2304 = vpack.c.b16 %v1984, %v1904
        %v2305 = vpack.c.b16 %v1985, %v1905
        %v2306 = vpack.c.b16 %v1986, %v1906
        %v2307 = vpack.c.b16 %v1987, %v1907
        %v2308 = vpack.c.b16 %v1988, %v1908
        %v2309 = vpack.c.b16 %v1989, %v1909
        %v2310 = vpack.c.b16 %v1990, %v1910
        %v2311 = vpack.c.b16 %v1991, %v1911
        %v2312 = vpack.c.b16 %v1992, %v1912
        %v2313 = vpack.c.b16 %v1993, %v1913
        %v2314 = vpack.c.b16 %v1994, %v1914
        %v2315 = vpack.c.b16 %v1995, %v1915
        %v2316 = vpack.c.b16 %v1996, %v1916
        %v2317 = vpack.c.b16 %v1997, %v1917
        %v2318 = vpack.c.b16 %v1998, %v1918
        %v2319 = vpack.c.b16 %v1999, %v1919
        %v2320 = vpack.c.b16 %v2000, %v1920
        %v2321 = vpack.c.b16 %v2001, %v1921
        %v2322 = vpack.c.b16 %v2002, %v1922
        %v2323 = vpack.c.b16 %v2003, %v1923
        %v2324 = vpack.c.b16 %v2004, %v1924
        %v2325 = vpack.c.b16 %v2005, %v1925
        %v2326 = vpack.c.b16 %v2006, %v1926
        %vm2647 = vcmask 523264
        %v2649 = vsel %vm2647, %v546, 0
        %2651 = vmatpush.bf16.msra.mxu0 0
        %2652 = vmatpush.bf16.msra.mxu0 0
        %2653 = vmatpush.bf16.msra.mxu0 0
        %2654 = vmatpush.bf16.msra.mxu0 0
        %2655 = vmatpush.bf16.msra.mxu0 %v2247
        %2656 = vmatpush.bf16.msra.mxu0 %v2167
        %2657 = vmatpush.bf16.msra.mxu0 %v2087
        %2658 = vmatpush.bf16.msra.mxu0 %v2007
        %2659 = vmatmul.bf16.gmra.mxu0 %v2649
        %v2660 = vpop.f32.mrf.mxu0
        %v2661 = vadd.f32 %v887, %v2660
        %v2662 = vpop.f32.mrf.mxu0
        %2663 = vdwg.mxu0
        %2664 = vmatpush.bf16.msra.mxu0 0
        %2665 = vmatpush.bf16.msra.mxu0 0
        %2666 = vmatpush.bf16.msra.mxu0 0
        %2667 = vmatpush.bf16.msra.mxu0 0
        %2668 = vmatpush.bf16.msra.mxu0 %v2248
        %2669 = vmatpush.bf16.msra.mxu0 %v2168
        %2670 = vmatpush.bf16.msra.mxu0 %v2088
        %2671 = vmatpush.bf16.msra.mxu0 %v2008
        %2672 = vmatmul.bf16.gmra.mxu0 %v2649
        %v2673 = vpop.f32.mrf.mxu0
        %v2674 = vadd.f32 %v888, %v2673
        %v2675 = vpop.f32.mrf.mxu0
        %2676 = vdwg.mxu0
        %2677 = vmatpush.bf16.msra.mxu0 0
        %2678 = vmatpush.bf16.msra.mxu0 0
        %2679 = vmatpush.bf16.msra.mxu0 0
        %2680 = vmatpush.bf16.msra.mxu0 0
        %2681 = vmatpush.bf16.msra.mxu0 %v2249
        %2682 = vmatpush.bf16.msra.mxu0 %v2169
        %2683 = vmatpush.bf16.msra.mxu0 %v2089
        %2684 = vmatpush.bf16.msra.mxu0 %v2009
        %2685 = vmatmul.bf16.gmra.mxu0 %v2649
        %v2686 = vpop.f32.mrf.mxu0
        %v2687 = vadd.f32 %v889, %v2686
        %v2688 = vpop.f32.mrf.mxu0
        %2689 = vdwg.mxu0
        %2690 = vmatpush.bf16.msra.mxu0 0
        %2691 = vmatpush.bf16.msra.mxu0 0
        %2692 = vmatpush.bf16.msra.mxu0 0
        %2693 = vmatpush.bf16.msra.mxu0 0
        %2694 = vmatpush.bf16.msra.mxu0 %v2250
        %2695 = vmatpush.bf16.msra.mxu0 %v2170
        %2696 = vmatpush.bf16.msra.mxu0 %v2090
        %2697 = vmatpush.bf16.msra.mxu0 %v2010
        %2698 = vmatmul.bf16.gmra.mxu0 %v2649
        %v2699 = vpop.f32.mrf.mxu0
        %v2700 = vadd.f32 %v890, %v2699
        %v2701 = vpop.f32.mrf.mxu0
        %2702 = vdwg.mxu0
        %2703 = vmatpush.bf16.msra.mxu0 0
        %2704 = vmatpush.bf16.msra.mxu0 0
        %2705 = vmatpush.bf16.msra.mxu0 0
        %2706 = vmatpush.bf16.msra.mxu0 0
        %2707 = vmatpush.bf16.msra.mxu0 %v2251
        %2708 = vmatpush.bf16.msra.mxu0 %v2171
        %2709 = vmatpush.bf16.msra.mxu0 %v2091
        %2710 = vmatpush.bf16.msra.mxu0 %v2011
        %2711 = vmatmul.bf16.gmra.mxu0 %v2649
        %v2712 = vpop.f32.mrf.mxu0
        %v2713 = vadd.f32 %v891, %v2712
        %v2714 = vpop.f32.mrf.mxu0
        %2715 = vdwg.mxu0
        %2716 = vmatpush.bf16.msra.mxu0 0
        %2717 = vmatpush.bf16.msra.mxu0 0
        %2718 = vmatpush.bf16.msra.mxu0 0
        %2719 = vmatpush.bf16.msra.mxu0 0
        %2720 = vmatpush.bf16.msra.mxu0 %v2252
        %2721 = vmatpush.bf16.msra.mxu0 %v2172
        %2722 = vmatpush.bf16.msra.mxu0 %v2092
        %2723 = vmatpush.bf16.msra.mxu0 %v2012
        %2724 = vmatmul.bf16.gmra.mxu0 %v2649
        %v2725 = vpop.f32.mrf.mxu0
        %v2726 = vadd.f32 %v892, %v2725
        %v2727 = vpop.f32.mrf.mxu0
        %2728 = vdwg.mxu0
        %2729 = vmatpush.bf16.msra.mxu0 0
        %2730 = vmatpush.bf16.msra.mxu0 0
        %2731 = vmatpush.bf16.msra.mxu0 0
        %2732 = vmatpush.bf16.msra.mxu0 0
        %2733 = vmatpush.bf16.msra.mxu0 %v2253
        %2734 = vmatpush.bf16.msra.mxu0 %v2173
        %2735 = vmatpush.bf16.msra.mxu0 %v2093
        %2736 = vmatpush.bf16.msra.mxu0 %v2013
        %2737 = vmatmul.bf16.gmra.mxu0 %v2649
        %v2738 = vpop.f32.mrf.mxu0
        %v2739 = vadd.f32 %v893, %v2738
        %v2740 = vpop.f32.mrf.mxu0
        %2741 = vdwg.mxu0
        %2742 = vmatpush.bf16.msra.mxu0 0
        %2743 = vmatpush.bf16.msra.mxu0 0
        %2744 = vmatpush.bf16.msra.mxu0 0
        %2745 = vmatpush.bf16.msra.mxu0 0
        %2746 = vmatpush.bf16.msra.mxu0 %v2254
        %2747 = vmatpush.bf16.msra.mxu0 %v2174
        %2748 = vmatpush.bf16.msra.mxu0 %v2094
        %2749 = vmatpush.bf16.msra.mxu0 %v2014
        %2750 = vmatmul.bf16.gmra.mxu0 %v2649
        %v2751 = vpop.f32.mrf.mxu0
        %v2752 = vadd.f32 %v894, %v2751
        %v2753 = vpop.f32.mrf.mxu0
        %2754 = vdwg.mxu0
        %2755 = vmatpush.bf16.msra.mxu0 0
        %2756 = vmatpush.bf16.msra.mxu0 0
        %2757 = vmatpush.bf16.msra.mxu0 0
        %2758 = vmatpush.bf16.msra.mxu0 0
        %2759 = vmatpush.bf16.msra.mxu0 %v2255
        %2760 = vmatpush.bf16.msra.mxu0 %v2175
        %2761 = vmatpush.bf16.msra.mxu0 %v2095
        %2762 = vmatpush.bf16.msra.mxu0 %v2015
        %2763 = vmatmul.bf16.gmra.mxu0 %v2649
        %v2764 = vpop.f32.mrf.mxu0
        %v2765 = vadd.f32 %v895, %v2764
        %v2766 = vpop.f32.mrf.mxu0
        %2767 = vdwg.mxu0
        %2768 = vmatpush.bf16.msra.mxu0 0
        %2769 = vmatpush.bf16.msra.mxu0 0
        %2770 = vmatpush.bf16.msra.mxu0 0
        %2771 = vmatpush.bf16.msra.mxu0 0
        %2772 = vmatpush.bf16.msra.mxu0 %v2256
        %2773 = vmatpush.bf16.msra.mxu0 %v2176
        %2774 = vmatpush.bf16.msra.mxu0 %v2096
        %2775 = vmatpush.bf16.msra.mxu0 %v2016
        %2776 = vmatmul.bf16.gmra.mxu0 %v2649
        %v2777 = vpop.f32.mrf.mxu0
        %v2778 = vadd.f32 %v896, %v2777
        %v2779 = vpop.f32.mrf.mxu0
        %2780 = vdwg.mxu0
        %2781 = vmatpush.bf16.msra.mxu0 0
        %2782 = vmatpush.bf16.msra.mxu0 0
        %2783 = vmatpush.bf16.msra.mxu0 0
        %2784 = vmatpush.bf16.msra.mxu0 0
        %2785 = vmatpush.bf16.msra.mxu0 %v2257
        %2786 = vmatpush.bf16.msra.mxu0 %v2177
        %2787 = vmatpush.bf16.msra.mxu0 %v2097
        %2788 = vmatpush.bf16.msra.mxu0 %v2017
        %2789 = vmatmul.bf16.gmra.mxu0 %v2649
        %v2790 = vpop.f32.mrf.mxu0
        %v2791 = vadd.f32 %v897, %v2790
        %v2792 = vpop.f32.mrf.mxu0
        %2793 = vdwg.mxu0
        %2794 = vmatpush.bf16.msra.mxu0 0
        %2795 = vmatpush.bf16.msra.mxu0 0
        %2796 = vmatpush.bf16.msra.mxu0 0
        %2797 = vmatpush.bf16.msra.mxu0 0
        %2798 = vmatpush.bf16.msra.mxu0 %v2258
        %2799 = vmatpush.bf16.msra.mxu0 %v2178
        %2800 = vmatpush.bf16.msra.mxu0 %v2098
        %2801 = vmatpush.bf16.msra.mxu0 %v2018
        %2802 = vmatmul.bf16.gmra.mxu0 %v2649
        %v2803 = vpop.f32.mrf.mxu0
        %v2804 = vadd.f32 %v898, %v2803
        %v2805 = vpop.f32.mrf.mxu0
        %2806 = vdwg.mxu0
        %2807 = vmatpush.bf16.msra.mxu0 0
        %2808 = vmatpush.bf16.msra.mxu0 0
        %2809 = vmatpush.bf16.msra.mxu0 0
        %2810 = vmatpush.bf16.msra.mxu0 0
        %2811 = vmatpush.bf16.msra.mxu0 %v2259
        %2812 = vmatpush.bf16.msra.mxu0 %v2179
        %2813 = vmatpush.bf16.msra.mxu0 %v2099
        %2814 = vmatpush.bf16.msra.mxu0 %v2019
        %2815 = vmatmul.bf16.gmra.mxu0 %v2649
        %v2816 = vpop.f32.mrf.mxu0
        %v2817 = vadd.f32 %v899, %v2816
        %v2818 = vpop.f32.mrf.mxu0
        %2819 = vdwg.mxu0
        %2820 = vmatpush.bf16.msra.mxu0 0
        %2821 = vmatpush.bf16.msra.mxu0 0
        %2822 = vmatpush.bf16.msra.mxu0 0
        %2823 = vmatpush.bf16.msra.mxu0 0
        %2824 = vmatpush.bf16.msra.mxu0 %v2260
        %2825 = vmatpush.bf16.msra.mxu0 %v2180
        %2826 = vmatpush.bf16.msra.mxu0 %v2100
        %2827 = vmatpush.bf16.msra.mxu0 %v2020
        %2828 = vmatmul.bf16.gmra.mxu0 %v2649
        %v2829 = vpop.f32.mrf.mxu0
        %v2830 = vadd.f32 %v900, %v2829
        %v2831 = vpop.f32.mrf.mxu0
        %2832 = vdwg.mxu0
        %2833 = vmatpush.bf16.msra.mxu0 0
        %2834 = vmatpush.bf16.msra.mxu0 0
        %2835 = vmatpush.bf16.msra.mxu0 0
        %2836 = vmatpush.bf16.msra.mxu0 0
        %2837 = vmatpush.bf16.msra.mxu0 %v2261
        %2838 = vmatpush.bf16.msra.mxu0 %v2181
        %2839 = vmatpush.bf16.msra.mxu0 %v2101
        %2840 = vmatpush.bf16.msra.mxu0 %v2021
        %2841 = vmatmul.bf16.gmra.mxu0 %v2649
        %v2842 = vpop.f32.mrf.mxu0
        %v2843 = vadd.f32 %v901, %v2842
        %v2844 = vpop.f32.mrf.mxu0
        %2845 = vdwg.mxu0
        %2846 = vmatpush.bf16.msra.mxu0 0
        %2847 = vmatpush.bf16.msra.mxu0 0
        %2848 = vmatpush.bf16.msra.mxu0 0
        %2849 = vmatpush.bf16.msra.mxu0 0
        %2850 = vmatpush.bf16.msra.mxu0 %v2262
        %2851 = vmatpush.bf16.msra.mxu0 %v2182
        %2852 = vmatpush.bf16.msra.mxu0 %v2102
        %2853 = vmatpush.bf16.msra.mxu0 %v2022
        %2854 = vmatmul.bf16.gmra.mxu0 %v2649
        %v2855 = vpop.f32.mrf.mxu0
        %v2856 = vadd.f32 %v902, %v2855
        %v2857 = vpop.f32.mrf.mxu0
        %2858 = vdwg.mxu0
        %2859 = vmatpush.bf16.msra.mxu0 0
        %2860 = vmatpush.bf16.msra.mxu0 0
        %2861 = vmatpush.bf16.msra.mxu0 0
        %2862 = vmatpush.bf16.msra.mxu0 0
        %2863 = vmatpush.bf16.msra.mxu0 %v2263
        %2864 = vmatpush.bf16.msra.mxu0 %v2183
        %2865 = vmatpush.bf16.msra.mxu0 %v2103
        %2866 = vmatpush.bf16.msra.mxu0 %v2023
        %2867 = vmatmul.bf16.gmra.mxu0 %v2649
        %v2868 = vpop.f32.mrf.mxu0
        %v2869 = vadd.f32 %v903, %v2868
        %v2870 = vpop.f32.mrf.mxu0
        %2871 = vdwg.mxu0
        %2872 = vmatpush.bf16.msra.mxu0 0
        %2873 = vmatpush.bf16.msra.mxu0 0
        %2874 = vmatpush.bf16.msra.mxu0 0
        %2875 = vmatpush.bf16.msra.mxu0 0
        %2876 = vmatpush.bf16.msra.mxu0 %v2264
        %2877 = vmatpush.bf16.msra.mxu0 %v2184
        %2878 = vmatpush.bf16.msra.mxu0 %v2104
        %2879 = vmatpush.bf16.msra.mxu0 %v2024
        %2880 = vmatmul.bf16.gmra.mxu0 %v2649
        %v2881 = vpop.f32.mrf.mxu0
        %v2882 = vadd.f32 %v904, %v2881
        %v2883 = vpop.f32.mrf.mxu0
        %2884 = vdwg.mxu0
        %2885 = vmatpush.bf16.msra.mxu0 0
        %2886 = vmatpush.bf16.msra.mxu0 0
        %2887 = vmatpush.bf16.msra.mxu0 0
        %2888 = vmatpush.bf16.msra.mxu0 0
        %2889 = vmatpush.bf16.msra.mxu0 %v2265
        %2890 = vmatpush.bf16.msra.mxu0 %v2185
        %2891 = vmatpush.bf16.msra.mxu0 %v2105
        %2892 = vmatpush.bf16.msra.mxu0 %v2025
        %2893 = vmatmul.bf16.gmra.mxu0 %v2649
        %v2894 = vpop.f32.mrf.mxu0
        %v2895 = vadd.f32 %v905, %v2894
        %v2896 = vpop.f32.mrf.mxu0
        %2897 = vdwg.mxu0
        %2898 = vmatpush.bf16.msra.mxu0 0
        %2899 = vmatpush.bf16.msra.mxu0 0
        %2900 = vmatpush.bf16.msra.mxu0 0
        %2901 = vmatpush.bf16.msra.mxu0 0
        %2902 = vmatpush.bf16.msra.mxu0 %v2266
        %2903 = vmatpush.bf16.msra.mxu0 %v2186
        %2904 = vmatpush.bf16.msra.mxu0 %v2106
        %2905 = vmatpush.bf16.msra.mxu0 %v2026
        %2906 = vmatmul.bf16.gmra.mxu0 %v2649
        %v2907 = vpop.f32.mrf.mxu0
        %v2908 = vadd.f32 %v906, %v2907
        %v2909 = vpop.f32.mrf.mxu0
        %2910 = vdwg.mxu0
        %2911 = vmatpush.bf16.msra.mxu0 0
        %2912 = vmatpush.bf16.msra.mxu0 0
        %2913 = vmatpush.bf16.msra.mxu0 0
        %2914 = vmatpush.bf16.msra.mxu0 0
        %2915 = vmatpush.bf16.msra.mxu0 %v2267
        %2916 = vmatpush.bf16.msra.mxu0 %v2187
        %2917 = vmatpush.bf16.msra.mxu0 %v2107
        %2918 = vmatpush.bf16.msra.mxu0 %v2027
        %2919 = vmatmul.bf16.gmra.mxu0 %v2649
        %v2920 = vpop.f32.mrf.mxu0
        %v2921 = vadd.f32 %v907, %v2920
        %v2922 = vpop.f32.mrf.mxu0
        %2923 = vdwg.mxu0
        %2924 = vmatpush.bf16.msra.mxu0 0
        %2925 = vmatpush.bf16.msra.mxu0 0
        %2926 = vmatpush.bf16.msra.mxu0 0
        %2927 = vmatpush.bf16.msra.mxu0 0
        %2928 = vmatpush.bf16.msra.mxu0 %v2268
        %2929 = vmatpush.bf16.msra.mxu0 %v2188
        %2930 = vmatpush.bf16.msra.mxu0 %v2108
        %2931 = vmatpush.bf16.msra.mxu0 %v2028
        %2932 = vmatmul.bf16.gmra.mxu0 %v2649
        %v2933 = vpop.f32.mrf.mxu0
        %v2934 = vadd.f32 %v908, %v2933
        %v2935 = vpop.f32.mrf.mxu0
        %2936 = vdwg.mxu0
        %2937 = vmatpush.bf16.msra.mxu0 0
        %2938 = vmatpush.bf16.msra.mxu0 0
        %2939 = vmatpush.bf16.msra.mxu0 0
        %2940 = vmatpush.bf16.msra.mxu0 0
        %2941 = vmatpush.bf16.msra.mxu0 %v2269
        %2942 = vmatpush.bf16.msra.mxu0 %v2189
        %2943 = vmatpush.bf16.msra.mxu0 %v2109
        %2944 = vmatpush.bf16.msra.mxu0 %v2029
        %2945 = vmatmul.bf16.gmra.mxu0 %v2649
        %v2946 = vpop.f32.mrf.mxu0
        %v2947 = vadd.f32 %v909, %v2946
        %v2948 = vpop.f32.mrf.mxu0
        %2949 = vdwg.mxu0
        %2950 = vmatpush.bf16.msra.mxu0 0
        %2951 = vmatpush.bf16.msra.mxu0 0
        %2952 = vmatpush.bf16.msra.mxu0 0
        %2953 = vmatpush.bf16.msra.mxu0 0
        %2954 = vmatpush.bf16.msra.mxu0 %v2270
        %2955 = vmatpush.bf16.msra.mxu0 %v2190
        %2956 = vmatpush.bf16.msra.mxu0 %v2110
        %2957 = vmatpush.bf16.msra.mxu0 %v2030
        %2958 = vmatmul.bf16.gmra.mxu0 %v2649
        %v2959 = vpop.f32.mrf.mxu0
        %v2960 = vadd.f32 %v910, %v2959
        %v2961 = vpop.f32.mrf.mxu0
        %2962 = vdwg.mxu0
        %2963 = vmatpush.bf16.msra.mxu0 0
        %2964 = vmatpush.bf16.msra.mxu0 0
        %2965 = vmatpush.bf16.msra.mxu0 0
        %2966 = vmatpush.bf16.msra.mxu0 0
        %2967 = vmatpush.bf16.msra.mxu0 %v2271
        %2968 = vmatpush.bf16.msra.mxu0 %v2191
        %2969 = vmatpush.bf16.msra.mxu0 %v2111
        %2970 = vmatpush.bf16.msra.mxu0 %v2031
        %2971 = vmatmul.bf16.gmra.mxu0 %v2649
        %v2972 = vpop.f32.mrf.mxu0
        %v2973 = vadd.f32 %v911, %v2972
        %v2974 = vpop.f32.mrf.mxu0
        %2975 = vdwg.mxu0
        %2976 = vmatpush.bf16.msra.mxu0 0
        %2977 = vmatpush.bf16.msra.mxu0 0
        %2978 = vmatpush.bf16.msra.mxu0 0
        %2979 = vmatpush.bf16.msra.mxu0 0
        %2980 = vmatpush.bf16.msra.mxu0 %v2272
        %2981 = vmatpush.bf16.msra.mxu0 %v2192
        %2982 = vmatpush.bf16.msra.mxu0 %v2112
        %2983 = vmatpush.bf16.msra.mxu0 %v2032
        %2984 = vmatmul.bf16.gmra.mxu0 %v2649
        %v2985 = vpop.f32.mrf.mxu0
        %v2986 = vadd.f32 %v912, %v2985
        %v2987 = vpop.f32.mrf.mxu0
        %2988 = vdwg.mxu0
        %2989 = vmatpush.bf16.msra.mxu0 0
        %2990 = vmatpush.bf16.msra.mxu0 0
        %2991 = vmatpush.bf16.msra.mxu0 0
        %2992 = vmatpush.bf16.msra.mxu0 0
        %2993 = vmatpush.bf16.msra.mxu0 %v2273
        %2994 = vmatpush.bf16.msra.mxu0 %v2193
        %2995 = vmatpush.bf16.msra.mxu0 %v2113
        %2996 = vmatpush.bf16.msra.mxu0 %v2033
        %2997 = vmatmul.bf16.gmra.mxu0 %v2649
        %v2998 = vpop.f32.mrf.mxu0
        %v2999 = vadd.f32 %v913, %v2998
        %v3000 = vpop.f32.mrf.mxu0
        %3001 = vdwg.mxu0
        %3002 = vmatpush.bf16.msra.mxu0 0
        %3003 = vmatpush.bf16.msra.mxu0 0
        %3004 = vmatpush.bf16.msra.mxu0 0
        %3005 = vmatpush.bf16.msra.mxu0 0
        %3006 = vmatpush.bf16.msra.mxu0 %v2274
        %3007 = vmatpush.bf16.msra.mxu0 %v2194
        %3008 = vmatpush.bf16.msra.mxu0 %v2114
        %3009 = vmatpush.bf16.msra.mxu0 %v2034
        %3010 = vmatmul.bf16.gmra.mxu0 %v2649
        %v3011 = vpop.f32.mrf.mxu0
        %v3012 = vadd.f32 %v914, %v3011
        %v3013 = vpop.f32.mrf.mxu0
        %3014 = vdwg.mxu0
        %3015 = vmatpush.bf16.msra.mxu0 0
        %3016 = vmatpush.bf16.msra.mxu0 0
        %3017 = vmatpush.bf16.msra.mxu0 0
        %3018 = vmatpush.bf16.msra.mxu0 0
        %3019 = vmatpush.bf16.msra.mxu0 %v2275
        %3020 = vmatpush.bf16.msra.mxu0 %v2195
        %3021 = vmatpush.bf16.msra.mxu0 %v2115
        %3022 = vmatpush.bf16.msra.mxu0 %v2035
        %3023 = vmatmul.bf16.gmra.mxu0 %v2649
        %v3024 = vpop.f32.mrf.mxu0
        %v3025 = vadd.f32 %v915, %v3024
        %v3026 = vpop.f32.mrf.mxu0
        %3027 = vdwg.mxu0
        %3028 = vmatpush.bf16.msra.mxu0 0
        %3029 = vmatpush.bf16.msra.mxu0 0
        %3030 = vmatpush.bf16.msra.mxu0 0
        %3031 = vmatpush.bf16.msra.mxu0 0
        %3032 = vmatpush.bf16.msra.mxu0 %v2276
        %3033 = vmatpush.bf16.msra.mxu0 %v2196
        %3034 = vmatpush.bf16.msra.mxu0 %v2116
        %3035 = vmatpush.bf16.msra.mxu0 %v2036
        %3036 = vmatmul.bf16.gmra.mxu0 %v2649
        %v3037 = vpop.f32.mrf.mxu0
        %v3038 = vadd.f32 %v916, %v3037
        %v3039 = vpop.f32.mrf.mxu0
        %3040 = vdwg.mxu0
        %3041 = vmatpush.bf16.msra.mxu0 0
        %3042 = vmatpush.bf16.msra.mxu0 0
        %3043 = vmatpush.bf16.msra.mxu0 0
        %3044 = vmatpush.bf16.msra.mxu0 0
        %3045 = vmatpush.bf16.msra.mxu0 %v2277
        %3046 = vmatpush.bf16.msra.mxu0 %v2197
        %3047 = vmatpush.bf16.msra.mxu0 %v2117
        %3048 = vmatpush.bf16.msra.mxu0 %v2037
        %3049 = vmatmul.bf16.gmra.mxu0 %v2649
        %v3050 = vpop.f32.mrf.mxu0
        %v3051 = vadd.f32 %v917, %v3050
        %v3052 = vpop.f32.mrf.mxu0
        %3053 = vdwg.mxu0
        %3054 = vmatpush.bf16.msra.mxu0 0
        %3055 = vmatpush.bf16.msra.mxu0 0
        %3056 = vmatpush.bf16.msra.mxu0 0
        %3057 = vmatpush.bf16.msra.mxu0 0
        %3058 = vmatpush.bf16.msra.mxu0 %v2278
        %3059 = vmatpush.bf16.msra.mxu0 %v2198
        %3060 = vmatpush.bf16.msra.mxu0 %v2118
        %3061 = vmatpush.bf16.msra.mxu0 %v2038
        %3062 = vmatmul.bf16.gmra.mxu0 %v2649
        %v3063 = vpop.f32.mrf.mxu0
        %v3064 = vadd.f32 %v918, %v3063
        %v3065 = vpop.f32.mrf.mxu0
        %3066 = vdwg.mxu0
        %3067 = vmatpush.bf16.msra.mxu0 0
        %3068 = vmatpush.bf16.msra.mxu0 0
        %3069 = vmatpush.bf16.msra.mxu0 0
        %3070 = vmatpush.bf16.msra.mxu0 0
        %3071 = vmatpush.bf16.msra.mxu0 %v2279
        %3072 = vmatpush.bf16.msra.mxu0 %v2199
        %3073 = vmatpush.bf16.msra.mxu0 %v2119
        %3074 = vmatpush.bf16.msra.mxu0 %v2039
        %3075 = vmatmul.bf16.gmra.mxu0 %v2649
        %v3076 = vpop.f32.mrf.mxu0
        %v3077 = vadd.f32 %v919, %v3076
        %v3078 = vpop.f32.mrf.mxu0
        %3079 = vdwg.mxu0
        %3080 = vmatpush.bf16.msra.mxu0 0
        %3081 = vmatpush.bf16.msra.mxu0 0
        %3082 = vmatpush.bf16.msra.mxu0 0
        %3083 = vmatpush.bf16.msra.mxu0 0
        %3084 = vmatpush.bf16.msra.mxu0 %v2280
        %3085 = vmatpush.bf16.msra.mxu0 %v2200
        %3086 = vmatpush.bf16.msra.mxu0 %v2120
        %3087 = vmatpush.bf16.msra.mxu0 %v2040
        %3088 = vmatmul.bf16.gmra.mxu0 %v2649
        %v3089 = vpop.f32.mrf.mxu0
        %v3090 = vadd.f32 %v920, %v3089
        %v3091 = vpop.f32.mrf.mxu0
        %3092 = vdwg.mxu0
        %3093 = vmatpush.bf16.msra.mxu0 0
        %3094 = vmatpush.bf16.msra.mxu0 0
        %3095 = vmatpush.bf16.msra.mxu0 0
        %3096 = vmatpush.bf16.msra.mxu0 0
        %3097 = vmatpush.bf16.msra.mxu0 %v2281
        %3098 = vmatpush.bf16.msra.mxu0 %v2201
        %3099 = vmatpush.bf16.msra.mxu0 %v2121
        %3100 = vmatpush.bf16.msra.mxu0 %v2041
        %3101 = vmatmul.bf16.gmra.mxu0 %v2649
        %v3102 = vpop.f32.mrf.mxu0
        %v3103 = vadd.f32 %v921, %v3102
        %v3104 = vpop.f32.mrf.mxu0
        %3105 = vdwg.mxu0
        %3106 = vmatpush.bf16.msra.mxu0 0
        %3107 = vmatpush.bf16.msra.mxu0 0
        %3108 = vmatpush.bf16.msra.mxu0 0
        %3109 = vmatpush.bf16.msra.mxu0 0
        %3110 = vmatpush.bf16.msra.mxu0 %v2282
        %3111 = vmatpush.bf16.msra.mxu0 %v2202
        %3112 = vmatpush.bf16.msra.mxu0 %v2122
        %3113 = vmatpush.bf16.msra.mxu0 %v2042
        %3114 = vmatmul.bf16.gmra.mxu0 %v2649
        %v3115 = vpop.f32.mrf.mxu0
        %v3116 = vadd.f32 %v922, %v3115
        %v3117 = vpop.f32.mrf.mxu0
        %3118 = vdwg.mxu0
        %3119 = vmatpush.bf16.msra.mxu0 0
        %3120 = vmatpush.bf16.msra.mxu0 0
        %3121 = vmatpush.bf16.msra.mxu0 0
        %3122 = vmatpush.bf16.msra.mxu0 0
        %3123 = vmatpush.bf16.msra.mxu0 %v2283
        %3124 = vmatpush.bf16.msra.mxu0 %v2203
        %3125 = vmatpush.bf16.msra.mxu0 %v2123
        %3126 = vmatpush.bf16.msra.mxu0 %v2043
        %3127 = vmatmul.bf16.gmra.mxu0 %v2649
        %v3128 = vpop.f32.mrf.mxu0
        %v3129 = vadd.f32 %v923, %v3128
        %v3130 = vpop.f32.mrf.mxu0
        %3131 = vdwg.mxu0
        %3132 = vmatpush.bf16.msra.mxu0 0
        %3133 = vmatpush.bf16.msra.mxu0 0
        %3134 = vmatpush.bf16.msra.mxu0 0
        %3135 = vmatpush.bf16.msra.mxu0 0
        %3136 = vmatpush.bf16.msra.mxu0 %v2284
        %3137 = vmatpush.bf16.msra.mxu0 %v2204
        %3138 = vmatpush.bf16.msra.mxu0 %v2124
        %3139 = vmatpush.bf16.msra.mxu0 %v2044
        %3140 = vmatmul.bf16.gmra.mxu0 %v2649
        %v3141 = vpop.f32.mrf.mxu0
        %v3142 = vadd.f32 %v924, %v3141
        %v3143 = vpop.f32.mrf.mxu0
        %3144 = vdwg.mxu0
        %3145 = vmatpush.bf16.msra.mxu0 0
        %3146 = vmatpush.bf16.msra.mxu0 0
        %3147 = vmatpush.bf16.msra.mxu0 0
        %3148 = vmatpush.bf16.msra.mxu0 0
        %3149 = vmatpush.bf16.msra.mxu0 %v2285
        %3150 = vmatpush.bf16.msra.mxu0 %v2205
        %3151 = vmatpush.bf16.msra.mxu0 %v2125
        %3152 = vmatpush.bf16.msra.mxu0 %v2045
        %3153 = vmatmul.bf16.gmra.mxu0 %v2649
        %v3154 = vpop.f32.mrf.mxu0
        %v3155 = vadd.f32 %v925, %v3154
        %v3156 = vpop.f32.mrf.mxu0
        %3157 = vdwg.mxu0
        %3158 = vmatpush.bf16.msra.mxu0 0
        %3159 = vmatpush.bf16.msra.mxu0 0
        %3160 = vmatpush.bf16.msra.mxu0 0
        %3161 = vmatpush.bf16.msra.mxu0 0
        %3162 = vmatpush.bf16.msra.mxu0 %v2286
        %3163 = vmatpush.bf16.msra.mxu0 %v2206
        %3164 = vmatpush.bf16.msra.mxu0 %v2126
        %3165 = vmatpush.bf16.msra.mxu0 %v2046
        %3166 = vmatmul.bf16.gmra.mxu0 %v2649
        %v3167 = vpop.f32.mrf.mxu0
        %v3168 = vadd.f32 %v926, %v3167
        %v3169 = vpop.f32.mrf.mxu0
        %3170 = vdwg.mxu0
        %3171 = vmatpush.bf16.msra.mxu0 0
        %3172 = vmatpush.bf16.msra.mxu0 0
        %3173 = vmatpush.bf16.msra.mxu0 0
        %3174 = vmatpush.bf16.msra.mxu0 0
        %3175 = vmatpush.bf16.msra.mxu0 %v2287
        %3176 = vmatpush.bf16.msra.mxu0 %v2207
        %3177 = vmatpush.bf16.msra.mxu0 %v2127
        %3178 = vmatpush.bf16.msra.mxu0 %v2047
        %3179 = vmatmul.bf16.gmra.mxu0 %v2649
        %v3180 = vpop.f32.mrf.mxu0
        %v3181 = vadd.f32 %v927, %v3180
        %v3182 = vpop.f32.mrf.mxu0
        %3183 = vdwg.mxu0
        %3184 = vmatpush.bf16.msra.mxu0 0
        %3185 = vmatpush.bf16.msra.mxu0 0
        %3186 = vmatpush.bf16.msra.mxu0 0
        %3187 = vmatpush.bf16.msra.mxu0 0
        %3188 = vmatpush.bf16.msra.mxu0 %v2288
        %3189 = vmatpush.bf16.msra.mxu0 %v2208
        %3190 = vmatpush.bf16.msra.mxu0 %v2128
        %3191 = vmatpush.bf16.msra.mxu0 %v2048
        %3192 = vmatmul.bf16.gmra.mxu0 %v2649
        %v3193 = vpop.f32.mrf.mxu0
        %v3194 = vadd.f32 %v928, %v3193
        %v3195 = vpop.f32.mrf.mxu0
        %3196 = vdwg.mxu0
        %3197 = vmatpush.bf16.msra.mxu0 0
        %3198 = vmatpush.bf16.msra.mxu0 0
        %3199 = vmatpush.bf16.msra.mxu0 0
        %3200 = vmatpush.bf16.msra.mxu0 0
        %3201 = vmatpush.bf16.msra.mxu0 %v2289
        %3202 = vmatpush.bf16.msra.mxu0 %v2209
        %3203 = vmatpush.bf16.msra.mxu0 %v2129
        %3204 = vmatpush.bf16.msra.mxu0 %v2049
        %3205 = vmatmul.bf16.gmra.mxu0 %v2649
        %v3206 = vpop.f32.mrf.mxu0
        %v3207 = vadd.f32 %v929, %v3206
        %v3208 = vpop.f32.mrf.mxu0
        %3209 = vdwg.mxu0
        %3210 = vmatpush.bf16.msra.mxu0 0
        %3211 = vmatpush.bf16.msra.mxu0 0
        %3212 = vmatpush.bf16.msra.mxu0 0
        %3213 = vmatpush.bf16.msra.mxu0 0
        %3214 = vmatpush.bf16.msra.mxu0 %v2290
        %3215 = vmatpush.bf16.msra.mxu0 %v2210
        %3216 = vmatpush.bf16.msra.mxu0 %v2130
        %3217 = vmatpush.bf16.msra.mxu0 %v2050
        %3218 = vmatmul.bf16.gmra.mxu0 %v2649
        %v3219 = vpop.f32.mrf.mxu0
        %v3220 = vadd.f32 %v930, %v3219
        %v3221 = vpop.f32.mrf.mxu0
        %3222 = vdwg.mxu0
        %3223 = vmatpush.bf16.msra.mxu0 0
        %3224 = vmatpush.bf16.msra.mxu0 0
        %3225 = vmatpush.bf16.msra.mxu0 0
        %3226 = vmatpush.bf16.msra.mxu0 0
        %3227 = vmatpush.bf16.msra.mxu0 %v2291
        %3228 = vmatpush.bf16.msra.mxu0 %v2211
        %3229 = vmatpush.bf16.msra.mxu0 %v2131
        %3230 = vmatpush.bf16.msra.mxu0 %v2051
        %3231 = vmatmul.bf16.gmra.mxu0 %v2649
        %v3232 = vpop.f32.mrf.mxu0
        %v3233 = vadd.f32 %v931, %v3232
        %v3234 = vpop.f32.mrf.mxu0
        %3235 = vdwg.mxu0
        %3236 = vmatpush.bf16.msra.mxu0 0
        %3237 = vmatpush.bf16.msra.mxu0 0
        %3238 = vmatpush.bf16.msra.mxu0 0
        %3239 = vmatpush.bf16.msra.mxu0 0
        %3240 = vmatpush.bf16.msra.mxu0 %v2292
        %3241 = vmatpush.bf16.msra.mxu0 %v2212
        %3242 = vmatpush.bf16.msra.mxu0 %v2132
        %3243 = vmatpush.bf16.msra.mxu0 %v2052
        %3244 = vmatmul.bf16.gmra.mxu0 %v2649
        %v3245 = vpop.f32.mrf.mxu0
        %v3246 = vadd.f32 %v932, %v3245
        %v3247 = vpop.f32.mrf.mxu0
        %3248 = vdwg.mxu0
        %3249 = vmatpush.bf16.msra.mxu0 0
        %3250 = vmatpush.bf16.msra.mxu0 0
        %3251 = vmatpush.bf16.msra.mxu0 0
        %3252 = vmatpush.bf16.msra.mxu0 0
        %3253 = vmatpush.bf16.msra.mxu0 %v2293
        %3254 = vmatpush.bf16.msra.mxu0 %v2213
        %3255 = vmatpush.bf16.msra.mxu0 %v2133
        %3256 = vmatpush.bf16.msra.mxu0 %v2053
        %3257 = vmatmul.bf16.gmra.mxu0 %v2649
        %v3258 = vpop.f32.mrf.mxu0
        %v3259 = vadd.f32 %v933, %v3258
        %v3260 = vpop.f32.mrf.mxu0
        %3261 = vdwg.mxu0
        %3262 = vmatpush.bf16.msra.mxu0 0
        %3263 = vmatpush.bf16.msra.mxu0 0
        %3264 = vmatpush.bf16.msra.mxu0 0
        %3265 = vmatpush.bf16.msra.mxu0 0
        %3266 = vmatpush.bf16.msra.mxu0 %v2294
        %3267 = vmatpush.bf16.msra.mxu0 %v2214
        %3268 = vmatpush.bf16.msra.mxu0 %v2134
        %3269 = vmatpush.bf16.msra.mxu0 %v2054
        %3270 = vmatmul.bf16.gmra.mxu0 %v2649
        %v3271 = vpop.f32.mrf.mxu0
        %v3272 = vadd.f32 %v934, %v3271
        %v3273 = vpop.f32.mrf.mxu0
        %3274 = vdwg.mxu0
        %3275 = vmatpush.bf16.msra.mxu0 0
        %3276 = vmatpush.bf16.msra.mxu0 0
        %3277 = vmatpush.bf16.msra.mxu0 0
        %3278 = vmatpush.bf16.msra.mxu0 0
        %3279 = vmatpush.bf16.msra.mxu0 %v2295
        %3280 = vmatpush.bf16.msra.mxu0 %v2215
        %3281 = vmatpush.bf16.msra.mxu0 %v2135
        %3282 = vmatpush.bf16.msra.mxu0 %v2055
        %3283 = vmatmul.bf16.gmra.mxu0 %v2649
        %v3284 = vpop.f32.mrf.mxu0
        %v3285 = vadd.f32 %v935, %v3284
        %v3286 = vpop.f32.mrf.mxu0
        %3287 = vdwg.mxu0
        %3288 = vmatpush.bf16.msra.mxu0 0
        %3289 = vmatpush.bf16.msra.mxu0 0
        %3290 = vmatpush.bf16.msra.mxu0 0
        %3291 = vmatpush.bf16.msra.mxu0 0
        %3292 = vmatpush.bf16.msra.mxu0 %v2296
        %3293 = vmatpush.bf16.msra.mxu0 %v2216
        %3294 = vmatpush.bf16.msra.mxu0 %v2136
        %3295 = vmatpush.bf16.msra.mxu0 %v2056
        %3296 = vmatmul.bf16.gmra.mxu0 %v2649
        %v3297 = vpop.f32.mrf.mxu0
        %v3298 = vadd.f32 %v936, %v3297
        %v3299 = vpop.f32.mrf.mxu0
        %3300 = vdwg.mxu0
        %3301 = vmatpush.bf16.msra.mxu0 0
        %3302 = vmatpush.bf16.msra.mxu0 0
        %3303 = vmatpush.bf16.msra.mxu0 0
        %3304 = vmatpush.bf16.msra.mxu0 0
        %3305 = vmatpush.bf16.msra.mxu0 %v2297
        %3306 = vmatpush.bf16.msra.mxu0 %v2217
        %3307 = vmatpush.bf16.msra.mxu0 %v2137
        %3308 = vmatpush.bf16.msra.mxu0 %v2057
        %3309 = vmatmul.bf16.gmra.mxu0 %v2649
        %v3310 = vpop.f32.mrf.mxu0
        %v3311 = vadd.f32 %v937, %v3310
        %v3312 = vpop.f32.mrf.mxu0
        %3313 = vdwg.mxu0
        %3314 = vmatpush.bf16.msra.mxu0 0
        %3315 = vmatpush.bf16.msra.mxu0 0
        %3316 = vmatpush.bf16.msra.mxu0 0
        %3317 = vmatpush.bf16.msra.mxu0 0
        %3318 = vmatpush.bf16.msra.mxu0 %v2298
        %3319 = vmatpush.bf16.msra.mxu0 %v2218
        %3320 = vmatpush.bf16.msra.mxu0 %v2138
        %3321 = vmatpush.bf16.msra.mxu0 %v2058
        %3322 = vmatmul.bf16.gmra.mxu0 %v2649
        %v3323 = vpop.f32.mrf.mxu0
        %v3324 = vadd.f32 %v938, %v3323
        %v3325 = vpop.f32.mrf.mxu0
        %3326 = vdwg.mxu0
        %3327 = vmatpush.bf16.msra.mxu0 0
        %3328 = vmatpush.bf16.msra.mxu0 0
        %3329 = vmatpush.bf16.msra.mxu0 0
        %3330 = vmatpush.bf16.msra.mxu0 0
        %3331 = vmatpush.bf16.msra.mxu0 %v2299
        %3332 = vmatpush.bf16.msra.mxu0 %v2219
        %3333 = vmatpush.bf16.msra.mxu0 %v2139
        %3334 = vmatpush.bf16.msra.mxu0 %v2059
        %3335 = vmatmul.bf16.gmra.mxu0 %v2649
        %v3336 = vpop.f32.mrf.mxu0
        %v3337 = vadd.f32 %v939, %v3336
        %v3338 = vpop.f32.mrf.mxu0
        %3339 = vdwg.mxu0
        %3340 = vmatpush.bf16.msra.mxu0 0
        %3341 = vmatpush.bf16.msra.mxu0 0
        %3342 = vmatpush.bf16.msra.mxu0 0
        %3343 = vmatpush.bf16.msra.mxu0 0
        %3344 = vmatpush.bf16.msra.mxu0 %v2300
        %3345 = vmatpush.bf16.msra.mxu0 %v2220
        %3346 = vmatpush.bf16.msra.mxu0 %v2140
        %3347 = vmatpush.bf16.msra.mxu0 %v2060
        %3348 = vmatmul.bf16.gmra.mxu0 %v2649
        %v3349 = vpop.f32.mrf.mxu0
        %v3350 = vadd.f32 %v940, %v3349
        %v3351 = vpop.f32.mrf.mxu0
        %3352 = vdwg.mxu0
        %3353 = vmatpush.bf16.msra.mxu0 0
        %3354 = vmatpush.bf16.msra.mxu0 0
        %3355 = vmatpush.bf16.msra.mxu0 0
        %3356 = vmatpush.bf16.msra.mxu0 0
        %3357 = vmatpush.bf16.msra.mxu0 %v2301
        %3358 = vmatpush.bf16.msra.mxu0 %v2221
        %3359 = vmatpush.bf16.msra.mxu0 %v2141
        %3360 = vmatpush.bf16.msra.mxu0 %v2061
        %3361 = vmatmul.bf16.gmra.mxu0 %v2649
        %v3362 = vpop.f32.mrf.mxu0
        %v3363 = vadd.f32 %v941, %v3362
        %v3364 = vpop.f32.mrf.mxu0
        %3365 = vdwg.mxu0
        %3366 = vmatpush.bf16.msra.mxu0 0
        %3367 = vmatpush.bf16.msra.mxu0 0
        %3368 = vmatpush.bf16.msra.mxu0 0
        %3369 = vmatpush.bf16.msra.mxu0 0
        %3370 = vmatpush.bf16.msra.mxu0 %v2302
        %3371 = vmatpush.bf16.msra.mxu0 %v2222
        %3372 = vmatpush.bf16.msra.mxu0 %v2142
        %3373 = vmatpush.bf16.msra.mxu0 %v2062
        %3374 = vmatmul.bf16.gmra.mxu0 %v2649
        %v3375 = vpop.f32.mrf.mxu0
        %v3376 = vadd.f32 %v942, %v3375
        %v3377 = vpop.f32.mrf.mxu0
        %3378 = vdwg.mxu0
        %3379 = vmatpush.bf16.msra.mxu0 0
        %3380 = vmatpush.bf16.msra.mxu0 0
        %3381 = vmatpush.bf16.msra.mxu0 0
        %3382 = vmatpush.bf16.msra.mxu0 0
        %3383 = vmatpush.bf16.msra.mxu0 %v2303
        %3384 = vmatpush.bf16.msra.mxu0 %v2223
        %3385 = vmatpush.bf16.msra.mxu0 %v2143
        %3386 = vmatpush.bf16.msra.mxu0 %v2063
        %3387 = vmatmul.bf16.gmra.mxu0 %v2649
        %v3388 = vpop.f32.mrf.mxu0
        %v3389 = vadd.f32 %v943, %v3388
        %v3390 = vpop.f32.mrf.mxu0
        %3391 = vdwg.mxu0
        %3392 = vmatpush.bf16.msra.mxu0 0
        %3393 = vmatpush.bf16.msra.mxu0 0
        %3394 = vmatpush.bf16.msra.mxu0 0
        %3395 = vmatpush.bf16.msra.mxu0 0
        %3396 = vmatpush.bf16.msra.mxu0 %v2304
        %3397 = vmatpush.bf16.msra.mxu0 %v2224
        %3398 = vmatpush.bf16.msra.mxu0 %v2144
        %3399 = vmatpush.bf16.msra.mxu0 %v2064
        %3400 = vmatmul.bf16.gmra.mxu0 %v2649
        %v3401 = vpop.f32.mrf.mxu0
        %v3402 = vadd.f32 %v944, %v3401
        %v3403 = vpop.f32.mrf.mxu0
        %3404 = vdwg.mxu0
        %3405 = vmatpush.bf16.msra.mxu0 0
        %3406 = vmatpush.bf16.msra.mxu0 0
        %3407 = vmatpush.bf16.msra.mxu0 0
        %3408 = vmatpush.bf16.msra.mxu0 0
        %3409 = vmatpush.bf16.msra.mxu0 %v2305
        %3410 = vmatpush.bf16.msra.mxu0 %v2225
        %3411 = vmatpush.bf16.msra.mxu0 %v2145
        %3412 = vmatpush.bf16.msra.mxu0 %v2065
        %3413 = vmatmul.bf16.gmra.mxu0 %v2649
        %v3414 = vpop.f32.mrf.mxu0
        %v3415 = vadd.f32 %v945, %v3414
        %v3416 = vpop.f32.mrf.mxu0
        %3417 = vdwg.mxu0
        %3418 = vmatpush.bf16.msra.mxu0 0
        %3419 = vmatpush.bf16.msra.mxu0 0
        %3420 = vmatpush.bf16.msra.mxu0 0
        %3421 = vmatpush.bf16.msra.mxu0 0
        %3422 = vmatpush.bf16.msra.mxu0 %v2306
        %3423 = vmatpush.bf16.msra.mxu0 %v2226
        %3424 = vmatpush.bf16.msra.mxu0 %v2146
        %3425 = vmatpush.bf16.msra.mxu0 %v2066
        %3426 = vmatmul.bf16.gmra.mxu0 %v2649
        %v3427 = vpop.f32.mrf.mxu0
        %v3428 = vadd.f32 %v946, %v3427
        %v3429 = vpop.f32.mrf.mxu0
        %3430 = vdwg.mxu0
        %3431 = vmatpush.bf16.msra.mxu0 0
        %3432 = vmatpush.bf16.msra.mxu0 0
        %3433 = vmatpush.bf16.msra.mxu0 0
        %3434 = vmatpush.bf16.msra.mxu0 0
        %3435 = vmatpush.bf16.msra.mxu0 %v2307
        %3436 = vmatpush.bf16.msra.mxu0 %v2227
        %3437 = vmatpush.bf16.msra.mxu0 %v2147
        %3438 = vmatpush.bf16.msra.mxu0 %v2067
        %3439 = vmatmul.bf16.gmra.mxu0 %v2649
        %v3440 = vpop.f32.mrf.mxu0
        %v3441 = vadd.f32 %v947, %v3440
        %v3442 = vpop.f32.mrf.mxu0
        %3443 = vdwg.mxu0
        %3444 = vmatpush.bf16.msra.mxu0 0
        %3445 = vmatpush.bf16.msra.mxu0 0
        %3446 = vmatpush.bf16.msra.mxu0 0
        %3447 = vmatpush.bf16.msra.mxu0 0
        %3448 = vmatpush.bf16.msra.mxu0 %v2308
        %3449 = vmatpush.bf16.msra.mxu0 %v2228
        %3450 = vmatpush.bf16.msra.mxu0 %v2148
        %3451 = vmatpush.bf16.msra.mxu0 %v2068
        %3452 = vmatmul.bf16.gmra.mxu0 %v2649
        %v3453 = vpop.f32.mrf.mxu0
        %v3454 = vadd.f32 %v948, %v3453
        %v3455 = vpop.f32.mrf.mxu0
        %3456 = vdwg.mxu0
        %3457 = vmatpush.bf16.msra.mxu0 0
        %3458 = vmatpush.bf16.msra.mxu0 0
        %3459 = vmatpush.bf16.msra.mxu0 0
        %3460 = vmatpush.bf16.msra.mxu0 0
        %3461 = vmatpush.bf16.msra.mxu0 %v2309
        %3462 = vmatpush.bf16.msra.mxu0 %v2229
        %3463 = vmatpush.bf16.msra.mxu0 %v2149
        %3464 = vmatpush.bf16.msra.mxu0 %v2069
        %3465 = vmatmul.bf16.gmra.mxu0 %v2649
        %v3466 = vpop.f32.mrf.mxu0
        %v3467 = vadd.f32 %v949, %v3466
        %v3468 = vpop.f32.mrf.mxu0
        %3469 = vdwg.mxu0
        %3470 = vmatpush.bf16.msra.mxu0 0
        %3471 = vmatpush.bf16.msra.mxu0 0
        %3472 = vmatpush.bf16.msra.mxu0 0
        %3473 = vmatpush.bf16.msra.mxu0 0
        %3474 = vmatpush.bf16.msra.mxu0 %v2310
        %3475 = vmatpush.bf16.msra.mxu0 %v2230
        %3476 = vmatpush.bf16.msra.mxu0 %v2150
        %3477 = vmatpush.bf16.msra.mxu0 %v2070
        %3478 = vmatmul.bf16.gmra.mxu0 %v2649
        %v3479 = vpop.f32.mrf.mxu0
        %v3480 = vadd.f32 %v950, %v3479
        %v3481 = vpop.f32.mrf.mxu0
        %3482 = vdwg.mxu0
        %3483 = vmatpush.bf16.msra.mxu0 0
        %3484 = vmatpush.bf16.msra.mxu0 0
        %3485 = vmatpush.bf16.msra.mxu0 0
        %3486 = vmatpush.bf16.msra.mxu0 0
        %3487 = vmatpush.bf16.msra.mxu0 %v2311
        %3488 = vmatpush.bf16.msra.mxu0 %v2231
        %3489 = vmatpush.bf16.msra.mxu0 %v2151
        %3490 = vmatpush.bf16.msra.mxu0 %v2071
        %3491 = vmatmul.bf16.gmra.mxu0 %v2649
        %v3492 = vpop.f32.mrf.mxu0
        %v3493 = vadd.f32 %v951, %v3492
        %v3494 = vpop.f32.mrf.mxu0
        %3495 = vdwg.mxu0
        %3496 = vmatpush.bf16.msra.mxu0 0
        %3497 = vmatpush.bf16.msra.mxu0 0
        %3498 = vmatpush.bf16.msra.mxu0 0
        %3499 = vmatpush.bf16.msra.mxu0 0
        %3500 = vmatpush.bf16.msra.mxu0 %v2312
        %3501 = vmatpush.bf16.msra.mxu0 %v2232
        %3502 = vmatpush.bf16.msra.mxu0 %v2152
        %3503 = vmatpush.bf16.msra.mxu0 %v2072
        %3504 = vmatmul.bf16.gmra.mxu0 %v2649
        %v3505 = vpop.f32.mrf.mxu0
        %v3506 = vadd.f32 %v952, %v3505
        %v3507 = vpop.f32.mrf.mxu0
        %3508 = vdwg.mxu0
        %3509 = vmatpush.bf16.msra.mxu0 0
        %3510 = vmatpush.bf16.msra.mxu0 0
        %3511 = vmatpush.bf16.msra.mxu0 0
        %3512 = vmatpush.bf16.msra.mxu0 0
        %3513 = vmatpush.bf16.msra.mxu0 %v2313
        %3514 = vmatpush.bf16.msra.mxu0 %v2233
        %3515 = vmatpush.bf16.msra.mxu0 %v2153
        %3516 = vmatpush.bf16.msra.mxu0 %v2073
        %3517 = vmatmul.bf16.gmra.mxu0 %v2649
        %v3518 = vpop.f32.mrf.mxu0
        %v3519 = vadd.f32 %v953, %v3518
        %v3520 = vpop.f32.mrf.mxu0
        %3521 = vdwg.mxu0
        %3522 = vmatpush.bf16.msra.mxu0 0
        %3523 = vmatpush.bf16.msra.mxu0 0
        %3524 = vmatpush.bf16.msra.mxu0 0
        %3525 = vmatpush.bf16.msra.mxu0 0
        %3526 = vmatpush.bf16.msra.mxu0 %v2314
        %3527 = vmatpush.bf16.msra.mxu0 %v2234
        %3528 = vmatpush.bf16.msra.mxu0 %v2154
        %3529 = vmatpush.bf16.msra.mxu0 %v2074
        %3530 = vmatmul.bf16.gmra.mxu0 %v2649
        %v3531 = vpop.f32.mrf.mxu0
        %v3532 = vadd.f32 %v954, %v3531
        %v3533 = vpop.f32.mrf.mxu0
        %3534 = vdwg.mxu0
        %3535 = vmatpush.bf16.msra.mxu0 0
        %3536 = vmatpush.bf16.msra.mxu0 0
        %3537 = vmatpush.bf16.msra.mxu0 0
        %3538 = vmatpush.bf16.msra.mxu0 0
        %3539 = vmatpush.bf16.msra.mxu0 %v2315
        %3540 = vmatpush.bf16.msra.mxu0 %v2235
        %3541 = vmatpush.bf16.msra.mxu0 %v2155
        %3542 = vmatpush.bf16.msra.mxu0 %v2075
        %3543 = vmatmul.bf16.gmra.mxu0 %v2649
        %v3544 = vpop.f32.mrf.mxu0
        %v3545 = vadd.f32 %v955, %v3544
        %v3546 = vpop.f32.mrf.mxu0
        %3547 = vdwg.mxu0
        %3548 = vmatpush.bf16.msra.mxu0 0
        %3549 = vmatpush.bf16.msra.mxu0 0
        %3550 = vmatpush.bf16.msra.mxu0 0
        %3551 = vmatpush.bf16.msra.mxu0 0
        %3552 = vmatpush.bf16.msra.mxu0 %v2316
        %3553 = vmatpush.bf16.msra.mxu0 %v2236
        %3554 = vmatpush.bf16.msra.mxu0 %v2156
        %3555 = vmatpush.bf16.msra.mxu0 %v2076
        %3556 = vmatmul.bf16.gmra.mxu0 %v2649
        %v3557 = vpop.f32.mrf.mxu0
        %v3558 = vadd.f32 %v956, %v3557
        %v3559 = vpop.f32.mrf.mxu0
        %3560 = vdwg.mxu0
        %3561 = vmatpush.bf16.msra.mxu0 0
        %3562 = vmatpush.bf16.msra.mxu0 0
        %3563 = vmatpush.bf16.msra.mxu0 0
        %3564 = vmatpush.bf16.msra.mxu0 0
        %3565 = vmatpush.bf16.msra.mxu0 %v2317
        %3566 = vmatpush.bf16.msra.mxu0 %v2237
        %3567 = vmatpush.bf16.msra.mxu0 %v2157
        %3568 = vmatpush.bf16.msra.mxu0 %v2077
        %3569 = vmatmul.bf16.gmra.mxu0 %v2649
        %v3570 = vpop.f32.mrf.mxu0
        %v3571 = vadd.f32 %v957, %v3570
        %v3572 = vpop.f32.mrf.mxu0
        %3573 = vdwg.mxu0
        %3574 = vmatpush.bf16.msra.mxu0 0
        %3575 = vmatpush.bf16.msra.mxu0 0
        %3576 = vmatpush.bf16.msra.mxu0 0
        %3577 = vmatpush.bf16.msra.mxu0 0
        %3578 = vmatpush.bf16.msra.mxu0 %v2318
        %3579 = vmatpush.bf16.msra.mxu0 %v2238
        %3580 = vmatpush.bf16.msra.mxu0 %v2158
        %3581 = vmatpush.bf16.msra.mxu0 %v2078
        %3582 = vmatmul.bf16.gmra.mxu0 %v2649
        %v3583 = vpop.f32.mrf.mxu0
        %v3584 = vadd.f32 %v958, %v3583
        %v3585 = vpop.f32.mrf.mxu0
        %3586 = vdwg.mxu0
        %3587 = vmatpush.bf16.msra.mxu0 0
        %3588 = vmatpush.bf16.msra.mxu0 0
        %3589 = vmatpush.bf16.msra.mxu0 0
        %3590 = vmatpush.bf16.msra.mxu0 0
        %3591 = vmatpush.bf16.msra.mxu0 %v2319
        %3592 = vmatpush.bf16.msra.mxu0 %v2239
        %3593 = vmatpush.bf16.msra.mxu0 %v2159
        %3594 = vmatpush.bf16.msra.mxu0 %v2079
        %3595 = vmatmul.bf16.gmra.mxu0 %v2649
        %v3596 = vpop.f32.mrf.mxu0
        %v3597 = vadd.f32 %v959, %v3596
        %v3598 = vpop.f32.mrf.mxu0
        %3599 = vdwg.mxu0
        %3600 = vmatpush.bf16.msra.mxu0 0
        %3601 = vmatpush.bf16.msra.mxu0 0
        %3602 = vmatpush.bf16.msra.mxu0 0
        %3603 = vmatpush.bf16.msra.mxu0 0
        %3604 = vmatpush.bf16.msra.mxu0 %v2320
        %3605 = vmatpush.bf16.msra.mxu0 %v2240
        %3606 = vmatpush.bf16.msra.mxu0 %v2160
        %3607 = vmatpush.bf16.msra.mxu0 %v2080
        %3608 = vmatmul.bf16.gmra.mxu0 %v2649
        %v3609 = vpop.f32.mrf.mxu0
        %v3610 = vadd.f32 %v960, %v3609
        %v3611 = vpop.f32.mrf.mxu0
        %3612 = vdwg.mxu0
        %3613 = vmatpush.bf16.msra.mxu0 0
        %3614 = vmatpush.bf16.msra.mxu0 0
        %3615 = vmatpush.bf16.msra.mxu0 0
        %3616 = vmatpush.bf16.msra.mxu0 0
        %3617 = vmatpush.bf16.msra.mxu0 %v2321
        %3618 = vmatpush.bf16.msra.mxu0 %v2241
        %3619 = vmatpush.bf16.msra.mxu0 %v2161
        %3620 = vmatpush.bf16.msra.mxu0 %v2081
        %3621 = vmatmul.bf16.gmra.mxu0 %v2649
        %v3622 = vpop.f32.mrf.mxu0
        %v3623 = vadd.f32 %v961, %v3622
        %v3624 = vpop.f32.mrf.mxu0
        %3625 = vdwg.mxu0
        %3626 = vmatpush.bf16.msra.mxu0 0
        %3627 = vmatpush.bf16.msra.mxu0 0
        %3628 = vmatpush.bf16.msra.mxu0 0
        %3629 = vmatpush.bf16.msra.mxu0 0
        %3630 = vmatpush.bf16.msra.mxu0 %v2322
        %3631 = vmatpush.bf16.msra.mxu0 %v2242
        %3632 = vmatpush.bf16.msra.mxu0 %v2162
        %3633 = vmatpush.bf16.msra.mxu0 %v2082
        %3634 = vmatmul.bf16.gmra.mxu0 %v2649
        %v3635 = vpop.f32.mrf.mxu0
        %v3636 = vadd.f32 %v962, %v3635
        %v3637 = vpop.f32.mrf.mxu0
        %3638 = vdwg.mxu0
        %3639 = vmatpush.bf16.msra.mxu0 0
        %3640 = vmatpush.bf16.msra.mxu0 0
        %3641 = vmatpush.bf16.msra.mxu0 0
        %3642 = vmatpush.bf16.msra.mxu0 0
        %3643 = vmatpush.bf16.msra.mxu0 %v2323
        %3644 = vmatpush.bf16.msra.mxu0 %v2243
        %3645 = vmatpush.bf16.msra.mxu0 %v2163
        %3646 = vmatpush.bf16.msra.mxu0 %v2083
        %3647 = vmatmul.bf16.gmra.mxu0 %v2649
        %v3648 = vpop.f32.mrf.mxu0
        %v3649 = vadd.f32 %v963, %v3648
        %v3650 = vpop.f32.mrf.mxu0
        %3651 = vdwg.mxu0
        %3652 = vmatpush.bf16.msra.mxu0 0
        %3653 = vmatpush.bf16.msra.mxu0 0
        %3654 = vmatpush.bf16.msra.mxu0 0
        %3655 = vmatpush.bf16.msra.mxu0 0
        %3656 = vmatpush.bf16.msra.mxu0 %v2324
        %3657 = vmatpush.bf16.msra.mxu0 %v2244
        %3658 = vmatpush.bf16.msra.mxu0 %v2164
        %3659 = vmatpush.bf16.msra.mxu0 %v2084
        %3660 = vmatmul.bf16.gmra.mxu0 %v2649
        %v3661 = vpop.f32.mrf.mxu0
        %v3662 = vadd.f32 %v964, %v3661
        %v3663 = vpop.f32.mrf.mxu0
        %3664 = vdwg.mxu0
        %3665 = vmatpush.bf16.msra.mxu0 0
        %3666 = vmatpush.bf16.msra.mxu0 0
        %3667 = vmatpush.bf16.msra.mxu0 0
        %3668 = vmatpush.bf16.msra.mxu0 0
        %3669 = vmatpush.bf16.msra.mxu0 %v2325
        %3670 = vmatpush.bf16.msra.mxu0 %v2245
        %3671 = vmatpush.bf16.msra.mxu0 %v2165
        %3672 = vmatpush.bf16.msra.mxu0 %v2085
        %3673 = vmatmul.bf16.gmra.mxu0 %v2649
        %v3674 = vpop.f32.mrf.mxu0
        %v3675 = vadd.f32 %v965, %v3674
        %v3676 = vpop.f32.mrf.mxu0
        %3677 = vdwg.mxu0
        %3678 = vmatpush.bf16.msra.mxu0 0
        %3679 = vmatpush.bf16.msra.mxu0 0
        %3680 = vmatpush.bf16.msra.mxu0 0
        %3681 = vmatpush.bf16.msra.mxu0 0
        %3682 = vmatpush.bf16.msra.mxu0 %v2326
        %3683 = vmatpush.bf16.msra.mxu0 %v2246
        %3684 = vmatpush.bf16.msra.mxu0 %v2166
        %3685 = vmatpush.bf16.msra.mxu0 %v2086
        %3686 = vmatmul.bf16.gmra.mxu0 %v2649
        %v3687 = vpop.f32.mrf.mxu0
        %v3688 = vadd.f32 %v966, %v3687
        %v3689 = vpop.f32.mrf.mxu0
        %3690 = vdwg.mxu0
        %s3691 = smul.u32 %s28, 80
        %s3692 = smul.addr %s3691, 8
        %s3693 = scalar_lea.vmem [#allocation5], %s3692
        %3694 = vst [vmem:[%s3693] sm:$0xff] %v2661
        %3695 = vst [vmem:[%s3693 + $0x8] sm:$0xff] %v2674
        %3696 = vst [vmem:[%s3693 + $0x10] sm:$0xff] %v2687
        %3697 = vst [vmem:[%s3693 + $0x18] sm:$0xff] %v2700
        %3698 = vst [vmem:[%s3693 + $0x20] sm:$0xff] %v2713
        %3699 = vst [vmem:[%s3693 + $0x28] sm:$0xff] %v2726
        %3700 = vst [vmem:[%s3693 + $0x30] sm:$0xff] %v2739
        %3701 = vst [vmem:[%s3693 + $0x38] sm:$0xff] %v2752
        %3702 = vst [vmem:[%s3693 + $0x40] sm:$0xff] %v2765
        %3703 = vst [vmem:[%s3693 + $0x48] sm:$0xff] %v2778
        %3704 = vst [vmem:[%s3693 + $0x50] sm:$0xff] %v2791
        %3705 = vst [vmem:[%s3693 + $0x58] sm:$0xff] %v2804
        %3706 = vst [vmem:[%s3693 + $0x60] sm:$0xff] %v2817
        %3707 = vst [vmem:[%s3693 + $0x68] sm:$0xff] %v2830
        %3708 = vst [vmem:[%s3693 + $0x70] sm:$0xff] %v2843
        %3709 = vst [vmem:[%s3693 + $0x78] sm:$0xff] %v2856
        %3710 = vst [vmem:[%s3693 + $0x80] sm:$0xff] %v2869
        %3711 = vst [vmem:[%s3693 + $0x88] sm:$0xff] %v2882
        %3712 = vst [vmem:[%s3693 + $0x90] sm:$0xff] %v2895
        %3713 = vst [vmem:[%s3693 + $0x98] sm:$0xff] %v2908
        %3714 = vst [vmem:[%s3693 + $0xa0] sm:$0xff] %v2921
        %3715 = vst [vmem:[%s3693 + $0xa8] sm:$0xff] %v2934
        %3716 = vst [vmem:[%s3693 + $0xb0] sm:$0xff] %v2947
        %3717 = vst [vmem:[%s3693 + $0xb8] sm:$0xff] %v2960
        %3718 = vst [vmem:[%s3693 + $0xc0] sm:$0xff] %v2973
        %3719 = vst [vmem:[%s3693 + $0xc8] sm:$0xff] %v2986
        %3720 = vst [vmem:[%s3693 + $0xd0] sm:$0xff] %v2999
        %3721 = vst [vmem:[%s3693 + $0xd8] sm:$0xff] %v3012
        %3722 = vst [vmem:[%s3693 + $0xe0] sm:$0xff] %v3025
        %3723 = vst [vmem:[%s3693 + $0xe8] sm:$0xff] %v3038
        %3724 = vst [vmem:[%s3693 + $0xf0] sm:$0xff] %v3051
        %3725 = vst [vmem:[%s3693 + $0xf8] sm:$0xff] %v3064
        %3726 = vst [vmem:[%s3693 + $0x100] sm:$0xff] %v3077
        %3727 = vst [vmem:[%s3693 + $0x108] sm:$0xff] %v3090
        %3728 = vst [vmem:[%s3693 + $0x110] sm:$0xff] %v3103
        %3729 = vst [vmem:[%s3693 + $0x118] sm:$0xff] %v3116
        %3730 = vst [vmem:[%s3693 + $0x120] sm:$0xff] %v3129
        %3731 = vst [vmem:[%s3693 + $0x128] sm:$0xff] %v3142
        %3732 = vst [vmem:[%s3693 + $0x130] sm:$0xff] %v3155
        %3733 = vst [vmem:[%s3693 + $0x138] sm:$0xff] %v3168
        %3734 = vst [vmem:[%s3693 + $0x140] sm:$0xff] %v3181
        %3735 = vst [vmem:[%s3693 + $0x148] sm:$0xff] %v3194
        %3736 = vst [vmem:[%s3693 + $0x150] sm:$0xff] %v3207
        %3737 = vst [vmem:[%s3693 + $0x158] sm:$0xff] %v3220
        %3738 = vst [vmem:[%s3693 + $0x160] sm:$0xff] %v3233
        %3739 = vst [vmem:[%s3693 + $0x168] sm:$0xff] %v3246
        %3740 = vst [vmem:[%s3693 + $0x170] sm:$0xff] %v3259
        %3741 = vst [vmem:[%s3693 + $0x178] sm:$0xff] %v3272
        %3742 = vst [vmem:[%s3693 + $0x180] sm:$0xff] %v3285
        %3743 = vst [vmem:[%s3693 + $0x188] sm:$0xff] %v3298
        %3744 = vst [vmem:[%s3693 + $0x190] sm:$0xff] %v3311
        %3745 = vst [vmem:[%s3693 + $0x198] sm:$0xff] %v3324
        %3746 = vst [vmem:[%s3693 + $0x1a0] sm:$0xff] %v3337
        %3747 = vst [vmem:[%s3693 + $0x1a8] sm:$0xff] %v3350
        %3748 = vst [vmem:[%s3693 + $0x1b0] sm:$0xff] %v3363
        %3749 = vst [vmem:[%s3693 + $0x1b8] sm:$0xff] %v3376
        %3750 = vst [vmem:[%s3693 + $0x1c0] sm:$0xff] %v3389
        %3751 = vst [vmem:[%s3693 + $0x1c8] sm:$0xff] %v3402
        %3752 = vst [vmem:[%s3693 + $0x1d0] sm:$0xff] %v3415
        %3753 = vst [vmem:[%s3693 + $0x1d8] sm:$0xff] %v3428
        %3754 = vst [vmem:[%s3693 + $0x1e0] sm:$0xff] %v3441
        %3755 = vst [vmem:[%s3693 + $0x1e8] sm:$0xff] %v3454
        %3756 = vst [vmem:[%s3693 + $0x1f0] sm:$0xff] %v3467
        %3757 = vst [vmem:[%s3693 + $0x1f8] sm:$0xff] %v3480
        %3758 = vst [vmem:[%s3693 + $0x200] sm:$0xff] %v3493
        %3759 = vst [vmem:[%s3693 + $0x208] sm:$0xff] %v3506
        %3760 = vst [vmem:[%s3693 + $0x210] sm:$0xff] %v3519
        %3761 = vst [vmem:[%s3693 + $0x218] sm:$0xff] %v3532
        %3762 = vst [vmem:[%s3693 + $0x220] sm:$0xff] %v3545
        %3763 = vst [vmem:[%s3693 + $0x228] sm:$0xff] %v3558
        %3764 = vst [vmem:[%s3693 + $0x230] sm:$0xff] %v3571
        %3765 = vst [vmem:[%s3693 + $0x238] sm:$0xff] %v3584
        %3766 = vst [vmem:[%s3693 + $0x240] sm:$0xff] %v3597
        %3767 = vst [vmem:[%s3693 + $0x248] sm:$0xff] %v3610
        %3768 = vst [vmem:[%s3693 + $0x250] sm:$0xff] %v3623
        %3769 = vst [vmem:[%s3693 + $0x258] sm:$0xff] %v3636
        %3770 = vst [vmem:[%s3693 + $0x260] sm:$0xff] %v3649
        %3771 = vst [vmem:[%s3693 + $0x268] sm:$0xff] %v3662
        %3772 = vst [vmem:[%s3693 + $0x270] sm:$0xff] %v3675
        %3773 = vst [vmem:[%s3693 + $0x278] sm:$0xff] %v3688
        %v3774 = vld [vmem:[#allocation3] sm:$0xff]
        %v3775 = vmax.f32 %v2661, %v2713
        %v3776 = vmax.f32 %v2674, %v2726
        %v3777 = vmax.f32 %v2687, %v2739
        %v3778 = vmax.f32 %v2700, %v2752
        %v3779 = vmax.f32 %v3775, %v2765
        %v3780 = vmax.f32 %v3776, %v2778
        %v3781 = vmax.f32 %v3777, %v2791
        %v3782 = vmax.f32 %v3778, %v2804
        %v3783 = vmax.f32 %v3779, %v2817
        %v3784 = vmax.f32 %v3780, %v2830
        %v3785 = vmax.f32 %v3781, %v2843
        %v3786 = vmax.f32 %v3782, %v2856
        %v3787 = vmax.f32 %v3783, %v2869
        %v3788 = vmax.f32 %v3784, %v2882
        %v3789 = vmax.f32 %v3785, %v2895
        %v3790 = vmax.f32 %v3786, %v2908
        %v3791 = vmax.f32 %v3787, %v2921
        %v3792 = vmax.f32 %v3788, %v2934
        %v3793 = vmax.f32 %v3789, %v2947
        %v3794 = vmax.f32 %v3790, %v2960
        %v3795 = vmax.f32 %v3791, %v2973
        %v3796 = vmax.f32 %v3792, %v2986
        %v3797 = vmax.f32 %v3793, %v2999
        %v3798 = vmax.f32 %v3794, %v3012
        %v3799 = vmax.f32 %v3795, %v3025
        %v3800 = vmax.f32 %v3796, %v3038
        %v3801 = vmax.f32 %v3797, %v3051
        %v3802 = vmax.f32 %v3798, %v3064
        %v3803 = vmax.f32 %v3799, %v3077
        %v3804 = vmax.f32 %v3800, %v3090
        %v3805 = vmax.f32 %v3801, %v3103
        %v3806 = vmax.f32 %v3802, %v3116
        %v3807 = vmax.f32 %v3803, %v3129
        %v3808 = vmax.f32 %v3804, %v3142
        %v3809 = vmax.f32 %v3805, %v3155
        %v3810 = vmax.f32 %v3806, %v3168
        %v3811 = vmax.f32 %v3807, %v3181
        %v3812 = vmax.f32 %v3808, %v3194
        %v3813 = vmax.f32 %v3809, %v3207
        %v3814 = vmax.f32 %v3810, %v3220
        %v3815 = vmax.f32 %v3811, %v3233
        %v3816 = vmax.f32 %v3812, %v3246
        %v3817 = vmax.f32 %v3813, %v3259
        %v3818 = vmax.f32 %v3814, %v3272
        %v3819 = vmax.f32 %v3815, %v3285
        %v3820 = vmax.f32 %v3816, %v3298
        %v3821 = vmax.f32 %v3817, %v3311
        %v3822 = vmax.f32 %v3818, %v3324
        %v3823 = vmax.f32 %v3819, %v3337
        %v3824 = vmax.f32 %v3820, %v3350
        %v3825 = vmax.f32 %v3821, %v3363
        %v3826 = vmax.f32 %v3822, %v3376
        %v3827 = vmax.f32 %v3823, %v3389
        %v3828 = vmax.f32 %v3824, %v3402
        %v3829 = vmax.f32 %v3825, %v3415
        %v3830 = vmax.f32 %v3826, %v3428
        %v3831 = vmax.f32 %v3827, %v3441
        %v3832 = vmax.f32 %v3828, %v3454
        %v3833 = vmax.f32 %v3829, %v3467
        %v3834 = vmax.f32 %v3830, %v3480
        %v3835 = vmax.f32 %v3831, %v3493
        %v3836 = vmax.f32 %v3832, %v3506
        %v3837 = vmax.f32 %v3833, %v3519
        %v3838 = vmax.f32 %v3834, %v3532
        %v3839 = vmax.f32 %v3835, %v3545
        %v3840 = vmax.f32 %v3836, %v3558
        %v3841 = vmax.f32 %v3837, %v3571
        %v3842 = vmax.f32 %v3838, %v3584
        %v3843 = vmax.f32 %v3839, %v3597
        %v3844 = vmax.f32 %v3840, %v3610
        %v3845 = vmax.f32 %v3841, %v3623
        %v3846 = vmax.f32 %v3842, %v3636
        %v3847 = vmax.f32 %v3843, %v3649
        %v3848 = vmax.f32 %v3844, %v3662
        %v3849 = vmax.f32 %v3845, %v3675
        %v3850 = vmax.f32 %v3846, %v3688
        %v3851 = vmax.f32 %v3847, %v3848
        %v3852 = vmax.f32 %v3849, %v3850
        %v3853 = vmax.f32 %v3851, %v3852
        %3854 = vmax.xlane.f32.xlu0 %v3853
        %v3855 = vpop.xlane.xlu0 %3854
        %v3856 = vmax.f32 %v3774, %v3855
        %v3857 = vld [vmem:[#allocation4] sm:$0xff]
        %v3858 = vsub.f32 %v3774, %v3856
        %v3859 = vmul.f32 %v3858, 1.442695
        %v3860 = vpow.pop %v3859
        %v3861 = vmul.f32 %v3857, %v3860
        %3863 = vset.pattern.permute.xlu0 0
        %3864 = vperm.xlu0 %3863, %v3856
        %v3865 = vpop.permute.xlu0 %3864
        %v3867 = vsub.f32 %v2661, %v3865
        %v3868 = vsub.f32 %v2674, %v3865
        %v3869 = vsub.f32 %v2687, %v3865
        %v3870 = vsub.f32 %v2700, %v3865
        %v3871 = vsub.f32 %v2713, %v3865
        %v3872 = vsub.f32 %v2726, %v3865
        %v3873 = vsub.f32 %v2739, %v3865
        %v3874 = vsub.f32 %v2752, %v3865
        %v3875 = vsub.f32 %v2765, %v3865
        %v3876 = vsub.f32 %v2778, %v3865
        %v3877 = vsub.f32 %v2791, %v3865
        %v3878 = vsub.f32 %v2804, %v3865
        %v3879 = vsub.f32 %v2817, %v3865
        %v3880 = vsub.f32 %v2830, %v3865
        %v3881 = vsub.f32 %v2843, %v3865
        %v3882 = vsub.f32 %v2856, %v3865
        %v3883 = vsub.f32 %v2869, %v3865
        %v3884 = vsub.f32 %v2882, %v3865
        %v3885 = vsub.f32 %v2895, %v3865
        %v3886 = vsub.f32 %v2908, %v3865
        %v3887 = vsub.f32 %v2921, %v3865
        %v3888 = vsub.f32 %v2934, %v3865
        %v3889 = vsub.f32 %v2947, %v3865
        %v3890 = vsub.f32 %v2960, %v3865
        %v3891 = vsub.f32 %v2973, %v3865
        %v3892 = vsub.f32 %v2986, %v3865
        %v3893 = vsub.f32 %v2999, %v3865
        %v3894 = vsub.f32 %v3012, %v3865
        %v3895 = vsub.f32 %v3025, %v3865
        %v3896 = vsub.f32 %v3038, %v3865
        %v3897 = vsub.f32 %v3051, %v3865
        %v3898 = vsub.f32 %v3064, %v3865
        %v3899 = vsub.f32 %v3077, %v3865
        %v3900 = vsub.f32 %v3090, %v3865
        %v3901 = vsub.f32 %v3103, %v3865
        %v3902 = vsub.f32 %v3116, %v3865
        %v3903 = vsub.f32 %v3129, %v3865
        %v3904 = vsub.f32 %v3142, %v3865
        %v3905 = vsub.f32 %v3155, %v3865
        %v3906 = vsub.f32 %v3168, %v3865
        %v3907 = vsub.f32 %v3181, %v3865
        %v3908 = vsub.f32 %v3194, %v3865
        %v3909 = vsub.f32 %v3207, %v3865
        %v3910 = vsub.f32 %v3220, %v3865
        %v3911 = vsub.f32 %v3233, %v3865
        %v3912 = vsub.f32 %v3246, %v3865
        %v3913 = vsub.f32 %v3259, %v3865
        %v3914 = vsub.f32 %v3272, %v3865
        %v3915 = vsub.f32 %v3285, %v3865
        %v3916 = vsub.f32 %v3298, %v3865
        %v3917 = vsub.f32 %v3311, %v3865
        %v3918 = vsub.f32 %v3324, %v3865
        %v3919 = vsub.f32 %v3337, %v3865
        %v3920 = vsub.f32 %v3350, %v3865
        %v3921 = vsub.f32 %v3363, %v3865
        %v3922 = vsub.f32 %v3376, %v3865
        %v3923 = vsub.f32 %v3389, %v3865
        %v3924 = vsub.f32 %v3402, %v3865
        %v3925 = vsub.f32 %v3415, %v3865
        %v3926 = vsub.f32 %v3428, %v3865
        %v3927 = vsub.f32 %v3441, %v3865
        %v3928 = vsub.f32 %v3454, %v3865
        %v3929 = vsub.f32 %v3467, %v3865
        %v3930 = vsub.f32 %v3480, %v3865
        %v3931 = vsub.f32 %v3493, %v3865
        %v3932 = vsub.f32 %v3506, %v3865
        %v3933 = vsub.f32 %v3519, %v3865
        %v3934 = vsub.f32 %v3532, %v3865
        %v3935 = vsub.f32 %v3545, %v3865
        %v3936 = vsub.f32 %v3558, %v3865
        %v3937 = vsub.f32 %v3571, %v3865
        %v3938 = vsub.f32 %v3584, %v3865
        %v3939 = vsub.f32 %v3597, %v3865
        %v3940 = vsub.f32 %v3610, %v3865
        %v3941 = vsub.f32 %v3623, %v3865
        %v3942 = vsub.f32 %v3636, %v3865
        %v3943 = vsub.f32 %v3649, %v3865
        %v3944 = vsub.f32 %v3662, %v3865
        %v3945 = vsub.f32 %v3675, %v3865
        %v3946 = vsub.f32 %v3688, %v3865
        %v3947 = vmul.f32 %v3867, 1.442695
        %v3948 = vpow.pop %v3947
        %v3949 = vmul.f32 %v3868, 1.442695
        %v3950 = vpow.pop %v3949
        %v3951 = vmul.f32 %v3869, 1.442695
        %v3952 = vpow.pop %v3951
        %v3953 = vmul.f32 %v3870, 1.442695
        %v3954 = vpow.pop %v3953
        %v3955 = vmul.f32 %v3871, 1.442695
        %v3956 = vpow.pop %v3955
        %v3957 = vmul.f32 %v3872, 1.442695
        %v3958 = vpow.pop %v3957
        %v3959 = vmul.f32 %v3873, 1.442695
        %v3960 = vpow.pop %v3959
        %v3961 = vmul.f32 %v3874, 1.442695
        %v3962 = vpow.pop %v3961
        %v3963 = vmul.f32 %v3875, 1.442695
        %v3964 = vpow.pop %v3963
        %v3965 = vmul.f32 %v3876, 1.442695
        %v3966 = vpow.pop %v3965
        %v3967 = vmul.f32 %v3877, 1.442695
        %v3968 = vpow.pop %v3967
        %v3969 = vmul.f32 %v3878, 1.442695
        %v3970 = vpow.pop %v3969
        %v3971 = vmul.f32 %v3879, 1.442695
        %v3972 = vpow.pop %v3971
        %v3973 = vmul.f32 %v3880, 1.442695
        %v3974 = vpow.pop %v3973
        %v3975 = vmul.f32 %v3881, 1.442695
        %v3976 = vpow.pop %v3975
        %v3977 = vmul.f32 %v3882, 1.442695
        %v3978 = vpow.pop %v3977
        %v3979 = vmul.f32 %v3883, 1.442695
        %v3980 = vpow.pop %v3979
        %v3981 = vmul.f32 %v3884, 1.442695
        %v3982 = vpow.pop %v3981
        %v3983 = vmul.f32 %v3885, 1.442695
        %v3984 = vpow.pop %v3983
        %v3985 = vmul.f32 %v3886, 1.442695
        %v3986 = vpow.pop %v3985
        %v3987 = vmul.f32 %v3887, 1.442695
        %v3988 = vpow.pop %v3987
        %v3989 = vmul.f32 %v3888, 1.442695
        %v3990 = vpow.pop %v3989
        %v3991 = vmul.f32 %v3889, 1.442695
        %v3992 = vpow.pop %v3991
        %v3993 = vmul.f32 %v3890, 1.442695
        %v3994 = vpow.pop %v3993
        %v3995 = vmul.f32 %v3891, 1.442695
        %v3996 = vpow.pop %v3995
        %v3997 = vmul.f32 %v3892, 1.442695
        %v3998 = vpow.pop %v3997
        %v3999 = vmul.f32 %v3893, 1.442695
        %v4000 = vpow.pop %v3999
        %v4001 = vmul.f32 %v3894, 1.442695
        %v4002 = vpow.pop %v4001
        %v4003 = vmul.f32 %v3895, 1.442695
        %v4004 = vpow.pop %v4003
        %v4005 = vmul.f32 %v3896, 1.442695
        %v4006 = vpow.pop %v4005
        %v4007 = vmul.f32 %v3897, 1.442695
        %v4008 = vpow.pop %v4007
        %v4009 = vmul.f32 %v3898, 1.442695
        %v4010 = vpow.pop %v4009
        %v4011 = vmul.f32 %v3899, 1.442695
        %v4012 = vpow.pop %v4011
        %v4013 = vmul.f32 %v3900, 1.442695
        %v4014 = vpow.pop %v4013
        %v4015 = vmul.f32 %v3901, 1.442695
        %v4016 = vpow.pop %v4015
        %v4017 = vmul.f32 %v3902, 1.442695
        %v4018 = vpow.pop %v4017
        %v4019 = vmul.f32 %v3903, 1.442695
        %v4020 = vpow.pop %v4019
        %v4021 = vmul.f32 %v3904, 1.442695
        %v4022 = vpow.pop %v4021
        %v4023 = vmul.f32 %v3905, 1.442695
        %v4024 = vpow.pop %v4023
        %v4025 = vmul.f32 %v3906, 1.442695
        %v4026 = vpow.pop %v4025
        %v4027 = vmul.f32 %v3907, 1.442695
        %v4028 = vpow.pop %v4027
        %v4029 = vmul.f32 %v3908, 1.442695
        %v4030 = vpow.pop %v4029
        %v4031 = vmul.f32 %v3909, 1.442695
        %v4032 = vpow.pop %v4031
        %v4033 = vmul.f32 %v3910, 1.442695
        %v4034 = vpow.pop %v4033
        %v4035 = vmul.f32 %v3911, 1.442695
        %v4036 = vpow.pop %v4035
        %v4037 = vmul.f32 %v3912, 1.442695
        %v4038 = vpow.pop %v4037
        %v4039 = vmul.f32 %v3913, 1.442695
        %v4040 = vpow.pop %v4039
        %v4041 = vmul.f32 %v3914, 1.442695
        %v4042 = vpow.pop %v4041
        %v4043 = vmul.f32 %v3915, 1.442695
        %v4044 = vpow.pop %v4043
        %v4045 = vmul.f32 %v3916, 1.442695
        %v4046 = vpow.pop %v4045
        %v4047 = vmul.f32 %v3917, 1.442695
        %v4048 = vpow.pop %v4047
        %v4049 = vmul.f32 %v3918, 1.442695
        %v4050 = vpow.pop %v4049
        %v4051 = vmul.f32 %v3919, 1.442695
        %v4052 = vpow.pop %v4051
        %v4053 = vmul.f32 %v3920, 1.442695
        %v4054 = vpow.pop %v4053
        %v4055 = vmul.f32 %v3921, 1.442695
        %v4056 = vpow.pop %v4055
        %v4057 = vmul.f32 %v3922, 1.442695
        %v4058 = vpow.pop %v4057
        %v4059 = vmul.f32 %v3923, 1.442695
        %v4060 = vpow.pop %v4059
        %v4061 = vmul.f32 %v3924, 1.442695
        %v4062 = vpow.pop %v4061
        %v4063 = vmul.f32 %v3925, 1.442695
        %v4064 = vpow.pop %v4063
        %v4065 = vmul.f32 %v3926, 1.442695
        %v4066 = vpow.pop %v4065
        %v4067 = vmul.f32 %v3927, 1.442695
        %v4068 = vpow.pop %v4067
        %v4069 = vmul.f32 %v3928, 1.442695
        %v4070 = vpow.pop %v4069
        %v4071 = vmul.f32 %v3929, 1.442695
        %v4072 = vpow.pop %v4071
        %v4073 = vmul.f32 %v3930, 1.442695
        %v4074 = vpow.pop %v4073
        %v4075 = vmul.f32 %v3931, 1.442695
        %v4076 = vpow.pop %v4075
        %v4077 = vmul.f32 %v3932, 1.442695
        %v4078 = vpow.pop %v4077
        %v4079 = vmul.f32 %v3933, 1.442695
        %v4080 = vpow.pop %v4079
        %v4081 = vmul.f32 %v3934, 1.442695
        %v4082 = vpow.pop %v4081
        %v4083 = vmul.f32 %v3935, 1.442695
        %v4084 = vpow.pop %v4083
        %v4085 = vmul.f32 %v3936, 1.442695
        %v4086 = vpow.pop %v4085
        %v4087 = vmul.f32 %v3937, 1.442695
        %v4088 = vpow.pop %v4087
        %v4089 = vmul.f32 %v3938, 1.442695
        %v4090 = vpow.pop %v4089
        %v4091 = vmul.f32 %v3939, 1.442695
        %v4092 = vpow.pop %v4091
        %v4093 = vmul.f32 %v3940, 1.442695
        %v4094 = vpow.pop %v4093
        %v4095 = vmul.f32 %v3941, 1.442695
        %v4096 = vpow.pop %v4095
        %v4097 = vmul.f32 %v3942, 1.442695
        %v4098 = vpow.pop %v4097
        %v4099 = vmul.f32 %v3943, 1.442695
        %v4100 = vpow.pop %v4099
        %v4101 = vmul.f32 %v3944, 1.442695
        %v4102 = vpow.pop %v4101
        %v4103 = vmul.f32 %v3945, 1.442695
        %v4104 = vpow.pop %v4103
        %v4105 = vmul.f32 %v3946, 1.442695
        %v4106 = vpow.pop %v4105
        %v4107 = vadd.f32 %v3948, %v3950
        %v4108 = vadd.f32 %v4107, %v3952
        %v4109 = vadd.f32 %v4108, %v3954
        %v4110 = vadd.f32 %v4109, %v3956
        %v4111 = vadd.f32 %v4110, %v3958
        %v4112 = vadd.f32 %v4111, %v3960
        %v4113 = vadd.f32 %v4112, %v3962
        %v4114 = vadd.f32 %v4113, %v3964
        %v4115 = vadd.f32 %v4114, %v3966
        %v4116 = vadd.f32 %v4115, %v3968
        %v4117 = vadd.f32 %v4116, %v3970
        %v4118 = vadd.f32 %v4117, %v3972
        %v4119 = vadd.f32 %v4118, %v3974
        %v4120 = vadd.f32 %v4119, %v3976
        %v4121 = vadd.f32 %v4120, %v3978
        %v4122 = vadd.f32 %v4121, %v3980
        %v4123 = vadd.f32 %v4122, %v3982
        %v4124 = vadd.f32 %v4123, %v3984
        %v4125 = vadd.f32 %v4124, %v3986
        %v4126 = vadd.f32 %v4125, %v3988
        %v4127 = vadd.f32 %v4126, %v3990
        %v4128 = vadd.f32 %v4127, %v3992
        %v4129 = vadd.f32 %v4128, %v3994
        %v4130 = vadd.f32 %v4129, %v3996
        %v4131 = vadd.f32 %v4130, %v3998
        %v4132 = vadd.f32 %v4131, %v4000
        %v4133 = vadd.f32 %v4132, %v4002
        %v4134 = vadd.f32 %v4133, %v4004
        %v4135 = vadd.f32 %v4134, %v4006
        %v4136 = vadd.f32 %v4135, %v4008
        %v4137 = vadd.f32 %v4136, %v4010
        %v4138 = vadd.f32 %v4137, %v4012
        %v4139 = vadd.f32 %v4138, %v4014
        %v4140 = vadd.f32 %v4139, %v4016
        %v4141 = vadd.f32 %v4140, %v4018
        %v4142 = vadd.f32 %v4141, %v4020
        %v4143 = vadd.f32 %v4142, %v4022
        %v4144 = vadd.f32 %v4143, %v4024
        %v4145 = vadd.f32 %v4144, %v4026
        %v4146 = vadd.f32 %v4145, %v4028
        %v4147 = vadd.f32 %v4146, %v4030
        %v4148 = vadd.f32 %v4147, %v4032
        %v4149 = vadd.f32 %v4148, %v4034
        %v4150 = vadd.f32 %v4149, %v4036
        %v4151 = vadd.f32 %v4150, %v4038
        %v4152 = vadd.f32 %v4151, %v4040
        %v4153 = vadd.f32 %v4152, %v4042
        %v4154 = vadd.f32 %v4153, %v4044
        %v4155 = vadd.f32 %v4154, %v4046
        %v4156 = vadd.f32 %v4155, %v4048
        %v4157 = vadd.f32 %v4156, %v4050
        %v4158 = vadd.f32 %v4157, %v4052
        %v4159 = vadd.f32 %v4158, %v4054
        %v4160 = vadd.f32 %v4159, %v4056
        %v4161 = vadd.f32 %v4160, %v4058
        %v4162 = vadd.f32 %v4161, %v4060
        %v4163 = vadd.f32 %v4162, %v4062
        %v4164 = vadd.f32 %v4163, %v4064
        %v4165 = vadd.f32 %v4164, %v4066
        %v4166 = vadd.f32 %v4165, %v4068
        %v4167 = vadd.f32 %v4166, %v4070
        %v4168 = vadd.f32 %v4167, %v4072
        %v4169 = vadd.f32 %v4168, %v4074
        %v4170 = vadd.f32 %v4169, %v4076
        %v4171 = vadd.f32 %v4170, %v4078
        %v4172 = vadd.f32 %v4171, %v4080
        %v4173 = vadd.f32 %v4172, %v4082
        %v4174 = vadd.f32 %v4173, %v4084
        %v4175 = vadd.f32 %v4174, %v4086
        %v4176 = vadd.f32 %v4175, %v4088
        %v4177 = vadd.f32 %v4176, %v4090
        %v4178 = vadd.f32 %v4177, %v4092
        %v4179 = vadd.f32 %v4178, %v4094
        %v4180 = vadd.f32 %v4179, %v4096
        %v4181 = vadd.f32 %v4180, %v4098
        %v4182 = vadd.f32 %v4181, %v4100
        %v4183 = vadd.f32 %v4182, %v4102
        %v4184 = vadd.f32 %v4183, %v4104
        %v4185 = vadd.f32 %v4184, %v4106
        %4186 = vadd.xlane.f32.xlu0 %v4185
        %v4187 = vpop.xlane.xlu0 %4186
        %v4188 = vadd.f32 %v3861, %v4187
        %vm4189 = vcmask 7168
        %4190 = vst.msk [vmem:[#allocation4] sm:$0xff] %vm4189, %v4188
        %4191 = vst.msk [vmem:[#allocation3] sm:$0xff] %vm4189, %v3856
        %p4192 = scmp.eq.s32.totalorder %s28, 3
        // Predicated region
        $region73: #{learner_forward.1} parent=47 // pred_check
          %p4193 = pneg %p4192
        $region74: #{learner_forward.1} parent=47 // pred_check_branch
          %4195 = sbr.rel (%p4193) target = $region76
        $region75: #{learner_forward.1} parent=47 // pred_region
          %v4196 = vld [vmem:[#allocation3] sm:$0xff]
          %v4197 = vld [vmem:[#allocation4] sm:$0xff]
          %v4198 = vlog2.pop %v4197
          %v4199 = vmul.f32 %v4198, 0.6931472
          %v4200 = vadd.f32 %v4196, %v4199
          %v4201 = vld [vmem:[#allocation5] sm:$0xff]
          %v4202 = vld [vmem:[#allocation5 + $0x8] sm:$0xff]
          %v4203 = vld [vmem:[#allocation5 + $0x10] sm:$0xff]
          %v4204 = vld [vmem:[#allocation5 + $0x18] sm:$0xff]
          %v4205 = vld [vmem:[#allocation5 + $0x20] sm:$0xff]
          %v4206 = vld [vmem:[#allocation5 + $0x28] sm:$0xff]
          %v4207 = vld [vmem:[#allocation5 + $0x30] sm:$0xff]
          %v4208 = vld [vmem:[#allocation5 + $0x38] sm:$0xff]
          %v4209 = vld [vmem:[#allocation5 + $0x40] sm:$0xff]
          %v4210 = vld [vmem:[#allocation5 + $0x48] sm:$0xff]
          %v4211 = vld [vmem:[#allocation5 + $0x50] sm:$0xff]
          %v4212 = vld [vmem:[#allocation5 + $0x58] sm:$0xff]
          %v4213 = vld [vmem:[#allocation5 + $0x60] sm:$0xff]
          %v4214 = vld [vmem:[#allocation5 + $0x68] sm:$0xff]
          %v4215 = vld [vmem:[#allocation5 + $0x70] sm:$0xff]
          %v4216 = vld [vmem:[#allocation5 + $0x78] sm:$0xff]
          %v4217 = vld [vmem:[#allocation5 + $0x80] sm:$0xff]
          %v4218 = vld [vmem:[#allocation5 + $0x88] sm:$0xff]
          %v4219 = vld [vmem:[#allocation5 + $0x90] sm:$0xff]
          %v4220 = vld [vmem:[#allocation5 + $0x98] sm:$0xff]
          %v4221 = vld [vmem:[#allocation5 + $0xa0] sm:$0xff]
          %v4222 = vld [vmem:[#allocation5 + $0xa8] sm:$0xff]
          %v4223 = vld [vmem:[#allocation5 + $0xb0] sm:$0xff]
          %v4224 = vld [vmem:[#allocation5 + $0xb8] sm:$0xff]
          %v4225 = vld [vmem:[#allocation5 + $0xc0] sm:$0xff]
          %v4226 = vld [vmem:[#allocation5 + $0xc8] sm:$0xff]
          %v4227 = vld [vmem:[#allocation5 + $0xd0] sm:$0xff]
          %v4228 = vld [vmem:[#allocation5 + $0xd8] sm:$0xff]
          %v4229 = vld [vmem:[#allocation5 + $0xe0] sm:$0xff]
          %v4230 = vld [vmem:[#allocation5 + $0xe8] sm:$0xff]
          %v4231 = vld [vmem:[#allocation5 + $0xf0] sm:$0xff]
          %v4232 = vld [vmem:[#allocation5 + $0xf8] sm:$0xff]
          %v4233 = vld [vmem:[#allocation5 + $0x100] sm:$0xff]
          %v4234 = vld [vmem:[#allocation5 + $0x108] sm:$0xff]
          %v4235 = vld [vmem:[#allocation5 + $0x110] sm:$0xff]
          %v4236 = vld [vmem:[#allocation5 + $0x118] sm:$0xff]
          %v4237 = vld [vmem:[#allocation5 + $0x120] sm:$0xff]
          %v4238 = vld [vmem:[#allocation5 + $0x128] sm:$0xff]
          %v4239 = vld [vmem:[#allocation5 + $0x130] sm:$0xff]
          %v4240 = vld [vmem:[#allocation5 + $0x138] sm:$0xff]
          %v4241 = vld [vmem:[#allocation5 + $0x140] sm:$0xff]
          %v4242 = vld [vmem:[#allocation5 + $0x148] sm:$0xff]
          %v4243 = vld [vmem:[#allocation5 + $0x150] sm:$0xff]
          %v4244 = vld [vmem:[#allocation5 + $0x158] sm:$0xff]
          %v4245 = vld [vmem:[#allocation5 + $0x160] sm:$0xff]
          %v4246 = vld [vmem:[#allocation5 + $0x168] sm:$0xff]
          %v4247 = vld [vmem:[#allocation5 + $0x170] sm:$0xff]
          %v4248 = vld [vmem:[#allocation5 + $0x178] sm:$0xff]
          %v4249 = vld [vmem:[#allocation5 + $0x180] sm:$0xff]
          %v4250 = vld [vmem:[#allocation5 + $0x188] sm:$0xff]
          %v4251 = vld [vmem:[#allocation5 + $0x190] sm:$0xff]
          %v4252 = vld [vmem:[#allocation5 + $0x198] sm:$0xff]
          %v4253 = vld [vmem:[#allocation5 + $0x1a0] sm:$0xff]
          %v4254 = vld [vmem:[#allocation5 + $0x1a8] sm:$0xff]
          %v4255 = vld [vmem:[#allocation5 + $0x1b0] sm:$0xff]
          %v4256 = vld [vmem:[#allocation5 + $0x1b8] sm:$0xff]
          %v4257 = vld [vmem:[#allocation5 + $0x1c0] sm:$0xff]
          %v4258 = vld [vmem:[#allocation5 + $0x1c8] sm:$0xff]
          %v4259 = vld [vmem:[#allocation5 + $0x1d0] sm:$0xff]
          %v4260 = vld [vmem:[#allocation5 + $0x1d8] sm:$0xff]
          %v4261 = vld [vmem:[#allocation5 + $0x1e0] sm:$0xff]
          %v4262 = vld [vmem:[#allocation5 + $0x1e8] sm:$0xff]
          %v4263 = vld [vmem:[#allocation5 + $0x1f0] sm:$0xff]
          %v4264 = vld [vmem:[#allocation5 + $0x1f8] sm:$0xff]
          %v4265 = vld [vmem:[#allocation5 + $0x200] sm:$0xff]
          %v4266 = vld [vmem:[#allocation5 + $0x208] sm:$0xff]
          %v4267 = vld [vmem:[#allocation5 + $0x210] sm:$0xff]
          %v4268 = vld [vmem:[#allocation5 + $0x218] sm:$0xff]
          %v4269 = vld [vmem:[#allocation5 + $0x220] sm:$0xff]
          %v4270 = vld [vmem:[#allocation5 + $0x228] sm:$0xff]
          %v4271 = vld [vmem:[#allocation5 + $0x230] sm:$0xff]
          %v4272 = vld [vmem:[#allocation5 + $0x238] sm:$0xff]
          %v4273 = vld [vmem:[#allocation5 + $0x240] sm:$0xff]
          %v4274 = vld [vmem:[#allocation5 + $0x248] sm:$0xff]
          %v4275 = vld [vmem:[#allocation5 + $0x250] sm:$0xff]
          %v4276 = vld [vmem:[#allocation5 + $0x258] sm:$0xff]
          %v4277 = vld [vmem:[#allocation5 + $0x260] sm:$0xff]
          %v4278 = vld [vmem:[#allocation5 + $0x268] sm:$0xff]
          %v4279 = vld [vmem:[#allocation5 + $0x270] sm:$0xff]
          %v4280 = vld [vmem:[#allocation5 + $0x278] sm:$0xff]
          %4282 = vset.pattern.permute.xlu0 0
          %4283 = vperm.xlu0 %4282, %v4200
          %v4284 = vpop.permute.xlu0 %4283
          %v4286 = vsub.f32 %v4201, %v4284
          %v4287 = vsub.f32 %v4202, %v4284
          %v4288 = vsub.f32 %v4203, %v4284
          %v4289 = vsub.f32 %v4204, %v4284
          %v4290 = vsub.f32 %v4205, %v4284
          %v4291 = vsub.f32 %v4206, %v4284
          %v4292 = vsub.f32 %v4207, %v4284
          %v4293 = vsub.f32 %v4208, %v4284
          %v4294 = vsub.f32 %v4209, %v4284
          %v4295 = vsub.f32 %v4210, %v4284
          %v4296 = vsub.f32 %v4211, %v4284
          %v4297 = vsub.f32 %v4212, %v4284
          %v4298 = vsub.f32 %v4213, %v4284
          %v4299 = vsub.f32 %v4214, %v4284
          %v4300 = vsub.f32 %v4215, %v4284
          %v4301 = vsub.f32 %v4216, %v4284
          %v4302 = vsub.f32 %v4217, %v4284
          %v4303 = vsub.f32 %v4218, %v4284
          %v4304 = vsub.f32 %v4219, %v4284
          %v4305 = vsub.f32 %v4220, %v4284
          %v4306 = vsub.f32 %v4221, %v4284
          %v4307 = vsub.f32 %v4222, %v4284
          %v4308 = vsub.f32 %v4223, %v4284
          %v4309 = vsub.f32 %v4224, %v4284
          %v4310 = vsub.f32 %v4225, %v4284
          %v4311 = vsub.f32 %v4226, %v4284
          %v4312 = vsub.f32 %v4227, %v4284
          %v4313 = vsub.f32 %v4228, %v4284
          %v4314 = vsub.f32 %v4229, %v4284
          %v4315 = vsub.f32 %v4230, %v4284
          %v4316 = vsub.f32 %v4231, %v4284
          %v4317 = vsub.f32 %v4232, %v4284
          %v4318 = vsub.f32 %v4233, %v4284
          %v4319 = vsub.f32 %v4234, %v4284
          %v4320 = vsub.f32 %v4235, %v4284
          %v4321 = vsub.f32 %v4236, %v4284
          %v4322 = vsub.f32 %v4237, %v4284
          %v4323 = vsub.f32 %v4238, %v4284
          %v4324 = vsub.f32 %v4239, %v4284
          %v4325 = vsub.f32 %v4240, %v4284
          %v4326 = vsub.f32 %v4241, %v4284
          %v4327 = vsub.f32 %v4242, %v4284
          %v4328 = vsub.f32 %v4243, %v4284
          %v4329 = vsub.f32 %v4244, %v4284
          %v4330 = vsub.f32 %v4245, %v4284
          %v4331 = vsub.f32 %v4246, %v4284
          %v4332 = vsub.f32 %v4247, %v4284
          %v4333 = vsub.f32 %v4248, %v4284
          %v4334 = vsub.f32 %v4249, %v4284
          %v4335 = vsub.f32 %v4250, %v4284
          %v4336 = vsub.f32 %v4251, %v4284
          %v4337 = vsub.f32 %v4252, %v4284
          %v4338 = vsub.f32 %v4253, %v4284
          %v4339 = vsub.f32 %v4254, %v4284
          %v4340 = vsub.f32 %v4255, %v4284
          %v4341 = vsub.f32 %v4256, %v4284
          %v4342 = vsub.f32 %v4257, %v4284
          %v4343 = vsub.f32 %v4258, %v4284
          %v4344 = vsub.f32 %v4259, %v4284
          %v4345 = vsub.f32 %v4260, %v4284
          %v4346 = vsub.f32 %v4261, %v4284
          %v4347 = vsub.f32 %v4262, %v4284
          %v4348 = vsub.f32 %v4263, %v4284
          %v4349 = vsub.f32 %v4264, %v4284
          %v4350 = vsub.f32 %v4265, %v4284
          %v4351 = vsub.f32 %v4266, %v4284
          %v4352 = vsub.f32 %v4267, %v4284
          %v4353 = vsub.f32 %v4268, %v4284
          %v4354 = vsub.f32 %v4269, %v4284
          %v4355 = vsub.f32 %v4270, %v4284
          %v4356 = vsub.f32 %v4271, %v4284
          %v4357 = vsub.f32 %v4272, %v4284
          %v4358 = vsub.f32 %v4273, %v4284
          %v4359 = vsub.f32 %v4274, %v4284
          %v4360 = vsub.f32 %v4275, %v4284
          %v4361 = vsub.f32 %v4276, %v4284
          %v4362 = vsub.f32 %v4277, %v4284
          %v4363 = vsub.f32 %v4278, %v4284
          %v4364 = vsub.f32 %v4279, %v4284
          %v4365 = vsub.f32 %v4280, %v4284
          %v4366 = vpack.c.bf16 %v4287, %v4286
          %v4367 = vpack.c.bf16 %v4289, %v4288
          %v4368 = vpack.c.bf16 %v4291, %v4290
          %v4369 = vpack.c.bf16 %v4293, %v4292
          %v4370 = vpack.c.bf16 %v4295, %v4294
          %v4371 = vpack.c.bf16 %v4297, %v4296
          %v4372 = vpack.c.bf16 %v4299, %v4298
          %v4373 = vpack.c.bf16 %v4301, %v4300
          %v4374 = vpack.c.bf16 %v4303, %v4302
          %v4375 = vpack.c.bf16 %v4305, %v4304
          %v4376 = vpack.c.bf16 %v4307, %v4306
          %v4377 = vpack.c.bf16 %v4309, %v4308
          %v4378 = vpack.c.bf16 %v4311, %v4310
          %v4379 = vpack.c.bf16 %v4313, %v4312
          %v4380 = vpack.c.bf16 %v4315, %v4314
          %v4381 = vpack.c.bf16 %v4317, %v4316
          %v4382 = vpack.c.bf16 %v4319, %v4318
          %v4383 = vpack.c.bf16 %v4321, %v4320
          %v4384 = vpack.c.bf16 %v4323, %v4322
          %v4385 = vpack.c.bf16 %v4325, %v4324
          %v4386 = vpack.c.bf16 %v4327, %v4326
          %v4387 = vpack.c.bf16 %v4329, %v4328
          %v4388 = vpack.c.bf16 %v4331, %v4330
          %v4389 = vpack.c.bf16 %v4333, %v4332
          %v4390 = vpack.c.bf16 %v4335, %v4334
          %v4391 = vpack.c.bf16 %v4337, %v4336
          %v4392 = vpack.c.bf16 %v4339, %v4338
          %v4393 = vpack.c.bf16 %v4341, %v4340
          %v4394 = vpack.c.bf16 %v4343, %v4342
          %v4395 = vpack.c.bf16 %v4345, %v4344
          %v4396 = vpack.c.bf16 %v4347, %v4346
          %v4397 = vpack.c.bf16 %v4349, %v4348
          %v4398 = vpack.c.bf16 %v4351, %v4350
          %v4399 = vpack.c.bf16 %v4353, %v4352
          %v4400 = vpack.c.bf16 %v4355, %v4354
          %v4401 = vpack.c.bf16 %v4357, %v4356
          %v4402 = vpack.c.bf16 %v4359, %v4358
          %v4403 = vpack.c.bf16 %v4361, %v4360
          %v4404 = vpack.c.bf16 %v4363, %v4362
          %v4405 = vpack.c.bf16 %v4365, %v4364
          %4406 = vst [vmem:[%s413] sm:$0xff] %v4366
          %4407 = vst [vmem:[%s413 + $0x8] sm:$0xff] %v4367
          %4408 = vst [vmem:[%s413 + $0x10] sm:$0xff] %v4368
          %4409 = vst [vmem:[%s413 + $0x18] sm:$0xff] %v4369
          %4410 = vst [vmem:[%s413 + $0x20] sm:$0xff] %v4370
          %4411 = vst [vmem:[%s413 + $0x28] sm:$0xff] %v4371
          %4412 = vst [vmem:[%s413 + $0x30] sm:$0xff] %v4372
          %4413 = vst [vmem:[%s413 + $0x38] sm:$0xff] %v4373
          %4414 = vst [vmem:[%s413 + $0x40] sm:$0xff] %v4374
          %4415 = vst [vmem:[%s413 + $0x48] sm:$0xff] %v4375
          %4416 = vst [vmem:[%s413 + $0x50] sm:$0xff] %v4376
          %4417 = vst [vmem:[%s413 + $0x58] sm:$0xff] %v4377
          %4418 = vst [vmem:[%s413 + $0x60] sm:$0xff] %v4378
          %4419 = vst [vmem:[%s413 + $0x68] sm:$0xff] %v4379
          %4420 = vst [vmem:[%s413 + $0x70] sm:$0xff] %v4380
          %4421 = vst [vmem:[%s413 + $0x78] sm:$0xff] %v4381
          %4422 = vst [vmem:[%s413 + $0x80] sm:$0xff] %v4382
          %4423 = vst [vmem:[%s413 + $0x88] sm:$0xff] %v4383
          %4424 = vst [vmem:[%s413 + $0x90] sm:$0xff] %v4384
          %4425 = vst [vmem:[%s413 + $0x98] sm:$0xff] %v4385
          %4426 = vst [vmem:[%s413 + $0xa0] sm:$0xff] %v4386
          %4427 = vst [vmem:[%s413 + $0xa8] sm:$0xff] %v4387
          %4428 = vst [vmem:[%s413 + $0xb0] sm:$0xff] %v4388
          %4429 = vst [vmem:[%s413 + $0xb8] sm:$0xff] %v4389
          %4430 = vst [vmem:[%s413 + $0xc0] sm:$0xff] %v4390
          %4431 = vst [vmem:[%s413 + $0xc8] sm:$0xff] %v4391
          %4432 = vst [vmem:[%s413 + $0xd0] sm:$0xff] %v4392
          %4433 = vst [vmem:[%s413 + $0xd8] sm:$0xff] %v4393
          %4434 = vst [vmem:[%s413 + $0xe0] sm:$0xff] %v4394
          %4435 = vst [vmem:[%s413 + $0xe8] sm:$0xff] %v4395
          %4436 = vst [vmem:[%s413 + $0xf0] sm:$0xff] %v4396
          %4437 = vst [vmem:[%s413 + $0xf8] sm:$0xff] %v4397
          %4438 = vst [vmem:[%s413 + $0x100] sm:$0xff] %v4398
          %4439 = vst [vmem:[%s413 + $0x108] sm:$0xff] %v4399
          %4440 = vst [vmem:[%s413 + $0x110] sm:$0xff] %v4400
          %4441 = vst [vmem:[%s413 + $0x118] sm:$0xff] %v4401
          %4442 = vst [vmem:[%s413 + $0x120] sm:$0xff] %v4402
          %4443 = vst [vmem:[%s413 + $0x128] sm:$0xff] %v4403
          %4444 = vst [vmem:[%s413 + $0x130] sm:$0xff] %v4404
          %4445 = vst [vmem:[%s413 + $0x138] sm:$0xff] %v4405
          %s4446 = scalar_lea.vmem [#allocation5], 640
          %v4447 = vld [vmem:[%s4446] sm:$0xff]
          %v4448 = vld [vmem:[%s4446 + $0x8] sm:$0xff]
          %v4449 = vld [vmem:[%s4446 + $0x10] sm:$0xff]
          %v4450 = vld [vmem:[%s4446 + $0x18] sm:$0xff]
          %v4451 = vld [vmem:[%s4446 + $0x20] sm:$0xff]
          %v4452 = vld [vmem:[%s4446 + $0x28] sm:$0xff]
          %v4453 = vld [vmem:[%s4446 + $0x30] sm:$0xff]
          %v4454 = vld [vmem:[%s4446 + $0x38] sm:$0xff]
          %v4455 = vld [vmem:[%s4446 + $0x40] sm:$0xff]
          %v4456 = vld [vmem:[%s4446 + $0x48] sm:$0xff]
          %v4457 = vld [vmem:[%s4446 + $0x50] sm:$0xff]
          %v4458 = vld [vmem:[%s4446 + $0x58] sm:$0xff]
          %v4459 = vld [vmem:[%s4446 + $0x60] sm:$0xff]
          %v4460 = vld [vmem:[%s4446 + $0x68] sm:$0xff]
          %v4461 = vld [vmem:[%s4446 + $0x70] sm:$0xff]
          %v4462 = vld [vmem:[%s4446 + $0x78] sm:$0xff]
          %v4463 = vld [vmem:[%s4446 + $0x80] sm:$0xff]
          %v4464 = vld [vmem:[%s4446 + $0x88] sm:$0xff]
          %v4465 = vld [vmem:[%s4446 + $0x90] sm:$0xff]
          %v4466 = vld [vmem:[%s4446 + $0x98] sm:$0xff]
          %v4467 = vld [vmem:[%s4446 + $0xa0] sm:$0xff]
          %v4468 = vld [vmem:[%s4446 + $0xa8] sm:$0xff]
          %v4469 = vld [vmem:[%s4446 + $0xb0] sm:$0xff]
          %v4470 = vld [vmem:[%s4446 + $0xb8] sm:$0xff]
          %v4471 = vld [vmem:[%s4446 + $0xc0] sm:$0xff]
          %v4472 = vld [vmem:[%s4446 + $0xc8] sm:$0xff]
          %v4473 = vld [vmem:[%s4446 + $0xd0] sm:$0xff]
          %v4474 = vld [vmem:[%s4446 + $0xd8] sm:$0xff]
          %v4475 = vld [vmem:[%s4446 + $0xe0] sm:$0xff]
          %v4476 = vld [vmem:[%s4446 + $0xe8] sm:$0xff]
          %v4477 = vld [vmem:[%s4446 + $0xf0] sm:$0xff]
          %v4478 = vld [vmem:[%s4446 + $0xf8] sm:$0xff]
          %v4479 = vld [vmem:[%s4446 + $0x100] sm:$0xff]
          %v4480 = vld [vmem:[%s4446 + $0x108] sm:$0xff]
          %v4481 = vld [vmem:[%s4446 + $0x110] sm:$0xff]
          %v4482 = vld [vmem:[%s4446 + $0x118] sm:$0xff]
          %v4483 = vld [vmem:[%s4446 + $0x120] sm:$0xff]
          %v4484 = vld [vmem:[%s4446 + $0x128] sm:$0xff]
          %v4485 = vld [vmem:[%s4446 + $0x130] sm:$0xff]
          %v4486 = vld [vmem:[%s4446 + $0x138] sm:$0xff]
          %v4487 = vld [vmem:[%s4446 + $0x140] sm:$0xff]
          %v4488 = vld [vmem:[%s4446 + $0x148] sm:$0xff]
          %v4489 = vld [vmem:[%s4446 + $0x150] sm:$0xff]
          %v4490 = vld [vmem:[%s4446 + $0x158] sm:$0xff]
          %v4491 = vld [vmem:[%s4446 + $0x160] sm:$0xff]
          %v4492 = vld [vmem:[%s4446 + $0x168] sm:$0xff]
          %v4493 = vld [vmem:[%s4446 + $0x170] sm:$0xff]
          %v4494 = vld [vmem:[%s4446 + $0x178] sm:$0xff]
          %v4495 = vld [vmem:[%s4446 + $0x180] sm:$0xff]
          %v4496 = vld [vmem:[%s4446 + $0x188] sm:$0xff]
          %v4497 = vld [vmem:[%s4446 + $0x190] sm:$0xff]
          %v4498 = vld [vmem:[%s4446 + $0x198] sm:$0xff]
          %v4499 = vld [vmem:[%s4446 + $0x1a0] sm:$0xff]
          %v4500 = vld [vmem:[%s4446 + $0x1a8] sm:$0xff]
          %v4501 = vld [vmem:[%s4446 + $0x1b0] sm:$0xff]
          %v4502 = vld [vmem:[%s4446 + $0x1b8] sm:$0xff]
          %v4503 = vld [vmem:[%s4446 + $0x1c0] sm:$0xff]
          %v4504 = vld [vmem:[%s4446 + $0x1c8] sm:$0xff]
          %v4505 = vld [vmem:[%s4446 + $0x1d0] sm:$0xff]
          %v4506 = vld [vmem:[%s4446 + $0x1d8] sm:$0xff]
          %v4507 = vld [vmem:[%s4446 + $0x1e0] sm:$0xff]
          %v4508 = vld [vmem:[%s4446 + $0x1e8] sm:$0xff]
          %v4509 = vld [vmem:[%s4446 + $0x1f0] sm:$0xff]
          %v4510 = vld [vmem:[%s4446 + $0x1f8] sm:$0xff]
          %v4511 = vld [vmem:[%s4446 + $0x200] sm:$0xff]
          %v4512 = vld [vmem:[%s4446 + $0x208] sm:$0xff]
          %v4513 = vld [vmem:[%s4446 + $0x210] sm:$0xff]
          %v4514 = vld [vmem:[%s4446 + $0x218] sm:$0xff]
          %v4515 = vld [vmem:[%s4446 + $0x220] sm:$0xff]
          %v4516 = vld [vmem:[%s4446 + $0x228] sm:$0xff]
          %v4517 = vld [vmem:[%s4446 + $0x230] sm:$0xff]
          %v4518 = vld [vmem:[%s4446 + $0x238] sm:$0xff]
          %v4519 = vld [vmem:[%s4446 + $0x240] sm:$0xff]
          %v4520 = vld [vmem:[%s4446 + $0x248] sm:$0xff]
          %v4521 = vld [vmem:[%s4446 + $0x250] sm:$0xff]
          %v4522 = vld [vmem:[%s4446 + $0x258] sm:$0xff]
          %v4523 = vld [vmem:[%s4446 + $0x260] sm:$0xff]
          %v4524 = vld [vmem:[%s4446 + $0x268] sm:$0xff]
          %v4525 = vld [vmem:[%s4446 + $0x270] sm:$0xff]
          %v4526 = vld [vmem:[%s4446 + $0x278] sm:$0xff]
          %v4527 = vsub.f32 %v4447, %v4284
          %v4528 = vsub.f32 %v4448, %v4284
          %v4529 = vsub.f32 %v4449, %v4284
          %v4530 = vsub.f32 %v4450, %v4284
          %v4531 = vsub.f32 %v4451, %v4284
          %v4532 = vsub.f32 %v4452, %v4284
          %v4533 = vsub.f32 %v4453, %v4284
          %v4534 = vsub.f32 %v4454, %v4284
          %v4535 = vsub.f32 %v4455, %v4284
          %v4536 = vsub.f32 %v4456, %v4284
          %v4537 = vsub.f32 %v4457, %v4284
          %v4538 = vsub.f32 %v4458, %v4284
          %v4539 = vsub.f32 %v4459, %v4284
          %v4540 = vsub.f32 %v4460, %v4284
          %v4541 = vsub.f32 %v4461, %v4284
          %v4542 = vsub.f32 %v4462, %v4284
          %v4543 = vsub.f32 %v4463, %v4284
          %v4544 = vsub.f32 %v4464, %v4284
          %v4545 = vsub.f32 %v4465, %v4284
          %v4546 = vsub.f32 %v4466, %v4284
          %v4547 = vsub.f32 %v4467, %v4284
          %v4548 = vsub.f32 %v4468, %v4284
          %v4549 = vsub.f32 %v4469, %v4284
          %v4550 = vsub.f32 %v4470, %v4284
          %v4551 = vsub.f32 %v4471, %v4284
          %v4552 = vsub.f32 %v4472, %v4284
          %v4553 = vsub.f32 %v4473, %v4284
          %v4554 = vsub.f32 %v4474, %v4284
          %v4555 = vsub.f32 %v4475, %v4284
          %v4556 = vsub.f32 %v4476, %v4284
          %v4557 = vsub.f32 %v4477, %v4284
          %v4558 = vsub.f32 %v4478, %v4284
          %v4559 = vsub.f32 %v4479, %v4284
          %v4560 = vsub.f32 %v4480, %v4284
          %v4561 = vsub.f32 %v4481, %v4284
          %v4562 = vsub.f32 %v4482, %v4284
          %v4563 = vsub.f32 %v4483, %v4284
          %v4564 = vsub.f32 %v4484, %v4284
          %v4565 = vsub.f32 %v4485, %v4284
          %v4566 = vsub.f32 %v4486, %v4284
          %v4567 = vsub.f32 %v4487, %v4284
          %v4568 = vsub.f32 %v4488, %v4284
          %v4569 = vsub.f32 %v4489, %v4284
          %v4570 = vsub.f32 %v4490, %v4284
          %v4571 = vsub.f32 %v4491, %v4284
          %v4572 = vsub.f32 %v4492, %v4284
          %v4573 = vsub.f32 %v4493, %v4284
          %v4574 = vsub.f32 %v4494, %v4284
          %v4575 = vsub.f32 %v4495, %v4284
          %v4576 = vsub.f32 %v4496, %v4284
          %v4577 = vsub.f32 %v4497, %v4284
          %v4578 = vsub.f32 %v4498, %v4284
          %v4579 = vsub.f32 %v4499, %v4284
          %v4580 = vsub.f32 %v4500, %v4284
          %v4581 = vsub.f32 %v4501, %v4284
          %v4582 = vsub.f32 %v4502, %v4284
          %v4583 = vsub.f32 %v4503, %v4284
          %v4584 = vsub.f32 %v4504, %v4284
          %v4585 = vsub.f32 %v4505, %v4284
          %v4586 = vsub.f32 %v4506, %v4284
          %v4587 = vsub.f32 %v4507, %v4284
          %v4588 = vsub.f32 %v4508, %v4284
          %v4589 = vsub.f32 %v4509, %v4284
          %v4590 = vsub.f32 %v4510, %v4284
          %v4591 = vsub.f32 %v4511, %v4284
          %v4592 = vsub.f32 %v4512, %v4284
          %v4593 = vsub.f32 %v4513, %v4284
          %v4594 = vsub.f32 %v4514, %v4284
          %v4595 = vsub.f32 %v4515, %v4284
          %v4596 = vsub.f32 %v4516, %v4284
          %v4597 = vsub.f32 %v4517, %v4284
          %v4598 = vsub.f32 %v4518, %v4284
          %v4599 = vsub.f32 %v4519, %v4284
          %v4600 = vsub.f32 %v4520, %v4284
          %v4601 = vsub.f32 %v4521, %v4284
          %v4602 = vsub.f32 %v4522, %v4284
          %v4603 = vsub.f32 %v4523, %v4284
          %v4604 = vsub.f32 %v4524, %v4284
          %v4605 = vsub.f32 %v4525, %v4284
          %v4606 = vsub.f32 %v4526, %v4284
          %v4607 = vpack.c.bf16 %v4528, %v4527
          %v4608 = vpack.c.bf16 %v4530, %v4529
          %v4609 = vpack.c.bf16 %v4532, %v4531
          %v4610 = vpack.c.bf16 %v4534, %v4533
          %v4611 = vpack.c.bf16 %v4536, %v4535
          %v4612 = vpack.c.bf16 %v4538, %v4537
          %v4613 = vpack.c.bf16 %v4540, %v4539
          %v4614 = vpack.c.bf16 %v4542, %v4541
          %v4615 = vpack.c.bf16 %v4544, %v4543
          %v4616 = vpack.c.bf16 %v4546, %v4545
          %v4617 = vpack.c.bf16 %v4548, %v4547
          %v4618 = vpack.c.bf16 %v4550, %v4549
          %v4619 = vpack.c.bf16 %v4552, %v4551
          %v4620 = vpack.c.bf16 %v4554, %v4553
          %v4621 = vpack.c.bf16 %v4556, %v4555
          %v4622 = vpack.c.bf16 %v4558, %v4557
          %v4623 = vpack.c.bf16 %v4560, %v4559
          %v4624 = vpack.c.bf16 %v4562, %v4561
          %v4625 = vpack.c.bf16 %v4564, %v4563
          %v4626 = vpack.c.bf16 %v4566, %v4565
          %v4627 = vpack.c.bf16 %v4568, %v4567
          %v4628 = vpack.c.bf16 %v4570, %v4569
          %v4629 = vpack.c.bf16 %v4572, %v4571
          %v4630 = vpack.c.bf16 %v4574, %v4573
          %v4631 = vpack.c.bf16 %v4576, %v4575
          %v4632 = vpack.c.bf16 %v4578, %v4577
          %v4633 = vpack.c.bf16 %v4580, %v4579
          %v4634 = vpack.c.bf16 %v4582, %v4581
          %v4635 = vpack.c.bf16 %v4584, %v4583
          %v4636 = vpack.c.bf16 %v4586, %v4585
          %v4637 = vpack.c.bf16 %v4588, %v4587
          %v4638 = vpack.c.bf16 %v4590, %v4589
          %v4639 = vpack.c.bf16 %v4592, %v4591
          %v4640 = vpack.c.bf16 %v4594, %v4593
          %v4641 = vpack.c.bf16 %v4596, %v4595
          %v4642 = vpack.c.bf16 %v4598, %v4597
          %v4643 = vpack.c.bf16 %v4600, %v4599
          %v4644 = vpack.c.bf16 %v4602, %v4601
          %v4645 = vpack.c.bf16 %v4604, %v4603
          %v4646 = vpack.c.bf16 %v4606, %v4605
          %4647 = vst [vmem:[%s413 + $0x140] sm:$0xff] %v4607
          %4648 = vst [vmem:[%s413 + $0x148] sm:$0xff] %v4608
          %4649 = vst [vmem:[%s413 + $0x150] sm:$0xff] %v4609
          %4650 = vst [vmem:[%s413 + $0x158] sm:$0xff] %v4610
          %4651 = vst [vmem:[%s413 + $0x160] sm:$0xff] %v4611
          %4652 = vst [vmem:[%s413 + $0x168] sm:$0xff] %v4612
          %4653 = vst [vmem:[%s413 + $0x170] sm:$0xff] %v4613
          %4654 = vst [vmem:[%s413 + $0x178] sm:$0xff] %v4614
          %4655 = vst [vmem:[%s413 + $0x180] sm:$0xff] %v4615
          %4656 = vst [vmem:[%s413 + $0x188] sm:$0xff] %v4616
          %4657 = vst [vmem:[%s413 + $0x190] sm:$0xff] %v4617
          %4658 = vst [vmem:[%s413 + $0x198] sm:$0xff] %v4618
          %4659 = vst [vmem:[%s413 + $0x1a0] sm:$0xff] %v4619
          %4660 = vst [vmem:[%s413 + $0x1a8] sm:$0xff] %v4620
          %4661 = vst [vmem:[%s413 + $0x1b0] sm:$0xff] %v4621
          %4662 = vst [vmem:[%s413 + $0x1b8] sm:$0xff] %v4622
          %4663 = vst [vmem:[%s413 + $0x1c0] sm:$0xff] %v4623
          %4664 = vst [vmem:[%s413 + $0x1c8] sm:$0xff] %v4624
          %4665 = vst [vmem:[%s413 + $0x1d0] sm:$0xff] %v4625
          %4666 = vst [vmem:[%s413 + $0x1d8] sm:$0xff] %v4626
          %4667 = vst [vmem:[%s413 + $0x1e0] sm:$0xff] %v4627
          %4668 = vst [vmem:[%s413 + $0x1e8] sm:$0xff] %v4628
          %4669 = vst [vmem:[%s413 + $0x1f0] sm:$0xff] %v4629
          %4670 = vst [vmem:[%s413 + $0x1f8] sm:$0xff] %v4630
          %4671 = vst [vmem:[%s413 + $0x200] sm:$0xff] %v4631
          %4672 = vst [vmem:[%s413 + $0x208] sm:$0xff] %v4632
          %4673 = vst [vmem:[%s413 + $0x210] sm:$0xff] %v4633
          %4674 = vst [vmem:[%s413 + $0x218] sm:$0xff] %v4634
          %4675 = vst [vmem:[%s413 + $0x220] sm:$0xff] %v4635
          %4676 = vst [vmem:[%s413 + $0x228] sm:$0xff] %v4636
          %4677 = vst [vmem:[%s413 + $0x230] sm:$0xff] %v4637
          %4678 = vst [vmem:[%s413 + $0x238] sm:$0xff] %v4638
          %4679 = vst [vmem:[%s413 + $0x240] sm:$0xff] %v4639
          %4680 = vst [vmem:[%s413 + $0x248] sm:$0xff] %v4640
          %4681 = vst [vmem:[%s413 + $0x250] sm:$0xff] %v4641
          %4682 = vst [vmem:[%s413 + $0x258] sm:$0xff] %v4642
          %4683 = vst [vmem:[%s413 + $0x260] sm:$0xff] %v4643
          %4684 = vst [vmem:[%s413 + $0x268] sm:$0xff] %v4644
          %4685 = vst [vmem:[%s413 + $0x270] sm:$0xff] %v4645
          %4686 = vst [vmem:[%s413 + $0x278] sm:$0xff] %v4646
          %s4687 = scalar_lea.vmem [#allocation5], 1280
          %v4688 = vld [vmem:[%s4687] sm:$0xff]
          %v4689 = vld [vmem:[%s4687 + $0x8] sm:$0xff]
          %v4690 = vld [vmem:[%s4687 + $0x10] sm:$0xff]
          %v4691 = vld [vmem:[%s4687 + $0x18] sm:$0xff]
          %v4692 = vld [vmem:[%s4687 + $0x20] sm:$0xff]
          %v4693 = vld [vmem:[%s4687 + $0x28] sm:$0xff]
          %v4694 = vld [vmem:[%s4687 + $0x30] sm:$0xff]
          %v4695 = vld [vmem:[%s4687 + $0x38] sm:$0xff]
          %v4696 = vld [vmem:[%s4687 + $0x40] sm:$0xff]
          %v4697 = vld [vmem:[%s4687 + $0x48] sm:$0xff]
          %v4698 = vld [vmem:[%s4687 + $0x50] sm:$0xff]
          %v4699 = vld [vmem:[%s4687 + $0x58] sm:$0xff]
          %v4700 = vld [vmem:[%s4687 + $0x60] sm:$0xff]
          %v4701 = vld [vmem:[%s4687 + $0x68] sm:$0xff]
          %v4702 = vld [vmem:[%s4687 + $0x70] sm:$0xff]
          %v4703 = vld [vmem:[%s4687 + $0x78] sm:$0xff]
          %v4704 = vld [vmem:[%s4687 + $0x80] sm:$0xff]
          %v4705 = vld [vmem:[%s4687 + $0x88] sm:$0xff]
          %v4706 = vld [vmem:[%s4687 + $0x90] sm:$0xff]
          %v4707 = vld [vmem:[%s4687 + $0x98] sm:$0xff]
          %v4708 = vld [vmem:[%s4687 + $0xa0] sm:$0xff]
          %v4709 = vld [vmem:[%s4687 + $0xa8] sm:$0xff]
          %v4710 = vld [vmem:[%s4687 + $0xb0] sm:$0xff]
          %v4711 = vld [vmem:[%s4687 + $0xb8] sm:$0xff]
          %v4712 = vld [vmem:[%s4687 + $0xc0] sm:$0xff]
          %v4713 = vld [vmem:[%s4687 + $0xc8] sm:$0xff]
          %v4714 = vld [vmem:[%s4687 + $0xd0] sm:$0xff]
          %v4715 = vld [vmem:[%s4687 + $0xd8] sm:$0xff]
          %v4716 = vld [vmem:[%s4687 + $0xe0] sm:$0xff]
          %v4717 = vld [vmem:[%s4687 + $0xe8] sm:$0xff]
          %v4718 = vld [vmem:[%s4687 + $0xf0] sm:$0xff]
          %v4719 = vld [vmem:[%s4687 + $0xf8] sm:$0xff]
          %v4720 = vld [vmem:[%s4687 + $0x100] sm:$0xff]
          %v4721 = vld [vmem:[%s4687 + $0x108] sm:$0xff]
          %v4722 = vld [vmem:[%s4687 + $0x110] sm:$0xff]
          %v4723 = vld [vmem:[%s4687 + $0x118] sm:$0xff]
          %v4724 = vld [vmem:[%s4687 + $0x120] sm:$0xff]
          %v4725 = vld [vmem:[%s4687 + $0x128] sm:$0xff]
          %v4726 = vld [vmem:[%s4687 + $0x130] sm:$0xff]
          %v4727 = vld [vmem:[%s4687 + $0x138] sm:$0xff]
          %v4728 = vld [vmem:[%s4687 + $0x140] sm:$0xff]
          %v4729 = vld [vmem:[%s4687 + $0x148] sm:$0xff]
          %v4730 = vld [vmem:[%s4687 + $0x150] sm:$0xff]
          %v4731 = vld [vmem:[%s4687 + $0x158] sm:$0xff]
          %v4732 = vld [vmem:[%s4687 + $0x160] sm:$0xff]
          %v4733 = vld [vmem:[%s4687 + $0x168] sm:$0xff]
          %v4734 = vld [vmem:[%s4687 + $0x170] sm:$0xff]
          %v4735 = vld [vmem:[%s4687 + $0x178] sm:$0xff]
          %v4736 = vld [vmem:[%s4687 + $0x180] sm:$0xff]
          %v4737 = vld [vmem:[%s4687 + $0x188] sm:$0xff]
          %v4738 = vld [vmem:[%s4687 + $0x190] sm:$0xff]
          %v4739 = vld [vmem:[%s4687 + $0x198] sm:$0xff]
          %v4740 = vld [vmem:[%s4687 + $0x1a0] sm:$0xff]
          %v4741 = vld [vmem:[%s4687 + $0x1a8] sm:$0xff]
          %v4742 = vld [vmem:[%s4687 + $0x1b0] sm:$0xff]
          %v4743 = vld [vmem:[%s4687 + $0x1b8] sm:$0xff]
          %v4744 = vld [vmem:[%s4687 + $0x1c0] sm:$0xff]
          %v4745 = vld [vmem:[%s4687 + $0x1c8] sm:$0xff]
          %v4746 = vld [vmem:[%s4687 + $0x1d0] sm:$0xff]
          %v4747 = vld [vmem:[%s4687 + $0x1d8] sm:$0xff]
          %v4748 = vld [vmem:[%s4687 + $0x1e0] sm:$0xff]
          %v4749 = vld [vmem:[%s4687 + $0x1e8] sm:$0xff]
          %v4750 = vld [vmem:[%s4687 + $0x1f0] sm:$0xff]
          %v4751 = vld [vmem:[%s4687 + $0x1f8] sm:$0xff]
          %v4752 = vld [vmem:[%s4687 + $0x200] sm:$0xff]
          %v4753 = vld [vmem:[%s4687 + $0x208] sm:$0xff]
          %v4754 = vld [vmem:[%s4687 + $0x210] sm:$0xff]
          %v4755 = vld [vmem:[%s4687 + $0x218] sm:$0xff]
          %v4756 = vld [vmem:[%s4687 + $0x220] sm:$0xff]
          %v4757 = vld [vmem:[%s4687 + $0x228] sm:$0xff]
          %v4758 = vld [vmem:[%s4687 + $0x230] sm:$0xff]
          %v4759 = vld [vmem:[%s4687 + $0x238] sm:$0xff]
          %v4760 = vld [vmem:[%s4687 + $0x240] sm:$0xff]
          %v4761 = vld [vmem:[%s4687 + $0x248] sm:$0xff]
          %v4762 = vld [vmem:[%s4687 + $0x250] sm:$0xff]
          %v4763 = vld [vmem:[%s4687 + $0x258] sm:$0xff]
          %v4764 = vld [vmem:[%s4687 + $0x260] sm:$0xff]
          %v4765 = vld [vmem:[%s4687 + $0x268] sm:$0xff]
          %v4766 = vld [vmem:[%s4687 + $0x270] sm:$0xff]
          %v4767 = vld [vmem:[%s4687 + $0x278] sm:$0xff]
          %v4768 = vsub.f32 %v4688, %v4284
          %v4769 = vsub.f32 %v4689, %v4284
          %v4770 = vsub.f32 %v4690, %v4284
          %v4771 = vsub.f32 %v4691, %v4284
          %v4772 = vsub.f32 %v4692, %v4284
          %v4773 = vsub.f32 %v4693, %v4284
          %v4774 = vsub.f32 %v4694, %v4284
          %v4775 = vsub.f32 %v4695, %v4284
          %v4776 = vsub.f32 %v4696, %v4284
          %v4777 = vsub.f32 %v4697, %v4284
          %v4778 = vsub.f32 %v4698, %v4284
          %v4779 = vsub.f32 %v4699, %v4284
          %v4780 = vsub.f32 %v4700, %v4284
          %v4781 = vsub.f32 %v4701, %v4284
          %v4782 = vsub.f32 %v4702, %v4284
          %v4783 = vsub.f32 %v4703, %v4284
          %v4784 = vsub.f32 %v4704, %v4284
          %v4785 = vsub.f32 %v4705, %v4284
          %v4786 = vsub.f32 %v4706, %v4284
          %v4787 = vsub.f32 %v4707, %v4284
          %v4788 = vsub.f32 %v4708, %v4284
          %v4789 = vsub.f32 %v4709, %v4284
          %v4790 = vsub.f32 %v4710, %v4284
          %v4791 = vsub.f32 %v4711, %v4284
          %v4792 = vsub.f32 %v4712, %v4284
          %v4793 = vsub.f32 %v4713, %v4284
          %v4794 = vsub.f32 %v4714, %v4284
          %v4795 = vsub.f32 %v4715, %v4284
          %v4796 = vsub.f32 %v4716, %v4284
          %v4797 = vsub.f32 %v4717, %v4284
          %v4798 = vsub.f32 %v4718, %v4284
          %v4799 = vsub.f32 %v4719, %v4284
          %v4800 = vsub.f32 %v4720, %v4284
          %v4801 = vsub.f32 %v4721, %v4284
          %v4802 = vsub.f32 %v4722, %v4284
          %v4803 = vsub.f32 %v4723, %v4284
          %v4804 = vsub.f32 %v4724, %v4284
          %v4805 = vsub.f32 %v4725, %v4284
          %v4806 = vsub.f32 %v4726, %v4284
          %v4807 = vsub.f32 %v4727, %v4284
          %v4808 = vsub.f32 %v4728, %v4284
          %v4809 = vsub.f32 %v4729, %v4284
          %v4810 = vsub.f32 %v4730, %v4284
          %v4811 = vsub.f32 %v4731, %v4284
          %v4812 = vsub.f32 %v4732, %v4284
          %v4813 = vsub.f32 %v4733, %v4284
          %v4814 = vsub.f32 %v4734, %v4284
          %v4815 = vsub.f32 %v4735, %v4284
          %v4816 = vsub.f32 %v4736, %v4284
          %v4817 = vsub.f32 %v4737, %v4284
          %v4818 = vsub.f32 %v4738, %v4284
          %v4819 = vsub.f32 %v4739, %v4284
          %v4820 = vsub.f32 %v4740, %v4284
          %v4821 = vsub.f32 %v4741, %v4284
          %v4822 = vsub.f32 %v4742, %v4284
          %v4823 = vsub.f32 %v4743, %v4284
          %v4824 = vsub.f32 %v4744, %v4284
          %v4825 = vsub.f32 %v4745, %v4284
          %v4826 = vsub.f32 %v4746, %v4284
          %v4827 = vsub.f32 %v4747, %v4284
          %v4828 = vsub.f32 %v4748, %v4284
          %v4829 = vsub.f32 %v4749, %v4284
          %v4830 = vsub.f32 %v4750, %v4284
          %v4831 = vsub.f32 %v4751, %v4284
          %v4832 = vsub.f32 %v4752, %v4284
          %v4833 = vsub.f32 %v4753, %v4284
          %v4834 = vsub.f32 %v4754, %v4284
          %v4835 = vsub.f32 %v4755, %v4284
          %v4836 = vsub.f32 %v4756, %v4284
          %v4837 = vsub.f32 %v4757, %v4284
          %v4838 = vsub.f32 %v4758, %v4284
          %v4839 = vsub.f32 %v4759, %v4284
          %v4840 = vsub.f32 %v4760, %v4284
          %v4841 = vsub.f32 %v4761, %v4284
          %v4842 = vsub.f32 %v4762, %v4284
          %v4843 = vsub.f32 %v4763, %v4284
          %v4844 = vsub.f32 %v4764, %v4284
          %v4845 = vsub.f32 %v4765, %v4284
          %v4846 = vsub.f32 %v4766, %v4284
          %v4847 = vsub.f32 %v4767, %v4284
          %v4848 = vpack.c.bf16 %v4769, %v4768
          %v4849 = vpack.c.bf16 %v4771, %v4770
          %v4850 = vpack.c.bf16 %v4773, %v4772
          %v4851 = vpack.c.bf16 %v4775, %v4774
          %v4852 = vpack.c.bf16 %v4777, %v4776
          %v4853 = vpack.c.bf16 %v4779, %v4778
          %v4854 = vpack.c.bf16 %v4781, %v4780
          %v4855 = vpack.c.bf16 %v4783, %v4782
          %v4856 = vpack.c.bf16 %v4785, %v4784
          %v4857 = vpack.c.bf16 %v4787, %v4786
          %v4858 = vpack.c.bf16 %v4789, %v4788
          %v4859 = vpack.c.bf16 %v4791, %v4790
          %v4860 = vpack.c.bf16 %v4793, %v4792
          %v4861 = vpack.c.bf16 %v4795, %v4794
          %v4862 = vpack.c.bf16 %v4797, %v4796
          %v4863 = vpack.c.bf16 %v4799, %v4798
          %v4864 = vpack.c.bf16 %v4801, %v4800
          %v4865 = vpack.c.bf16 %v4803, %v4802
          %v4866 = vpack.c.bf16 %v4805, %v4804
          %v4867 = vpack.c.bf16 %v4807, %v4806
          %v4868 = vpack.c.bf16 %v4809, %v4808
          %v4869 = vpack.c.bf16 %v4811, %v4810
          %v4870 = vpack.c.bf16 %v4813, %v4812
          %v4871 = vpack.c.bf16 %v4815, %v4814
          %v4872 = vpack.c.bf16 %v4817, %v4816
          %v4873 = vpack.c.bf16 %v4819, %v4818
          %v4874 = vpack.c.bf16 %v4821, %v4820
          %v4875 = vpack.c.bf16 %v4823, %v4822
          %v4876 = vpack.c.bf16 %v4825, %v4824
          %v4877 = vpack.c.bf16 %v4827, %v4826
          %v4878 = vpack.c.bf16 %v4829, %v4828
          %v4879 = vpack.c.bf16 %v4831, %v4830
          %v4880 = vpack.c.bf16 %v4833, %v4832
          %v4881 = vpack.c.bf16 %v4835, %v4834
          %v4882 = vpack.c.bf16 %v4837, %v4836
          %v4883 = vpack.c.bf16 %v4839, %v4838
          %v4884 = vpack.c.bf16 %v4841, %v4840
          %v4885 = vpack.c.bf16 %v4843, %v4842
          %v4886 = vpack.c.bf16 %v4845, %v4844
          %v4887 = vpack.c.bf16 %v4847, %v4846
          %4888 = vst [vmem:[%s413 + $0x280] sm:$0xff] %v4848
          %4889 = vst [vmem:[%s413 + $0x288] sm:$0xff] %v4849
          %4890 = vst [vmem:[%s413 + $0x290] sm:$0xff] %v4850
          %4891 = vst [vmem:[%s413 + $0x298] sm:$0xff] %v4851
          %4892 = vst [vmem:[%s413 + $0x2a0] sm:$0xff] %v4852
          %4893 = vst [vmem:[%s413 + $0x2a8] sm:$0xff] %v4853
          %4894 = vst [vmem:[%s413 + $0x2b0] sm:$0xff] %v4854
          %4895 = vst [vmem:[%s413 + $0x2b8] sm:$0xff] %v4855
          %4896 = vst [vmem:[%s413 + $0x2c0] sm:$0xff] %v4856
          %4897 = vst [vmem:[%s413 + $0x2c8] sm:$0xff] %v4857
          %4898 = vst [vmem:[%s413 + $0x2d0] sm:$0xff] %v4858
          %4899 = vst [vmem:[%s413 + $0x2d8] sm:$0xff] %v4859
          %4900 = vst [vmem:[%s413 + $0x2e0] sm:$0xff] %v4860
          %4901 = vst [vmem:[%s413 + $0x2e8] sm:$0xff] %v4861
          %4902 = vst [vmem:[%s413 + $0x2f0] sm:$0xff] %v4862
          %4903 = vst [vmem:[%s413 + $0x2f8] sm:$0xff] %v4863
          %4904 = vst [vmem:[%s413 + $0x300] sm:$0xff] %v4864
          %4905 = vst [vmem:[%s413 + $0x308] sm:$0xff] %v4865
          %4906 = vst [vmem:[%s413 + $0x310] sm:$0xff] %v4866
          %4907 = vst [vmem:[%s413 + $0x318] sm:$0xff] %v4867
          %4908 = vst [vmem:[%s413 + $0x320] sm:$0xff] %v4868
          %4909 = vst [vmem:[%s413 + $0x328] sm:$0xff] %v4869
          %4910 = vst [vmem:[%s413 + $0x330] sm:$0xff] %v4870
          %4911 = vst [vmem:[%s413 + $0x338] sm:$0xff] %v4871
          %4912 = vst [vmem:[%s413 + $0x340] sm:$0xff] %v4872
          %4913 = vst [vmem:[%s413 + $0x348] sm:$0xff] %v4873
          %4914 = vst [vmem:[%s413 + $0x350] sm:$0xff] %v4874
          %4915 = vst [vmem:[%s413 + $0x358] sm:$0xff] %v4875
          %4916 = vst [vmem:[%s413 + $0x360] sm:$0xff] %v4876
          %4917 = vst [vmem:[%s413 + $0x368] sm:$0xff] %v4877
          %4918 = vst [vmem:[%s413 + $0x370] sm:$0xff] %v4878
          %4919 = vst [vmem:[%s413 + $0x378] sm:$0xff] %v4879
          %4920 = vst [vmem:[%s413 + $0x380] sm:$0xff] %v4880
          %4921 = vst [vmem:[%s413 + $0x388] sm:$0xff] %v4881
          %4922 = vst [vmem:[%s413 + $0x390] sm:$0xff] %v4882
          %4923 = vst [vmem:[%s413 + $0x398] sm:$0xff] %v4883
          %4924 = vst [vmem:[%s413 + $0x3a0] sm:$0xff] %v4884
          %4925 = vst [vmem:[%s413 + $0x3a8] sm:$0xff] %v4885
          %4926 = vst [vmem:[%s413 + $0x3b0] sm:$0xff] %v4886
          %4927 = vst [vmem:[%s413 + $0x3b8] sm:$0xff] %v4887
          %s4928 = scalar_lea.vmem [#allocation5], 1920
          %v4929 = vld [vmem:[%s4928] sm:$0xff]
          %v4930 = vld [vmem:[%s4928 + $0x8] sm:$0xff]
          %v4931 = vld [vmem:[%s4928 + $0x10] sm:$0xff]
          %v4932 = vld [vmem:[%s4928 + $0x18] sm:$0xff]
          %v4933 = vld [vmem:[%s4928 + $0x20] sm:$0xff]
          %v4934 = vld [vmem:[%s4928 + $0x28] sm:$0xff]
          %v4935 = vld [vmem:[%s4928 + $0x30] sm:$0xff]
          %v4936 = vld [vmem:[%s4928 + $0x38] sm:$0xff]
          %v4937 = vld [vmem:[%s4928 + $0x40] sm:$0xff]
          %v4938 = vld [vmem:[%s4928 + $0x48] sm:$0xff]
          %v4939 = vld [vmem:[%s4928 + $0x50] sm:$0xff]
          %v4940 = vld [vmem:[%s4928 + $0x58] sm:$0xff]
          %v4941 = vld [vmem:[%s4928 + $0x60] sm:$0xff]
          %v4942 = vld [vmem:[%s4928 + $0x68] sm:$0xff]
          %v4943 = vld [vmem:[%s4928 + $0x70] sm:$0xff]
          %v4944 = vld [vmem:[%s4928 + $0x78] sm:$0xff]
          %v4945 = vld [vmem:[%s4928 + $0x80] sm:$0xff]
          %v4946 = vld [vmem:[%s4928 + $0x88] sm:$0xff]
          %v4947 = vld [vmem:[%s4928 + $0x90] sm:$0xff]
          %v4948 = vld [vmem:[%s4928 + $0x98] sm:$0xff]
          %v4949 = vld [vmem:[%s4928 + $0xa0] sm:$0xff]
          %v4950 = vld [vmem:[%s4928 + $0xa8] sm:$0xff]
          %v4951 = vld [vmem:[%s4928 + $0xb0] sm:$0xff]
          %v4952 = vld [vmem:[%s4928 + $0xb8] sm:$0xff]
          %v4953 = vld [vmem:[%s4928 + $0xc0] sm:$0xff]
          %v4954 = vld [vmem:[%s4928 + $0xc8] sm:$0xff]
          %v4955 = vld [vmem:[%s4928 + $0xd0] sm:$0xff]
          %v4956 = vld [vmem:[%s4928 + $0xd8] sm:$0xff]
          %v4957 = vld [vmem:[%s4928 + $0xe0] sm:$0xff]
          %v4958 = vld [vmem:[%s4928 + $0xe8] sm:$0xff]
          %v4959 = vld [vmem:[%s4928 + $0xf0] sm:$0xff]
          %v4960 = vld [vmem:[%s4928 + $0xf8] sm:$0xff]
          %v4961 = vld [vmem:[%s4928 + $0x100] sm:$0xff]
          %v4962 = vld [vmem:[%s4928 + $0x108] sm:$0xff]
          %v4963 = vld [vmem:[%s4928 + $0x110] sm:$0xff]
          %v4964 = vld [vmem:[%s4928 + $0x118] sm:$0xff]
          %v4965 = vld [vmem:[%s4928 + $0x120] sm:$0xff]
          %v4966 = vld [vmem:[%s4928 + $0x128] sm:$0xff]
          %v4967 = vld [vmem:[%s4928 + $0x130] sm:$0xff]
          %v4968 = vld [vmem:[%s4928 + $0x138] sm:$0xff]
          %v4969 = vld [vmem:[%s4928 + $0x140] sm:$0xff]
          %v4970 = vld [vmem:[%s4928 + $0x148] sm:$0xff]
          %v4971 = vld [vmem:[%s4928 + $0x150] sm:$0xff]
          %v4972 = vld [vmem:[%s4928 + $0x158] sm:$0xff]
          %v4973 = vld [vmem:[%s4928 + $0x160] sm:$0xff]
          %v4974 = vld [vmem:[%s4928 + $0x168] sm:$0xff]
          %v4975 = vld [vmem:[%s4928 + $0x170] sm:$0xff]
          %v4976 = vld [vmem:[%s4928 + $0x178] sm:$0xff]
          %v4977 = vld [vmem:[%s4928 + $0x180] sm:$0xff]
          %v4978 = vld [vmem:[%s4928 + $0x188] sm:$0xff]
          %v4979 = vld [vmem:[%s4928 + $0x190] sm:$0xff]
          %v4980 = vld [vmem:[%s4928 + $0x198] sm:$0xff]
          %v4981 = vld [vmem:[%s4928 + $0x1a0] sm:$0xff]
          %v4982 = vld [vmem:[%s4928 + $0x1a8] sm:$0xff]
          %v4983 = vld [vmem:[%s4928 + $0x1b0] sm:$0xff]
          %v4984 = vld [vmem:[%s4928 + $0x1b8] sm:$0xff]
          %v4985 = vld [vmem:[%s4928 + $0x1c0] sm:$0xff]
          %v4986 = vld [vmem:[%s4928 + $0x1c8] sm:$0xff]
          %v4987 = vld [vmem:[%s4928 + $0x1d0] sm:$0xff]
          %v4988 = vld [vmem:[%s4928 + $0x1d8] sm:$0xff]
          %v4989 = vld [vmem:[%s4928 + $0x1e0] sm:$0xff]
          %v4990 = vld [vmem:[%s4928 + $0x1e8] sm:$0xff]
          %v4991 = vld [vmem:[%s4928 + $0x1f0] sm:$0xff]
          %v4992 = vld [vmem:[%s4928 + $0x1f8] sm:$0xff]
          %v4993 = vld [vmem:[%s4928 + $0x200] sm:$0xff]
          %v4994 = vld [vmem:[%s4928 + $0x208] sm:$0xff]
          %v4995 = vld [vmem:[%s4928 + $0x210] sm:$0xff]
          %v4996 = vld [vmem:[%s4928 + $0x218] sm:$0xff]
          %v4997 = vld [vmem:[%s4928 + $0x220] sm:$0xff]
          %v4998 = vld [vmem:[%s4928 + $0x228] sm:$0xff]
          %v4999 = vld [vmem:[%s4928 + $0x230] sm:$0xff]
          %v5000 = vld [vmem:[%s4928 + $0x238] sm:$0xff]
          %v5001 = vld [vmem:[%s4928 + $0x240] sm:$0xff]
          %v5002 = vld [vmem:[%s4928 + $0x248] sm:$0xff]
          %v5003 = vld [vmem:[%s4928 + $0x250] sm:$0xff]
          %v5004 = vld [vmem:[%s4928 + $0x258] sm:$0xff]
          %v5005 = vld [vmem:[%s4928 + $0x260] sm:$0xff]
          %v5006 = vld [vmem:[%s4928 + $0x268] sm:$0xff]
          %v5007 = vld [vmem:[%s4928 + $0x270] sm:$0xff]
          %v5008 = vld [vmem:[%s4928 + $0x278] sm:$0xff]
          %v5009 = vsub.f32 %v4929, %v4284
          %v5010 = vsub.f32 %v4930, %v4284
          %v5011 = vsub.f32 %v4931, %v4284
          %v5012 = vsub.f32 %v4932, %v4284
          %v5013 = vsub.f32 %v4933, %v4284
          %v5014 = vsub.f32 %v4934, %v4284
          %v5015 = vsub.f32 %v4935, %v4284
          %v5016 = vsub.f32 %v4936, %v4284
          %v5017 = vsub.f32 %v4937, %v4284
          %v5018 = vsub.f32 %v4938, %v4284
          %v5019 = vsub.f32 %v4939, %v4284
          %v5020 = vsub.f32 %v4940, %v4284
          %v5021 = vsub.f32 %v4941, %v4284
          %v5022 = vsub.f32 %v4942, %v4284
          %v5023 = vsub.f32 %v4943, %v4284
          %v5024 = vsub.f32 %v4944, %v4284
          %v5025 = vsub.f32 %v4945, %v4284
          %v5026 = vsub.f32 %v4946, %v4284
          %v5027 = vsub.f32 %v4947, %v4284
          %v5028 = vsub.f32 %v4948, %v4284
          %v5029 = vsub.f32 %v4949, %v4284
          %v5030 = vsub.f32 %v4950, %v4284
          %v5031 = vsub.f32 %v4951, %v4284
          %v5032 = vsub.f32 %v4952, %v4284
          %v5033 = vsub.f32 %v4953, %v4284
          %v5034 = vsub.f32 %v4954, %v4284
          %v5035 = vsub.f32 %v4955, %v4284
          %v5036 = vsub.f32 %v4956, %v4284
          %v5037 = vsub.f32 %v4957, %v4284
          %v5038 = vsub.f32 %v4958, %v4284
          %v5039 = vsub.f32 %v4959, %v4284
          %v5040 = vsub.f32 %v4960, %v4284
          %v5041 = vsub.f32 %v4961, %v4284
          %v5042 = vsub.f32 %v4962, %v4284
          %v5043 = vsub.f32 %v4963, %v4284
          %v5044 = vsub.f32 %v4964, %v4284
          %v5045 = vsub.f32 %v4965, %v4284
          %v5046 = vsub.f32 %v4966, %v4284
          %v5047 = vsub.f32 %v4967, %v4284
          %v5048 = vsub.f32 %v4968, %v4284
          %v5049 = vsub.f32 %v4969, %v4284
          %v5050 = vsub.f32 %v4970, %v4284
          %v5051 = vsub.f32 %v4971, %v4284
          %v5052 = vsub.f32 %v4972, %v4284
          %v5053 = vsub.f32 %v4973, %v4284
          %v5054 = vsub.f32 %v4974, %v4284
          %v5055 = vsub.f32 %v4975, %v4284
          %v5056 = vsub.f32 %v4976, %v4284
          %v5057 = vsub.f32 %v4977, %v4284
          %v5058 = vsub.f32 %v4978, %v4284
          %v5059 = vsub.f32 %v4979, %v4284
          %v5060 = vsub.f32 %v4980, %v4284
          %v5061 = vsub.f32 %v4981, %v4284
          %v5062 = vsub.f32 %v4982, %v4284
          %v5063 = vsub.f32 %v4983, %v4284
          %v5064 = vsub.f32 %v4984, %v4284
          %v5065 = vsub.f32 %v4985, %v4284
          %v5066 = vsub.f32 %v4986, %v4284
          %v5067 = vsub.f32 %v4987, %v4284
          %v5068 = vsub.f32 %v4988, %v4284
          %v5069 = vsub.f32 %v4989, %v4284
          %v5070 = vsub.f32 %v4990, %v4284
          %v5071 = vsub.f32 %v4991, %v4284
          %v5072 = vsub.f32 %v4992, %v4284
          %v5073 = vsub.f32 %v4993, %v4284
          %v5074 = vsub.f32 %v4994, %v4284
          %v5075 = vsub.f32 %v4995, %v4284
          %v5076 = vsub.f32 %v4996, %v4284
          %v5077 = vsub.f32 %v4997, %v4284
          %v5078 = vsub.f32 %v4998, %v4284
          %v5079 = vsub.f32 %v4999, %v4284
          %v5080 = vsub.f32 %v5000, %v4284
          %v5081 = vsub.f32 %v5001, %v4284
          %v5082 = vsub.f32 %v5002, %v4284
          %v5083 = vsub.f32 %v5003, %v4284
          %v5084 = vsub.f32 %v5004, %v4284
          %v5085 = vsub.f32 %v5005, %v4284
          %v5086 = vsub.f32 %v5006, %v4284
          %v5087 = vsub.f32 %v5007, %v4284
          %v5088 = vsub.f32 %v5008, %v4284
          %v5089 = vpack.c.bf16 %v5010, %v5009
          %v5090 = vpack.c.bf16 %v5012, %v5011
          %v5091 = vpack.c.bf16 %v5014, %v5013
          %v5092 = vpack.c.bf16 %v5016, %v5015
          %v5093 = vpack.c.bf16 %v5018, %v5017
          %v5094 = vpack.c.bf16 %v5020, %v5019
          %v5095 = vpack.c.bf16 %v5022, %v5021
          %v5096 = vpack.c.bf16 %v5024, %v5023
          %v5097 = vpack.c.bf16 %v5026, %v5025
          %v5098 = vpack.c.bf16 %v5028, %v5027
          %v5099 = vpack.c.bf16 %v5030, %v5029
          %v5100 = vpack.c.bf16 %v5032, %v5031
          %v5101 = vpack.c.bf16 %v5034, %v5033
          %v5102 = vpack.c.bf16 %v5036, %v5035
          %v5103 = vpack.c.bf16 %v5038, %v5037
          %v5104 = vpack.c.bf16 %v5040, %v5039
          %v5105 = vpack.c.bf16 %v5042, %v5041
          %v5106 = vpack.c.bf16 %v5044, %v5043
          %v5107 = vpack.c.bf16 %v5046, %v5045
          %v5108 = vpack.c.bf16 %v5048, %v5047
          %v5109 = vpack.c.bf16 %v5050, %v5049
          %v5110 = vpack.c.bf16 %v5052, %v5051
          %v5111 = vpack.c.bf16 %v5054, %v5053
          %v5112 = vpack.c.bf16 %v5056, %v5055
          %v5113 = vpack.c.bf16 %v5058, %v5057
          %v5114 = vpack.c.bf16 %v5060, %v5059
          %v5115 = vpack.c.bf16 %v5062, %v5061
          %v5116 = vpack.c.bf16 %v5064, %v5063
          %v5117 = vpack.c.bf16 %v5066, %v5065
          %v5118 = vpack.c.bf16 %v5068, %v5067
          %v5119 = vpack.c.bf16 %v5070, %v5069
          %v5120 = vpack.c.bf16 %v5072, %v5071
          %v5121 = vpack.c.bf16 %v5074, %v5073
          %v5122 = vpack.c.bf16 %v5076, %v5075
          %v5123 = vpack.c.bf16 %v5078, %v5077
          %v5124 = vpack.c.bf16 %v5080, %v5079
          %v5125 = vpack.c.bf16 %v5082, %v5081
          %v5126 = vpack.c.bf16 %v5084, %v5083
          %v5127 = vpack.c.bf16 %v5086, %v5085
          %v5128 = vpack.c.bf16 %v5088, %v5087
          %5129 = vst [vmem:[%s413 + $0x3c0] sm:$0xff] %v5089
          %5130 = vst [vmem:[%s413 + $0x3c8] sm:$0xff] %v5090
          %5131 = vst [vmem:[%s413 + $0x3d0] sm:$0xff] %v5091
          %5132 = vst [vmem:[%s413 + $0x3d8] sm:$0xff] %v5092
          %5133 = vst [vmem:[%s413 + $0x3e0] sm:$0xff] %v5093
          %5134 = vst [vmem:[%s413 + $0x3e8] sm:$0xff] %v5094
          %5135 = vst [vmem:[%s413 + $0x3f0] sm:$0xff] %v5095
          %5136 = vst [vmem:[%s413 + $0x3f8] sm:$0xff] %v5096
          %5137 = vst [vmem:[%s413 + $0x400] sm:$0xff] %v5097
          %5138 = vst [vmem:[%s413 + $0x408] sm:$0xff] %v5098
          %5139 = vst [vmem:[%s413 + $0x410] sm:$0xff] %v5099
          %5140 = vst [vmem:[%s413 + $0x418] sm:$0xff] %v5100
          %5141 = vst [vmem:[%s413 + $0x420] sm:$0xff] %v5101
          %5142 = vst [vmem:[%s413 + $0x428] sm:$0xff] %v5102
          %5143 = vst [vmem:[%s413 + $0x430] sm:$0xff] %v5103
          %5144 = vst [vmem:[%s413 + $0x438] sm:$0xff] %v5104
          %5145 = vst [vmem:[%s413 + $0x440] sm:$0xff] %v5105
          %5146 = vst [vmem:[%s413 + $0x448] sm:$0xff] %v5106
          %5147 = vst [vmem:[%s413 + $0x450] sm:$0xff] %v5107
          %5148 = vst [vmem:[%s413 + $0x458] sm:$0xff] %v5108
          %5149 = vst [vmem:[%s413 + $0x460] sm:$0xff] %v5109
          %5150 = vst [vmem:[%s413 + $0x468] sm:$0xff] %v5110
          %5151 = vst [vmem:[%s413 + $0x470] sm:$0xff] %v5111
          %5152 = vst [vmem:[%s413 + $0x478] sm:$0xff] %v5112
          %5153 = vst [vmem:[%s413 + $0x480] sm:$0xff] %v5113
          %5154 = vst [vmem:[%s413 + $0x488] sm:$0xff] %v5114
          %5155 = vst [vmem:[%s413 + $0x490] sm:$0xff] %v5115
          %5156 = vst [vmem:[%s413 + $0x498] sm:$0xff] %v5116
          %5157 = vst [vmem:[%s413 + $0x4a0] sm:$0xff] %v5117
          %5158 = vst [vmem:[%s413 + $0x4a8] sm:$0xff] %v5118
          %5159 = vst [vmem:[%s413 + $0x4b0] sm:$0xff] %v5119
          %5160 = vst [vmem:[%s413 + $0x4b8] sm:$0xff] %v5120
          %5161 = vst [vmem:[%s413 + $0x4c0] sm:$0xff] %v5121
          %5162 = vst [vmem:[%s413 + $0x4c8] sm:$0xff] %v5122
          %5163 = vst [vmem:[%s413 + $0x4d0] sm:$0xff] %v5123
          %5164 = vst [vmem:[%s413 + $0x4d8] sm:$0xff] %v5124
          %5165 = vst [vmem:[%s413 + $0x4e0] sm:$0xff] %v5125
          %5166 = vst [vmem:[%s413 + $0x4e8] sm:$0xff] %v5126
          %5167 = vst [vmem:[%s413 + $0x4f0] sm:$0xff] %v5127
          %5168 = vst [vmem:[%s413 + $0x4f8] sm:$0xff] %v5128
        $region76: #{learner_forward.1} parent=47 // pred_fallthru
          _
        %p5169 = scmp.lt.s32.totalorder %s27, 0
        %s5170 = scalar_select %p5169, %s27, 0
        %s5171 = smul.addr %s5170, 320
        %s5172 = smul.addr %s5171, 4
        %s5173 = scalar_lea.vmem %s7, %s5172
        // Predicated region
        $region77: #{learner_forward.1} parent=47 // pred_check
          %p5174 = pneg %p215
        $region78: #{learner_forward.1} parent=47 // pred_check_branch
          %5176 = sbr.rel (%p5174) target = $region80
        $region79: #{learner_forward.1} parent=47 // pred_region
          _
        $region80: #{learner_forward.1} parent=47 // pred_fallthru
          _
        // Predicated region
        $region81: #{learner_forward.1} parent=47 // pred_check
          %p5177 = pneg %p215
        $region82: #{learner_forward.1} parent=47 // pred_check_branch
          %5179 = sbr.rel (%p5177) target = $region84
        $region83: #{learner_forward.1} parent=47 // pred_region
          %p5180 = scmp.lt.s32.totalorder %s27, 0
          %s5181 = scalar_select %p5180, %s27, 0
          %s5182 = smul.addr %s5181, 320
          %s5183 = smul.addr %s5182, 4
          %s5184 = scalar_lea.vmem %s7, %s5183
        $region84: #{learner_forward.1} parent=47 // pred_fallthru
          _
      $region48: #{learner_forward.1} parent=5 // pred_fallthru
        _
      %p5185 = scmp.le.s32.totalorder 2, %s18
      // Predicated region
      $region85: #{learner_forward.1} parent=5 // pred_check
        %p5186 = pneg %p5185
      $region86: #{learner_forward.1} parent=5 // pred_check_branch
        %5188 = sbr.rel (%p5186) target = $region88
      $region87: #{learner_forward.1} parent=5 // pred_region
        %s5189 = ssub.s32 %s18, 2
      $region88: #{learner_forward.1} parent=5 // pred_fallthru
        _
    $region6: #{learner_forward.1} parent=1 // loop_footer
      %s22 = sadd.s32 1, %s18
    $region7: #{learner_forward.1} parent=1 // loop_footer_branch
      %17 = sbr.rel target = $region3
    $region8: #{learner_forward.1} parent=1 // loop_exit
      _
    %5190 = vsyncpa [#allocation7], 1
    %s5191 = scalar_lea.sflag [#allocation7], 1
    %5192 = vsyncpa %s5191, 1
    %5193 = vsyncpa [#allocation9], 1
    %5194 = vsyncpa [#allocation12], 1
    %s5195 = scalar_lea.sflag [#allocation12], 1
    %5196 = vsyncpa %s5195, 1

</llo_original>
